<compile_context>
chip_gen: v7x
topology: tpu7x:2x2x1
jax: 0.10.0
libtpu: 0.0.40
codegen_flags: <defaults>
</compile_context>

<pallas_src>
import functools

import numpy as np
import jax
import jax.numpy as jnp
from jax import lax
from jax.experimental import pallas as pl


# ----------------------------------------------------------------------------
# Synthetic parameters (PyTorch layouts)
# ----------------------------------------------------------------------------
def make_params(config, key):
    """Parameters in PyTorch layouts:
         Conv2d:          w (Cout, Cin, kh, kw),          b (Cout,)
         ConvTranspose2d: w (Cin, Cout, kh, kw),          b (Cout,)
         Linear:          w (out_features, in_features),  b (out_features,)
    """
    def nxt():
        nonlocal key
        key, sub = jax.random.split(key)
        return sub

    def init(shape, scale=0.05):
        return scale * jax.random.normal(nxt(), shape, dtype=jnp.float32)

    p = {}
    enc = []
    cin = config["in_channels"]
    for i in range(config["num_encoder_blocks"]):
        cout = config["encoder_channels"][i]
        enc.append({"w": init((cout, cin, 3, 3)), "b": init((cout,))})
        cin = cout
    p["enc_blocks"] = enc
    enc_out = cin * 4 * 4
    ld = config["latent_dim"]
    p["enc_fc_w"] = init((2 * ld, enc_out))
    p["enc_fc_b"] = init((2 * ld,))
    p["dec_fc_w"] = init((enc_out, ld))
    p["dec_fc_b"] = init((enc_out,))
    dec = []
    cout = config["encoder_channels"][-1]
    for i in range(config["num_decoder_blocks"]):
        cin_i = cout
        cout = config["decoder_channels"][i]
        dec.append({"w": init((cin_i, cout, 3, 3)), "b": init((cout,))})
    p["dec_blocks"] = dec
    p["final_w"] = init((cout, config["out_channels"], 4, 4))
    p["final_b"] = init((config["out_channels"],))
    return p


# ----------------------------------------------------------------------------
# Host-side weight expansion (runs once, outside jit).
# Internal layout:  X[b*Hin + yi, xi*Cin + ci] = input[b, ci, yi, xi]
# Layer:            Y = act( sum_j R_j @ X @ V_j + bias2d )
# ----------------------------------------------------------------------------
def _conv_layer_mats(w, b, batch, Hin, Win, stride, pad):
    """nn.Conv2d(Cin->Cout, k, stride, pad). w: (Cout, Cin, kh, kw)."""
    w = np.asarray(w, np.float32)
    b = np.asarray(b, np.float32)
    Cout, Cin, kh, kw = w.shape
    Ho = (Hin + 2 * pad - kh) // stride + 1
    Wo = (Win + 2 * pad - kw) // stride + 1
    Vs = np.zeros((kh, Win * Cin, Wo * Cout), np.float32)
    Rs = np.zeros((kh, batch * Ho, batch * Hin), np.float32)
    for j in range(kh):
        for xo in range(Wo):
            for dx in range(kw):
                xi = stride * xo - pad + dx
                if 0 <= xi < Win:
                    Vs[j, xi * Cin:(xi + 1) * Cin,
                       xo * Cout:(xo + 1) * Cout] = w[:, :, j, dx].T
        for bb in range(batch):
            for yo in range(Ho):
                yi = stride * yo - pad + j
                if 0 <= yi < Hin:
                    Rs[j, bb * Ho + yo, bb * Hin + yi] = 1.0
    bias2d = np.tile(b[None, :], (batch * Ho, Wo))
    return Vs, Rs, bias2d, Ho, Wo, Cout


def _convT_layer_mats(w, b, batch, Hin, Win, stride, pad, outpad):
    """nn.ConvTranspose2d(Cin->Cout, k, stride, pad, output_padding).
       w: (Cin, Cout, kh, kw)."""
    w = np.asarray(w, np.float32)
    b = np.asarray(b, np.float32)
    Cin, Cout, kh, kw = w.shape
    Ho = (Hin - 1) * stride - 2 * pad + kh + outpad
    Wo = (Win - 1) * stride - 2 * pad + kw + outpad
    Vs = np.zeros((kh, Win * Cin, Wo * Cout), np.float32)
    Rs = np.zeros((kh, batch * Ho, batch * Hin), np.float32)
    for j in range(kh):
        for xi in range(Win):
            for kx in range(kw):
                xo = stride * xi - pad + kx
                if 0 <= xo < Wo:
                    Vs[j, xi * Cin:(xi + 1) * Cin,
                       xo * Cout:(xo + 1) * Cout] = w[:, :, j, kx]
        for bb in range(batch):
            for yi in range(Hin):
                yo = stride * yi - pad + j
                if 0 <= yo < Ho:
                    Rs[j, bb * Ho + yo, bb * Hin + yi] = 1.0
    bias2d = np.tile(b[None, :], (batch * Ho, Wo))
    return Vs, Rs, bias2d, Ho, Wo, Cout


def _enc_fc_mats(w, b, batch, Hin, Win, Cin):
    """nn.Flatten (NCHW order) + nn.Linear(Cin*Hin*Win -> Out). w: (Out, in)."""
    w = np.asarray(w, np.float32)
    b = np.asarray(b, np.float32)
    Out = w.shape[0]
    wr = w.reshape(Out, Cin, Hin, Win)
    kh = Hin
    Vs = np.zeros((kh, Win * Cin, Out), np.float32)
    Rs = np.zeros((kh, batch, batch * Hin), np.float32)
    for j in range(kh):
        for xi in range(Win):
            Vs[j, xi * Cin:(xi + 1) * Cin, :] = wr[:, :, j, xi].T
        for bb in range(batch):
            Rs[j, bb, bb * Hin + j] = 1.0
    bias2d = np.tile(b[None, :], (batch, 1))
    return Vs, Rs, bias2d


def _dec_fc_mats(w, b, batch, latent, Hout, Wout, Cout):
    """nn.Linear(latent -> Cout*Hout*Wout) + nn.Unflatten(1, (Cout,Hout,Wout)).
       w: (Cout*Hout*Wout, latent)."""
    w = np.asarray(w, np.float32)
    b = np.asarray(b, np.float32)
    wr = w.reshape(Cout, Hout, Wout, latent)
    br = b.reshape(Cout, Hout, Wout)
    kh = Hout
    Vs = np.zeros((kh, latent, Wout * Cout), np.float32)
    Rs = np.zeros((kh, batch * Hout, batch), np.float32)
    bias2d = np.zeros((batch * Hout, Wout * Cout), np.float32)
    for j in range(kh):
        for xo in range(Wout):
            Vs[j, :, xo * Cout:(xo + 1) * Cout] = wr[:, j, xo, :].T
        for bb in range(batch):
            Rs[j, bb * Hout + j, bb] = 1.0
    for bb in range(batch):
        for y in range(Hout):
            for x in range(Wout):
                bias2d[bb * Hout + y, x * Cout:(x + 1) * Cout] = br[:, y, x]
    return Vs, Rs, bias2d


def build_kernel_operands(params, config, batch):
    """Precompute all per-layer (Vs, Rs, bias) kernel operands on the host."""
    layers = []
    acts = []
    H = W = 16
    cin = config["in_channels"]
    # encoder conv blocks
    for i, blk in enumerate(params["enc_blocks"]):
        stride = 2 if i > 0 else 1
        Vs, Rs, b2, H, W, cin = _conv_layer_mats(blk["w"], blk["b"], batch, H, W, stride, 1)
        layers.append((Vs, Rs, b2))
        acts.append("relu")
    # encoder FC  (+ reparameterisation handled in-kernel)
    ld = config["latent_dim"]
    Vs, Rs, b2 = _enc_fc_mats(params["enc_fc_w"], params["enc_fc_b"], batch, H, W, cin)
    layers.append((Vs, Rs, b2))
    acts.append("latent")
    # decoder FC + unflatten
    c0 = config["encoder_channels"][-1]
    Vs, Rs, b2 = _dec_fc_mats(params["dec_fc_w"], params["dec_fc_b"], batch, ld, 4, 4, c0)
    layers.append((Vs, Rs, b2))
    acts.append("none")
    H, W, cin = 4, 4, c0
    # decoder transposed-conv blocks
    nd = config["num_decoder_blocks"]
    for i, blk in enumerate(params["dec_blocks"]):
        stride = 2 if i < nd - 1 else 1
        Vs, Rs, b2, H, W, cin = _convT_layer_mats(
            blk["w"], blk["b"], batch, H, W, stride, 1, stride - 1)
        layers.append((Vs, Rs, b2))
        acts.append("relu")
    # final ConvTranspose2d(k=4, s=1, p=1) + Sigmoid
    Vs, Rs, b2, H, W, cin = _convT_layer_mats(
        params["final_w"], params["final_b"], batch, H, W, 1, 1, 0)
    layers.append((Vs, Rs, b2))
    acts.append("sigmoid")

    flat = []
    for Vs, Rs, b2 in layers:
        flat.append(jnp.asarray(Vs, dtype=jnp.bfloat16))   # bf16 MXU operands
        flat.append(jnp.asarray(Rs, dtype=jnp.bfloat16))   # 0/1 -> exact in bf16
        flat.append(jnp.asarray(b2, dtype=jnp.float32))
    meta = {"acts": tuple(acts), "latent": ld, "out_hwc": (H, W, cin)}
    return flat, meta


# ----------------------------------------------------------------------------
# The fused Pallas kernel: whole VAE forward in one call, everything in VMEM.
# ----------------------------------------------------------------------------
def _vae_fused_kernel(*refs, acts, latent):
    n_layers = len(acts)
    x_ref, eps_ref = refs[0], refs[1]
    layer_refs = refs[2:2 + 3 * n_layers]
    recon_ref, mu_ref, logvar_ref = refs[2 + 3 * n_layers:]

    def layer(h, li):
        vs_ref = layer_refs[3 * li + 0]     # (kh, Win*Cin, Wo*Cout)  bf16
        rs_ref = layer_refs[3 * li + 1]     # (kh, B*Ho, B*Hin)       bf16
        b_ref = layer_refs[3 * li + 2]      # (B*Ho, Wo*Cout)         f32
        kh = vs_ref.shape[0]
        hb = h.astype(jnp.bfloat16)
        acc = b_ref[...]
        for j in range(kh):                 # static unroll (kh = 3 or 4)
            g = jnp.dot(rs_ref[j], hb, preferred_element_type=jnp.float32)
            acc = acc + jnp.dot(g.astype(jnp.bfloat16), vs_ref[j],
                                preferred_element_type=jnp.float32)
        return acc

    h = x_ref[...]                          # (B*Hin, Win*Cin) f32
    for li, act in enumerate(acts):
        y = layer(h, li)
        if act == "relu":
            h = jnp.maximum(y, 0.0)
        elif act == "latent":
            mu = y[:, :latent]
            logvar = y[:, latent:]
            mu_ref[...] = mu
            logvar_ref[...] = logvar
            # fused reparameterisation (exp on the EUP slot)
            h = mu + eps_ref[...] * jnp.exp(0.5 * logvar)
        elif act == "sigmoid":
            # sigmoid via EUP exp + EUP reciprocal (no VALU divide)
            h = pl.reciprocal(1.0 + jnp.exp(-y), approx=True)
        else:  # "none"
            h = y
    recon_ref[...] = h                      # (B*Hout, Wout*Cout)


def hierarchical_vae_forward(layer_ops, meta, x, eps):
    """x: (B, Cin, 16, 16) NCHW; eps: (B, latent).  One pallas_call."""
    B, cin, hin, win = x.shape
    ld = meta["latent"]
    ho, wo, co = meta["out_hwc"]
    # NCHW -> rows (b, y), lanes (x, c); tiny one-op relayout in XLA.
    x2d = x.transpose(0, 2, 3, 1).reshape(B * hin, win * cin)
    kernel = functools.partial(_vae_fused_kernel, acts=meta["acts"], latent=ld)
    recon2d, mu, logvar = pl.pallas_call(
        kernel,
        out_shape=(
            jax.ShapeDtypeStruct((B * ho, wo * co), jnp.float32),
            jax.ShapeDtypeStruct((B, ld), jnp.float32),
            jax.ShapeDtypeStruct((B, ld), jnp.float32),
        ),
    )(x2d, eps, *layer_ops)
    # rows (b, y), lanes (x, c) -> NCHW (tiny post-transpose in XLA)
    recon = recon2d.reshape(B, ho, wo, co).transpose(0, 3, 1, 2)
    return recon, mu, logvar


# ----------------------------------------------------------------------------
# Pure-JAX reference (PyTorch semantics) for correctness validation.
# ----------------------------------------------------------------------------
def reference_forward(params, config, x, eps):
    def conv(x, w, b, s, p):
        y = lax.conv_general_dilated(
            x, w, (s, s), [(p, p), (p, p)],
            dimension_numbers=("NCHW", "OIHW", "NCHW"))
        return y + b[None, :, None, None]

    def convT(x, w, b, s, p, op):
        k = w.shape[2]
        w2 = jnp.flip(w, (2, 3)).transpose(1, 0, 2, 3)
        y = lax.conv_general_dilated(
            x, w2, (1, 1), [(k - 1 - p, k - 1 - p + op)] * 2,
            lhs_dilation=(s, s),
            dimension_numbers=("NCHW", "OIHW", "NCHW"))
        return y + b[None, :, None, None]

    B = x.shape[0]
    ld = config["latent_dim"]
    h = x
    for i, blk in enumerate(params["enc_blocks"]):
        s = 2 if i > 0 else 1
        h = jax.nn.relu(conv(h, blk["w"], blk["b"], s, 1))
    h = h.reshape(B, -1)
    ml = h @ params["enc_fc_w"].T + params["enc_fc_b"]
    mu, logvar = ml[:, :ld], ml[:, ld:]
    z = mu + eps * jnp.exp(0.5 * logvar)
    h = z @ params["dec_fc_w"].T + params["dec_fc_b"]
    h = h.reshape(B, config["encoder_channels"][-1], 4, 4)
    nd = config["num_decoder_blocks"]
    for i, blk in enumerate(params["dec_blocks"]):
        s = 2 if i < nd - 1 else 1
        h = jax.nn.relu(convT(h, blk["w"], blk["b"], s, 1, s - 1))
    h = convT(h, params["final_w"], params["final_b"], 1, 1, 0)
    return jax.nn.sigmoid(h), mu, logvar


# ----------------------------------------------------------------------------
if __name__ == "__main__":
    config = {
        "in_channels": 4,
        "out_channels": 4,
        "latent_dim": 16,
        "num_encoder_blocks": 3,
        "encoder_channels": [8, 16, 32],
        "num_decoder_blocks": 3,
        "decoder_channels": [16, 8, 8],
    }

    key = jax.random.PRNGKey(0)
    kp, kx, ke = jax.random.split(key, 3)
    params = make_params(config, kp)

    B = 2
    x = jax.random.normal(kx, (B, config["in_channels"], 16, 16), dtype=jnp.float32)
    # TODO(synk): torch.randn_like inside reparameterize has no deterministic
    # in-kernel equivalent here; eps is passed explicitly (pltpu.prng_* could be
    # used for in-kernel sampling).
    eps = jax.random.normal(ke, (B, config["latent_dim"]), dtype=jnp.float32)

    layer_ops, meta = build_kernel_operands(params, config, B)

    fwd = jax.jit(lambda x_, e_: hierarchical_vae_forward(layer_ops, meta, x_, e_))
    recon, mu, logvar = fwd(x, eps)
    jax.block_until_ready((recon, mu, logvar))

    # Shape checks (ConvTranspose2d(k=4, s=1, p=1) maps 16 -> 17, per reference)
    assert recon.shape == (B, config["out_channels"], 17, 17)
    assert mu.shape == (B, config["latent_dim"])
    assert logvar.shape == (B, config["latent_dim"])
    assert bool(jnp.all(jnp.isfinite(recon)))

    # Numerical check against a pure-JAX (f32) reference of the torch module.
    ref = jax.jit(lambda x_, e_: reference_forward(params, config, x_, e_))
    ref_recon, ref_mu, ref_logvar = ref(x, eps)
    jax.block_until_ready((ref_recon, ref_mu, ref_logvar))
    np.testing.assert_allclose(np.asarray(mu), np.asarray(ref_mu), rtol=2e-2, atol=2e-2)
    np.testing.assert_allclose(np.asarray(logvar), np.asarray(ref_logvar), rtol=2e-2, atol=2e-2)
    np.testing.assert_allclose(np.asarray(recon), np.asarray(ref_recon), rtol=2e-2, atol=2e-2)

    print("KERNEL_OK")
</pallas_src>

<mosaic_0001>
module attributes {stable_mosaic.version = 11 : i64} {
  func.func @_vae_fused_kernel(%arg0: memref<32x64xf32, #tpu.memory_space<vmem>>, %arg1: memref<2x16xf32, #tpu.memory_space<vmem>>, %arg2: memref<3x64x128xbf16, #tpu.memory_space<vmem>>, %arg3: memref<3x32x32xbf16, #tpu.memory_space<vmem>>, %arg4: memref<32x128xf32, #tpu.memory_space<vmem>>, %arg5: memref<3x128x128xbf16, #tpu.memory_space<vmem>>, %arg6: memref<3x16x32xbf16, #tpu.memory_space<vmem>>, %arg7: memref<16x128xf32, #tpu.memory_space<vmem>>, %arg8: memref<3x128x128xbf16, #tpu.memory_space<vmem>>, %arg9: memref<3x8x16xbf16, #tpu.memory_space<vmem>>, %arg10: memref<8x128xf32, #tpu.memory_space<vmem>>, %arg11: memref<4x128x32xbf16, #tpu.memory_space<vmem>>, %arg12: memref<4x2x8xbf16, #tpu.memory_space<vmem>>, %arg13: memref<2x32xf32, #tpu.memory_space<vmem>>, %arg14: memref<4x16x128xbf16, #tpu.memory_space<vmem>>, %arg15: memref<4x8x2xbf16, #tpu.memory_space<vmem>>, %arg16: memref<8x128xf32, #tpu.memory_space<vmem>>, %arg17: memref<3x128x128xbf16, #tpu.memory_space<vmem>>, %arg18: memref<3x16x8xbf16, #tpu.memory_space<vmem>>, %arg19: memref<16x128xf32, #tpu.memory_space<vmem>>, %arg20: memref<3x128x128xbf16, #tpu.memory_space<vmem>>, %arg21: memref<3x32x16xbf16, #tpu.memory_space<vmem>>, %arg22: memref<32x128xf32, #tpu.memory_space<vmem>>, %arg23: memref<3x128x128xbf16, #tpu.memory_space<vmem>>, %arg24: memref<3x32x32xbf16, #tpu.memory_space<vmem>>, %arg25: memref<32x128xf32, #tpu.memory_space<vmem>>, %arg26: memref<4x128x68xbf16, #tpu.memory_space<vmem>>, %arg27: memref<4x34x32xbf16, #tpu.memory_space<vmem>>, %arg28: memref<34x68xf32, #tpu.memory_space<vmem>>, %arg29: memref<34x68xf32, #tpu.memory_space<vmem>>, %arg30: memref<2x16xf32, #tpu.memory_space<vmem>>, %arg31: memref<2x16xf32, #tpu.memory_space<vmem>>) attributes {dimension_semantics = [], scalar_prefetch = 0 : i64, scratch_operands = 0 : i64, tpu.core_type = #tpu.core_type<tc>} {
    %c0 = arith.constant 0 : index
    %c0_0 = arith.constant 0 : index
    %0 = vector.load %arg0[%c0, %c0_0] : memref<32x64xf32, #tpu.memory_space<vmem>>, vector<32x64xf32>
    %1 = arith.truncf %0 : vector<32x64xf32> to vector<32x64xbf16>
    %c0_1 = arith.constant 0 : index
    %c0_2 = arith.constant 0 : index
    %2 = vector.load %arg4[%c0_1, %c0_2] : memref<32x128xf32, #tpu.memory_space<vmem>>, vector<32x128xf32>
    %c0_3 = arith.constant 0 : index
    %c0_4 = arith.constant 0 : index
    %c0_5 = arith.constant 0 : index
    %3 = vector.load %arg3[%c0_3, %c0_4, %c0_5] : memref<3x32x32xbf16, #tpu.memory_space<vmem>>, vector<1x32x32xbf16>
    %4 = vector.shape_cast %3 : vector<1x32x32xbf16> to vector<32x32xbf16>
    %cst = arith.constant dense<0.000000e+00> : vector<32x64xf32>
    %5 = tpu.matmul %4, %1, %cst {dimension_numbers = #tpu.dot_dimension_numbers<[1], [0], [0], [1], [0, 0, 1, 1], [], []>} : vector<32x32xbf16>, vector<32x64xbf16>, vector<32x64xf32> -> vector<32x64xf32>
    %6 = arith.truncf %5 : vector<32x64xf32> to vector<32x64xbf16>
    %c0_6 = arith.constant 0 : index
    %c0_7 = arith.constant 0 : index
    %c0_8 = arith.constant 0 : index
    %7 = vector.load %arg2[%c0_6, %c0_7, %c0_8] : memref<3x64x128xbf16, #tpu.memory_space<vmem>>, vector<1x64x128xbf16>
    %8 = vector.shape_cast %7 : vector<1x64x128xbf16> to vector<64x128xbf16>
    %cst_9 = arith.constant dense<0.000000e+00> : vector<32x128xf32>
    %9 = tpu.matmul %6, %8, %cst_9 {dimension_numbers = #tpu.dot_dimension_numbers<[1], [0], [0], [1], [0, 0, 1, 1], [], []>} : vector<32x64xbf16>, vector<64x128xbf16>, vector<32x128xf32> -> vector<32x128xf32>
    %10 = arith.addf %2, %9 : vector<32x128xf32>
    %c1 = arith.constant 1 : index
    %c0_10 = arith.constant 0 : index
    %c0_11 = arith.constant 0 : index
    %11 = vector.load %arg3[%c1, %c0_10, %c0_11] : memref<3x32x32xbf16, #tpu.memory_space<vmem>>, vector<1x32x32xbf16>
    %12 = vector.shape_cast %11 : vector<1x32x32xbf16> to vector<32x32xbf16>
    %cst_12 = arith.constant dense<0.000000e+00> : vector<32x64xf32>
    %13 = tpu.matmul %12, %1, %cst_12 {dimension_numbers = #tpu.dot_dimension_numbers<[1], [0], [0], [1], [0, 0, 1, 1], [], []>} : vector<32x32xbf16>, vector<32x64xbf16>, vector<32x64xf32> -> vector<32x64xf32>
    %14 = arith.truncf %13 : vector<32x64xf32> to vector<32x64xbf16>
    %c1_13 = arith.constant 1 : index
    %c0_14 = arith.constant 0 : index
    %c0_15 = arith.constant 0 : index
    %15 = vector.load %arg2[%c1_13, %c0_14, %c0_15] : memref<3x64x128xbf16, #tpu.memory_space<vmem>>, vector<1x64x128xbf16>
    %16 = vector.shape_cast %15 : vector<1x64x128xbf16> to vector<64x128xbf16>
    %cst_16 = arith.constant dense<0.000000e+00> : vector<32x128xf32>
    %17 = tpu.matmul %14, %16, %cst_16 {dimension_numbers = #tpu.dot_dimension_numbers<[1], [0], [0], [1], [0, 0, 1, 1], [], []>} : vector<32x64xbf16>, vector<64x128xbf16>, vector<32x128xf32> -> vector<32x128xf32>
    %18 = arith.addf %10, %17 : vector<32x128xf32>
    %c2 = arith.constant 2 : index
    %c0_17 = arith.constant 0 : index
    %c0_18 = arith.constant 0 : index
    %19 = vector.load %arg3[%c2, %c0_17, %c0_18] : memref<3x32x32xbf16, #tpu.memory_space<vmem>>, vector<1x32x32xbf16>
    %20 = vector.shape_cast %19 : vector<1x32x32xbf16> to vector<32x32xbf16>
    %cst_19 = arith.constant dense<0.000000e+00> : vector<32x64xf32>
    %21 = tpu.matmul %20, %1, %cst_19 {dimension_numbers = #tpu.dot_dimension_numbers<[1], [0], [0], [1], [0, 0, 1, 1], [], []>} : vector<32x32xbf16>, vector<32x64xbf16>, vector<32x64xf32> -> vector<32x64xf32>
    %22 = arith.truncf %21 : vector<32x64xf32> to vector<32x64xbf16>
    %c2_20 = arith.constant 2 : index
    %c0_21 = arith.constant 0 : index
    %c0_22 = arith.constant 0 : index
    %23 = vector.load %arg2[%c2_20, %c0_21, %c0_22] : memref<3x64x128xbf16, #tpu.memory_space<vmem>>, vector<1x64x128xbf16>
    %24 = vector.shape_cast %23 : vector<1x64x128xbf16> to vector<64x128xbf16>
    %cst_23 = arith.constant dense<0.000000e+00> : vector<32x128xf32>
    %25 = tpu.matmul %22, %24, %cst_23 {dimension_numbers = #tpu.dot_dimension_numbers<[1], [0], [0], [1], [0, 0, 1, 1], [], []>} : vector<32x64xbf16>, vector<64x128xbf16>, vector<32x128xf32> -> vector<32x128xf32>
    %26 = arith.addf %18, %25 : vector<32x128xf32>
    %cst_24 = arith.constant 0.000000e+00 : f32
    %27 = vector.broadcast %cst_24 : f32 to vector<32x128xf32>
    %28 = arith.maximumf %26, %27 : vector<32x128xf32>
    %29 = arith.truncf %28 : vector<32x128xf32> to vector<32x128xbf16>
    %c0_25 = arith.constant 0 : index
    %c0_26 = arith.constant 0 : index
    %30 = vector.load %arg7[%c0_25, %c0_26] : memref<16x128xf32, #tpu.memory_space<vmem>>, vector<16x128xf32>
    %c0_27 = arith.constant 0 : index
    %c0_28 = arith.constant 0 : index
    %c0_29 = arith.constant 0 : index
    %31 = vector.load %arg6[%c0_27, %c0_28, %c0_29] : memref<3x16x32xbf16, #tpu.memory_space<vmem>>, vector<1x16x32xbf16>
    %32 = vector.shape_cast %31 : vector<1x16x32xbf16> to vector<16x32xbf16>
    %cst_30 = arith.constant dense<0.000000e+00> : vector<16x128xf32>
    %33 = tpu.matmul %32, %29, %cst_30 {dimension_numbers = #tpu.dot_dimension_numbers<[1], [0], [0], [1], [0, 0, 1, 1], [], []>} : vector<16x32xbf16>, vector<32x128xbf16>, vector<16x128xf32> -> vector<16x128xf32>
    %34 = arith.truncf %33 : vector<16x128xf32> to vector<16x128xbf16>
    %c0_31 = arith.constant 0 : index
    %c0_32 = arith.constant 0 : index
    %c0_33 = arith.constant 0 : index
    %35 = vector.load %arg5[%c0_31, %c0_32, %c0_33] : memref<3x128x128xbf16, #tpu.memory_space<vmem>>, vector<1x128x128xbf16>
    %36 = vector.shape_cast %35 : vector<1x128x128xbf16> to vector<128x128xbf16>
    %cst_34 = arith.constant dense<0.000000e+00> : vector<16x128xf32>
    %37 = tpu.matmul %34, %36, %cst_34 {dimension_numbers = #tpu.dot_dimension_numbers<[1], [0], [0], [1], [0, 0, 1, 1], [], []>} : vector<16x128xbf16>, vector<128x128xbf16>, vector<16x128xf32> -> vector<16x128xf32>
    %38 = arith.addf %30, %37 : vector<16x128xf32>
    %c1_35 = arith.constant 1 : index
    %c0_36 = arith.constant 0 : index
    %c0_37 = arith.constant 0 : index
    %39 = vector.load %arg6[%c1_35, %c0_36, %c0_37] : memref<3x16x32xbf16, #tpu.memory_space<vmem>>, vector<1x16x32xbf16>
    %40 = vector.shape_cast %39 : vector<1x16x32xbf16> to vector<16x32xbf16>
    %cst_38 = arith.constant dense<0.000000e+00> : vector<16x128xf32>
    %41 = tpu.matmul %40, %29, %cst_38 {dimension_numbers = #tpu.dot_dimension_numbers<[1], [0], [0], [1], [0, 0, 1, 1], [], []>} : vector<16x32xbf16>, vector<32x128xbf16>, vector<16x128xf32> -> vector<16x128xf32>
    %42 = arith.truncf %41 : vector<16x128xf32> to vector<16x128xbf16>
    %c1_39 = arith.constant 1 : index
    %c0_40 = arith.constant 0 : index
    %c0_41 = arith.constant 0 : index
    %43 = vector.load %arg5[%c1_39, %c0_40, %c0_41] : memref<3x128x128xbf16, #tpu.memory_space<vmem>>, vector<1x128x128xbf16>
    %44 = vector.shape_cast %43 : vector<1x128x128xbf16> to vector<128x128xbf16>
    %cst_42 = arith.constant dense<0.000000e+00> : vector<16x128xf32>
    %45 = tpu.matmul %42, %44, %cst_42 {dimension_numbers = #tpu.dot_dimension_numbers<[1], [0], [0], [1], [0, 0, 1, 1], [], []>} : vector<16x128xbf16>, vector<128x128xbf16>, vector<16x128xf32> -> vector<16x128xf32>
    %46 = arith.addf %38, %45 : vector<16x128xf32>
    %c2_43 = arith.constant 2 : index
    %c0_44 = arith.constant 0 : index
    %c0_45 = arith.constant 0 : index
    %47 = vector.load %arg6[%c2_43, %c0_44, %c0_45] : memref<3x16x32xbf16, #tpu.memory_space<vmem>>, vector<1x16x32xbf16>
    %48 = vector.shape_cast %47 : vector<1x16x32xbf16> to vector<16x32xbf16>
    %cst_46 = arith.constant dense<0.000000e+00> : vector<16x128xf32>
    %49 = tpu.matmul %48, %29, %cst_46 {dimension_numbers = #tpu.dot_dimension_numbers<[1], [0], [0], [1], [0, 0, 1, 1], [], []>} : vector<16x32xbf16>, vector<32x128xbf16>, vector<16x128xf32> -> vector<16x128xf32>
    %50 = arith.truncf %49 : vector<16x128xf32> to vector<16x128xbf16>
    %c2_47 = arith.constant 2 : index
    %c0_48 = arith.constant 0 : index
    %c0_49 = arith.constant 0 : index
    %51 = vector.load %arg5[%c2_47, %c0_48, %c0_49] : memref<3x128x128xbf16, #tpu.memory_space<vmem>>, vector<1x128x128xbf16>
    %52 = vector.shape_cast %51 : vector<1x128x128xbf16> to vector<128x128xbf16>
    %cst_50 = arith.constant dense<0.000000e+00> : vector<16x128xf32>
    %53 = tpu.matmul %50, %52, %cst_50 {dimension_numbers = #tpu.dot_dimension_numbers<[1], [0], [0], [1], [0, 0, 1, 1], [], []>} : vector<16x128xbf16>, vector<128x128xbf16>, vector<16x128xf32> -> vector<16x128xf32>
    %54 = arith.addf %46, %53 : vector<16x128xf32>
    %cst_51 = arith.constant 0.000000e+00 : f32
    %55 = vector.broadcast %cst_51 : f32 to vector<16x128xf32>
    %56 = arith.maximumf %54, %55 : vector<16x128xf32>
    %57 = arith.truncf %56 : vector<16x128xf32> to vector<16x128xbf16>
    %c0_52 = arith.constant 0 : index
    %c0_53 = arith.constant 0 : index
    %58 = vector.load %arg10[%c0_52, %c0_53] : memref<8x128xf32, #tpu.memory_space<vmem>>, vector<8x128xf32>
    %c0_54 = arith.constant 0 : index
    %c0_55 = arith.constant 0 : index
    %c0_56 = arith.constant 0 : index
    %59 = vector.load %arg9[%c0_54, %c0_55, %c0_56] : memref<3x8x16xbf16, #tpu.memory_space<vmem>>, vector<1x8x16xbf16>
    %60 = vector.shape_cast %59 : vector<1x8x16xbf16> to vector<8x16xbf16>
    %cst_57 = arith.constant dense<0.000000e+00> : vector<8x128xf32>
    %61 = tpu.matmul %60, %57, %cst_57 {dimension_numbers = #tpu.dot_dimension_numbers<[1], [0], [0], [1], [0, 0, 1, 1], [], []>} : vector<8x16xbf16>, vector<16x128xbf16>, vector<8x128xf32> -> vector<8x128xf32>
    %62 = arith.truncf %61 : vector<8x128xf32> to vector<8x128xbf16>
    %c0_58 = arith.constant 0 : index
    %c0_59 = arith.constant 0 : index
    %c0_60 = arith.constant 0 : index
    %63 = vector.load %arg8[%c0_58, %c0_59, %c0_60] : memref<3x128x128xbf16, #tpu.memory_space<vmem>>, vector<1x128x128xbf16>
    %64 = vector.shape_cast %63 : vector<1x128x128xbf16> to vector<128x128xbf16>
    %cst_61 = arith.constant dense<0.000000e+00> : vector<8x128xf32>
    %65 = tpu.matmul %62, %64, %cst_61 {dimension_numbers = #tpu.dot_dimension_numbers<[1], [0], [0], [1], [0, 0, 1, 1], [], []>} : vector<8x128xbf16>, vector<128x128xbf16>, vector<8x128xf32> -> vector<8x128xf32>
    %66 = arith.addf %58, %65 : vector<8x128xf32>
    %c1_62 = arith.constant 1 : index
    %c0_63 = arith.constant 0 : index
    %c0_64 = arith.constant 0 : index
    %67 = vector.load %arg9[%c1_62, %c0_63, %c0_64] : memref<3x8x16xbf16, #tpu.memory_space<vmem>>, vector<1x8x16xbf16>
    %68 = vector.shape_cast %67 : vector<1x8x16xbf16> to vector<8x16xbf16>
    %cst_65 = arith.constant dense<0.000000e+00> : vector<8x128xf32>
    %69 = tpu.matmul %68, %57, %cst_65 {dimension_numbers = #tpu.dot_dimension_numbers<[1], [0], [0], [1], [0, 0, 1, 1], [], []>} : vector<8x16xbf16>, vector<16x128xbf16>, vector<8x128xf32> -> vector<8x128xf32>
    %70 = arith.truncf %69 : vector<8x128xf32> to vector<8x128xbf16>
    %c1_66 = arith.constant 1 : index
    %c0_67 = arith.constant 0 : index
    %c0_68 = arith.constant 0 : index
    %71 = vector.load %arg8[%c1_66, %c0_67, %c0_68] : memref<3x128x128xbf16, #tpu.memory_space<vmem>>, vector<1x128x128xbf16>
    %72 = vector.shape_cast %71 : vector<1x128x128xbf16> to vector<128x128xbf16>
    %cst_69 = arith.constant dense<0.000000e+00> : vector<8x128xf32>
    %73 = tpu.matmul %70, %72, %cst_69 {dimension_numbers = #tpu.dot_dimension_numbers<[1], [0], [0], [1], [0, 0, 1, 1], [], []>} : vector<8x128xbf16>, vector<128x128xbf16>, vector<8x128xf32> -> vector<8x128xf32>
    %74 = arith.addf %66, %73 : vector<8x128xf32>
    %c2_70 = arith.constant 2 : index
    %c0_71 = arith.constant 0 : index
    %c0_72 = arith.constant 0 : index
    %75 = vector.load %arg9[%c2_70, %c0_71, %c0_72] : memref<3x8x16xbf16, #tpu.memory_space<vmem>>, vector<1x8x16xbf16>
    %76 = vector.shape_cast %75 : vector<1x8x16xbf16> to vector<8x16xbf16>
    %cst_73 = arith.constant dense<0.000000e+00> : vector<8x128xf32>
    %77 = tpu.matmul %76, %57, %cst_73 {dimension_numbers = #tpu.dot_dimension_numbers<[1], [0], [0], [1], [0, 0, 1, 1], [], []>} : vector<8x16xbf16>, vector<16x128xbf16>, vector<8x128xf32> -> vector<8x128xf32>
    %78 = arith.truncf %77 : vector<8x128xf32> to vector<8x128xbf16>
    %c2_74 = arith.constant 2 : index
    %c0_75 = arith.constant 0 : index
    %c0_76 = arith.constant 0 : index
    %79 = vector.load %arg8[%c2_74, %c0_75, %c0_76] : memref<3x128x128xbf16, #tpu.memory_space<vmem>>, vector<1x128x128xbf16>
    %80 = vector.shape_cast %79 : vector<1x128x128xbf16> to vector<128x128xbf16>
    %cst_77 = arith.constant dense<0.000000e+00> : vector<8x128xf32>
    %81 = tpu.matmul %78, %80, %cst_77 {dimension_numbers = #tpu.dot_dimension_numbers<[1], [0], [0], [1], [0, 0, 1, 1], [], []>} : vector<8x128xbf16>, vector<128x128xbf16>, vector<8x128xf32> -> vector<8x128xf32>
    %82 = arith.addf %74, %81 : vector<8x128xf32>
    %cst_78 = arith.constant 0.000000e+00 : f32
    %83 = vector.broadcast %cst_78 : f32 to vector<8x128xf32>
    %84 = arith.maximumf %82, %83 : vector<8x128xf32>
    %85 = arith.truncf %84 : vector<8x128xf32> to vector<8x128xbf16>
    %c0_79 = arith.constant 0 : index
    %c0_80 = arith.constant 0 : index
    %86 = vector.load %arg13[%c0_79, %c0_80] : memref<2x32xf32, #tpu.memory_space<vmem>>, vector<2x32xf32>
    %c0_81 = arith.constant 0 : index
    %c0_82 = arith.constant 0 : index
    %c0_83 = arith.constant 0 : index
    %87 = vector.load %arg12[%c0_81, %c0_82, %c0_83] : memref<4x2x8xbf16, #tpu.memory_space<vmem>>, vector<1x2x8xbf16>
    %88 = vector.shape_cast %87 : vector<1x2x8xbf16> to vector<2x8xbf16>
    %cst_84 = arith.constant dense<0.000000e+00> : vector<2x128xf32>
    %89 = tpu.matmul %88, %85, %cst_84 {dimension_numbers = #tpu.dot_dimension_numbers<[1], [0], [0], [1], [0, 0, 1, 1], [], []>} : vector<2x8xbf16>, vector<8x128xbf16>, vector<2x128xf32> -> vector<2x128xf32>
    %90 = arith.truncf %89 : vector<2x128xf32> to vector<2x128xbf16>
    %c0_85 = arith.constant 0 : index
    %c0_86 = arith.constant 0 : index
    %c0_87 = arith.constant 0 : index
    %91 = vector.load %arg11[%c0_85, %c0_86, %c0_87] : memref<4x128x32xbf16, #tpu.memory_space<vmem>>, vector<1x128x32xbf16>
    %92 = vector.shape_cast %91 : vector<1x128x32xbf16> to vector<128x32xbf16>
    %cst_88 = arith.constant dense<0.000000e+00> : vector<2x32xf32>
    %93 = tpu.matmul %90, %92, %cst_88 {dimension_numbers = #tpu.dot_dimension_numbers<[1], [0], [0], [1], [0, 0, 1, 1], [], []>} : vector<2x128xbf16>, vector<128x32xbf16>, vector<2x32xf32> -> vector<2x32xf32>
    %94 = arith.addf %86, %93 : vector<2x32xf32>
    %c1_89 = arith.constant 1 : index
    %c0_90 = arith.constant 0 : index
    %c0_91 = arith.constant 0 : index
    %95 = vector.load %arg12[%c1_89, %c0_90, %c0_91] : memref<4x2x8xbf16, #tpu.memory_space<vmem>>, vector<1x2x8xbf16>
    %96 = vector.shape_cast %95 : vector<1x2x8xbf16> to vector<2x8xbf16>
    %cst_92 = arith.constant dense<0.000000e+00> : vector<2x128xf32>
    %97 = tpu.matmul %96, %85, %cst_92 {dimension_numbers = #tpu.dot_dimension_numbers<[1], [0], [0], [1], [0, 0, 1, 1], [], []>} : vector<2x8xbf16>, vector<8x128xbf16>, vector<2x128xf32> -> vector<2x128xf32>
    %98 = arith.truncf %97 : vector<2x128xf32> to vector<2x128xbf16>
    %c1_93 = arith.constant 1 : index
    %c0_94 = arith.constant 0 : index
    %c0_95 = arith.constant 0 : index
    %99 = vector.load %arg11[%c1_93, %c0_94, %c0_95] : memref<4x128x32xbf16, #tpu.memory_space<vmem>>, vector<1x128x32xbf16>
    %100 = vector.shape_cast %99 : vector<1x128x32xbf16> to vector<128x32xbf16>
    %cst_96 = arith.constant dense<0.000000e+00> : vector<2x32xf32>
    %101 = tpu.matmul %98, %100, %cst_96 {dimension_numbers = #tpu.dot_dimension_numbers<[1], [0], [0], [1], [0, 0, 1, 1], [], []>} : vector<2x128xbf16>, vector<128x32xbf16>, vector<2x32xf32> -> vector<2x32xf32>
    %102 = arith.addf %94, %101 : vector<2x32xf32>
    %c2_97 = arith.constant 2 : index
    %c0_98 = arith.constant 0 : index
    %c0_99 = arith.constant 0 : index
    %103 = vector.load %arg12[%c2_97, %c0_98, %c0_99] : memref<4x2x8xbf16, #tpu.memory_space<vmem>>, vector<1x2x8xbf16>
    %104 = vector.shape_cast %103 : vector<1x2x8xbf16> to vector<2x8xbf16>
    %cst_100 = arith.constant dense<0.000000e+00> : vector<2x128xf32>
    %105 = tpu.matmul %104, %85, %cst_100 {dimension_numbers = #tpu.dot_dimension_numbers<[1], [0], [0], [1], [0, 0, 1, 1], [], []>} : vector<2x8xbf16>, vector<8x128xbf16>, vector<2x128xf32> -> vector<2x128xf32>
    %106 = arith.truncf %105 : vector<2x128xf32> to vector<2x128xbf16>
    %c2_101 = arith.constant 2 : index
    %c0_102 = arith.constant 0 : index
    %c0_103 = arith.constant 0 : index
    %107 = vector.load %arg11[%c2_101, %c0_102, %c0_103] : memref<4x128x32xbf16, #tpu.memory_space<vmem>>, vector<1x128x32xbf16>
    %108 = vector.shape_cast %107 : vector<1x128x32xbf16> to vector<128x32xbf16>
    %cst_104 = arith.constant dense<0.000000e+00> : vector<2x32xf32>
    %109 = tpu.matmul %106, %108, %cst_104 {dimension_numbers = #tpu.dot_dimension_numbers<[1], [0], [0], [1], [0, 0, 1, 1], [], []>} : vector<2x128xbf16>, vector<128x32xbf16>, vector<2x32xf32> -> vector<2x32xf32>
    %110 = arith.addf %102, %109 : vector<2x32xf32>
    %c3 = arith.constant 3 : index
    %c0_105 = arith.constant 0 : index
    %c0_106 = arith.constant 0 : index
    %111 = vector.load %arg12[%c3, %c0_105, %c0_106] : memref<4x2x8xbf16, #tpu.memory_space<vmem>>, vector<1x2x8xbf16>
    %112 = vector.shape_cast %111 : vector<1x2x8xbf16> to vector<2x8xbf16>
    %cst_107 = arith.constant dense<0.000000e+00> : vector<2x128xf32>
    %113 = tpu.matmul %112, %85, %cst_107 {dimension_numbers = #tpu.dot_dimension_numbers<[1], [0], [0], [1], [0, 0, 1, 1], [], []>} : vector<2x8xbf16>, vector<8x128xbf16>, vector<2x128xf32> -> vector<2x128xf32>
    %114 = arith.truncf %113 : vector<2x128xf32> to vector<2x128xbf16>
    %c3_108 = arith.constant 3 : index
    %c0_109 = arith.constant 0 : index
    %c0_110 = arith.constant 0 : index
    %115 = vector.load %arg11[%c3_108, %c0_109, %c0_110] : memref<4x128x32xbf16, #tpu.memory_space<vmem>>, vector<1x128x32xbf16>
    %116 = vector.shape_cast %115 : vector<1x128x32xbf16> to vector<128x32xbf16>
    %cst_111 = arith.constant dense<0.000000e+00> : vector<2x32xf32>
    %117 = tpu.matmul %114, %116, %cst_111 {dimension_numbers = #tpu.dot_dimension_numbers<[1], [0], [0], [1], [0, 0, 1, 1], [], []>} : vector<2x128xbf16>, vector<128x32xbf16>, vector<2x32xf32> -> vector<2x32xf32>
    %118 = arith.addf %110, %117 : vector<2x32xf32>
    %119 = vector.extract_strided_slice %118 {offsets = [0, 0], sizes = [2, 16], strides = [1, 1]} : vector<2x32xf32> to vector<2x16xf32>
    %120 = vector.extract_strided_slice %118 {offsets = [0, 16], sizes = [2, 16], strides = [1, 1]} : vector<2x32xf32> to vector<2x16xf32>
    %c0_112 = arith.constant 0 : index
    %c0_113 = arith.constant 0 : index
    %121 = vector.load %arg30[%c0_112, %c0_113] : memref<2x16xf32, #tpu.memory_space<vmem>>, vector<2x16xf32>
    tpu.vector_store %arg30[%c0_112, %c0_113], %119 {strides = array<i32>} : memref<2x16xf32, #tpu.memory_space<vmem>>, vector<2x16xf32>,
    %c0_114 = arith.constant 0 : index
    %c0_115 = arith.constant 0 : index
    %122 = vector.load %arg31[%c0_114, %c0_115] : memref<2x16xf32, #tpu.memory_space<vmem>>, vector<2x16xf32>
    tpu.vector_store %arg31[%c0_114, %c0_115], %120 {strides = array<i32>} : memref<2x16xf32, #tpu.memory_space<vmem>>, vector<2x16xf32>,
    %c0_116 = arith.constant 0 : index
    %c0_117 = arith.constant 0 : index
    %123 = vector.load %arg1[%c0_116, %c0_117] : memref<2x16xf32, #tpu.memory_space<vmem>>, vector<2x16xf32>
    %cst_118 = arith.constant 5.000000e-01 : f32
    %124 = vector.broadcast %cst_118 : f32 to vector<2x16xf32>
    %125 = arith.mulf %124, %120 : vector<2x16xf32>
    %126 = math.exp %125 : vector<2x16xf32>
    %127 = arith.mulf %123, %126 : vector<2x16xf32>
    %128 = arith.addf %119, %127 : vector<2x16xf32>
    %129 = arith.truncf %128 : vector<2x16xf32> to vector<2x16xbf16>
    %c0_119 = arith.constant 0 : index
    %c0_120 = arith.constant 0 : index
    %130 = vector.load %arg16[%c0_119, %c0_120] : memref<8x128xf32, #tpu.memory_space<vmem>>, vector<8x128xf32>
    %c0_121 = arith.constant 0 : index
    %c0_122 = arith.constant 0 : index
    %c0_123 = arith.constant 0 : index
    %131 = vector.load %arg15[%c0_121, %c0_122, %c0_123] : memref<4x8x2xbf16, #tpu.memory_space<vmem>>, vector<1x8x2xbf16>
    %132 = vector.shape_cast %131 : vector<1x8x2xbf16> to vector<8x2xbf16>
    %cst_124 = arith.constant dense<0.000000e+00> : vector<8x16xf32>
    %133 = tpu.matmul %132, %129, %cst_124 {dimension_numbers = #tpu.dot_dimension_numbers<[1], [0], [0], [1], [0, 0, 1, 1], [], []>} : vector<8x2xbf16>, vector<2x16xbf16>, vector<8x16xf32> -> vector<8x16xf32>
    %134 = arith.truncf %133 : vector<8x16xf32> to vector<8x16xbf16>
    %c0_125 = arith.constant 0 : index
    %c0_126 = arith.constant 0 : index
    %c0_127 = arith.constant 0 : index
    %135 = vector.load %arg14[%c0_125, %c0_126, %c0_127] : memref<4x16x128xbf16, #tpu.memory_space<vmem>>, vector<1x16x128xbf16>
    %136 = vector.shape_cast %135 : vector<1x16x128xbf16> to vector<16x128xbf16>
    %cst_128 = arith.constant dense<0.000000e+00> : vector<8x128xf32>
    %137 = tpu.matmul %134, %136, %cst_128 {dimension_numbers = #tpu.dot_dimension_numbers<[1], [0], [0], [1], [0, 0, 1, 1], [], []>} : vector<8x16xbf16>, vector<16x128xbf16>, vector<8x128xf32> -> vector<8x128xf32>
    %138 = arith.addf %130, %137 : vector<8x128xf32>
    %c1_129 = arith.constant 1 : index
    %c0_130 = arith.constant 0 : index
    %c0_131 = arith.constant 0 : index
    %139 = vector.load %arg15[%c1_129, %c0_130, %c0_131] : memref<4x8x2xbf16, #tpu.memory_space<vmem>>, vector<1x8x2xbf16>
    %140 = vector.shape_cast %139 : vector<1x8x2xbf16> to vector<8x2xbf16>
    %cst_132 = arith.constant dense<0.000000e+00> : vector<8x16xf32>
    %141 = tpu.matmul %140, %129, %cst_132 {dimension_numbers = #tpu.dot_dimension_numbers<[1], [0], [0], [1], [0, 0, 1, 1], [], []>} : vector<8x2xbf16>, vector<2x16xbf16>, vector<8x16xf32> -> vector<8x16xf32>
    %142 = arith.truncf %141 : vector<8x16xf32> to vector<8x16xbf16>
    %c1_133 = arith.constant 1 : index
    %c0_134 = arith.constant 0 : index
    %c0_135 = arith.constant 0 : index
    %143 = vector.load %arg14[%c1_133, %c0_134, %c0_135] : memref<4x16x128xbf16, #tpu.memory_space<vmem>>, vector<1x16x128xbf16>
    %144 = vector.shape_cast %143 : vector<1x16x128xbf16> to vector<16x128xbf16>
    %cst_136 = arith.constant dense<0.000000e+00> : vector<8x128xf32>
    %145 = tpu.matmul %142, %144, %cst_136 {dimension_numbers = #tpu.dot_dimension_numbers<[1], [0], [0], [1], [0, 0, 1, 1], [], []>} : vector<8x16xbf16>, vector<16x128xbf16>, vector<8x128xf32> -> vector<8x128xf32>
    %146 = arith.addf %138, %145 : vector<8x128xf32>
    %c2_137 = arith.constant 2 : index
    %c0_138 = arith.constant 0 : index
    %c0_139 = arith.constant 0 : index
    %147 = vector.load %arg15[%c2_137, %c0_138, %c0_139] : memref<4x8x2xbf16, #tpu.memory_space<vmem>>, vector<1x8x2xbf16>
    %148 = vector.shape_cast %147 : vector<1x8x2xbf16> to vector<8x2xbf16>
    %cst_140 = arith.constant dense<0.000000e+00> : vector<8x16xf32>
    %149 = tpu.matmul %148, %129, %cst_140 {dimension_numbers = #tpu.dot_dimension_numbers<[1], [0], [0], [1], [0, 0, 1, 1], [], []>} : vector<8x2xbf16>, vector<2x16xbf16>, vector<8x16xf32> -> vector<8x16xf32>
    %150 = arith.truncf %149 : vector<8x16xf32> to vector<8x16xbf16>
    %c2_141 = arith.constant 2 : index
    %c0_142 = arith.constant 0 : index
    %c0_143 = arith.constant 0 : index
    %151 = vector.load %arg14[%c2_141, %c0_142, %c0_143] : memref<4x16x128xbf16, #tpu.memory_space<vmem>>, vector<1x16x128xbf16>
    %152 = vector.shape_cast %151 : vector<1x16x128xbf16> to vector<16x128xbf16>
    %cst_144 = arith.constant dense<0.000000e+00> : vector<8x128xf32>
    %153 = tpu.matmul %150, %152, %cst_144 {dimension_numbers = #tpu.dot_dimension_numbers<[1], [0], [0], [1], [0, 0, 1, 1], [], []>} : vector<8x16xbf16>, vector<16x128xbf16>, vector<8x128xf32> -> vector<8x128xf32>
    %154 = arith.addf %146, %153 : vector<8x128xf32>
    %c3_145 = arith.constant 3 : index
    %c0_146 = arith.constant 0 : index
    %c0_147 = arith.constant 0 : index
    %155 = vector.load %arg15[%c3_145, %c0_146, %c0_147] : memref<4x8x2xbf16, #tpu.memory_space<vmem>>, vector<1x8x2xbf16>
    %156 = vector.shape_cast %155 : vector<1x8x2xbf16> to vector<8x2xbf16>
    %cst_148 = arith.constant dense<0.000000e+00> : vector<8x16xf32>
    %157 = tpu.matmul %156, %129, %cst_148 {dimension_numbers = #tpu.dot_dimension_numbers<[1], [0], [0], [1], [0, 0, 1, 1], [], []>} : vector<8x2xbf16>, vector<2x16xbf16>, vector<8x16xf32> -> vector<8x16xf32>
    %158 = arith.truncf %157 : vector<8x16xf32> to vector<8x16xbf16>
    %c3_149 = arith.constant 3 : index
    %c0_150 = arith.constant 0 : index
    %c0_151 = arith.constant 0 : index
    %159 = vector.load %arg14[%c3_149, %c0_150, %c0_151] : memref<4x16x128xbf16, #tpu.memory_space<vmem>>, vector<1x16x128xbf16>
    %160 = vector.shape_cast %159 : vector<1x16x128xbf16> to vector<16x128xbf16>
    %cst_152 = arith.constant dense<0.000000e+00> : vector<8x128xf32>
    %161 = tpu.matmul %158, %160, %cst_152 {dimension_numbers = #tpu.dot_dimension_numbers<[1], [0], [0], [1], [0, 0, 1, 1], [], []>} : vector<8x16xbf16>, vector<16x128xbf16>, vector<8x128xf32> -> vector<8x128xf32>
    %162 = arith.addf %154, %161 : vector<8x128xf32>
    %163 = arith.truncf %162 : vector<8x128xf32> to vector<8x128xbf16>
    %c0_153 = arith.constant 0 : index
    %c0_154 = arith.constant 0 : index
    %164 = vector.load %arg19[%c0_153, %c0_154] : memref<16x128xf32, #tpu.memory_space<vmem>>, vector<16x128xf32>
    %c0_155 = arith.constant 0 : index
    %c0_156 = arith.constant 0 : index
    %c0_157 = arith.constant 0 : index
    %165 = vector.load %arg18[%c0_155, %c0_156, %c0_157] : memref<3x16x8xbf16, #tpu.memory_space<vmem>>, vector<1x16x8xbf16>
    %166 = vector.shape_cast %165 : vector<1x16x8xbf16> to vector<16x8xbf16>
    %cst_158 = arith.constant dense<0.000000e+00> : vector<16x128xf32>
    %167 = tpu.matmul %166, %163, %cst_158 {dimension_numbers = #tpu.dot_dimension_numbers<[1], [0], [0], [1], [0, 0, 1, 1], [], []>} : vector<16x8xbf16>, vector<8x128xbf16>, vector<16x128xf32> -> vector<16x128xf32>
    %168 = arith.truncf %167 : vector<16x128xf32> to vector<16x128xbf16>
    %c0_159 = arith.constant 0 : index
    %c0_160 = arith.constant 0 : index
    %c0_161 = arith.constant 0 : index
    %169 = vector.load %arg17[%c0_159, %c0_160, %c0_161] : memref<3x128x128xbf16, #tpu.memory_space<vmem>>, vector<1x128x128xbf16>
    %170 = vector.shape_cast %169 : vector<1x128x128xbf16> to vector<128x128xbf16>
    %cst_162 = arith.constant dense<0.000000e+00> : vector<16x128xf32>
    %171 = tpu.matmul %168, %170, %cst_162 {dimension_numbers = #tpu.dot_dimension_numbers<[1], [0], [0], [1], [0, 0, 1, 1], [], []>} : vector<16x128xbf16>, vector<128x128xbf16>, vector<16x128xf32> -> vector<16x128xf32>
    %172 = arith.addf %164, %171 : vector<16x128xf32>
    %c1_163 = arith.constant 1 : index
    %c0_164 = arith.constant 0 : index
    %c0_165 = arith.constant 0 : index
    %173 = vector.load %arg18[%c1_163, %c0_164, %c0_165] : memref<3x16x8xbf16, #tpu.memory_space<vmem>>, vector<1x16x8xbf16>
    %174 = vector.shape_cast %173 : vector<1x16x8xbf16> to vector<16x8xbf16>
    %cst_166 = arith.constant dense<0.000000e+00> : vector<16x128xf32>
    %175 = tpu.matmul %174, %163, %cst_166 {dimension_numbers = #tpu.dot_dimension_numbers<[1], [0], [0], [1], [0, 0, 1, 1], [], []>} : vector<16x8xbf16>, vector<8x128xbf16>, vector<16x128xf32> -> vector<16x128xf32>
    %176 = arith.truncf %175 : vector<16x128xf32> to vector<16x128xbf16>
    %c1_167 = arith.constant 1 : index
    %c0_168 = arith.constant 0 : index
    %c0_169 = arith.constant 0 : index
    %177 = vector.load %arg17[%c1_167, %c0_168, %c0_169] : memref<3x128x128xbf16, #tpu.memory_space<vmem>>, vector<1x128x128xbf16>
    %178 = vector.shape_cast %177 : vector<1x128x128xbf16> to vector<128x128xbf16>
    %cst_170 = arith.constant dense<0.000000e+00> : vector<16x128xf32>
    %179 = tpu.matmul %176, %178, %cst_170 {dimension_numbers = #tpu.dot_dimension_numbers<[1], [0], [0], [1], [0, 0, 1, 1], [], []>} : vector<16x128xbf16>, vector<128x128xbf16>, vector<16x128xf32> -> vector<16x128xf32>
    %180 = arith.addf %172, %179 : vector<16x128xf32>
    %c2_171 = arith.constant 2 : index
    %c0_172 = arith.constant 0 : index
    %c0_173 = arith.constant 0 : index
    %181 = vector.load %arg18[%c2_171, %c0_172, %c0_173] : memref<3x16x8xbf16, #tpu.memory_space<vmem>>, vector<1x16x8xbf16>
    %182 = vector.shape_cast %181 : vector<1x16x8xbf16> to vector<16x8xbf16>
    %cst_174 = arith.constant dense<0.000000e+00> : vector<16x128xf32>
    %183 = tpu.matmul %182, %163, %cst_174 {dimension_numbers = #tpu.dot_dimension_numbers<[1], [0], [0], [1], [0, 0, 1, 1], [], []>} : vector<16x8xbf16>, vector<8x128xbf16>, vector<16x128xf32> -> vector<16x128xf32>
    %184 = arith.truncf %183 : vector<16x128xf32> to vector<16x128xbf16>
    %c2_175 = arith.constant 2 : index
    %c0_176 = arith.constant 0 : index
    %c0_177 = arith.constant 0 : index
    %185 = vector.load %arg17[%c2_175, %c0_176, %c0_177] : memref<3x128x128xbf16, #tpu.memory_space<vmem>>, vector<1x128x128xbf16>
    %186 = vector.shape_cast %185 : vector<1x128x128xbf16> to vector<128x128xbf16>
    %cst_178 = arith.constant dense<0.000000e+00> : vector<16x128xf32>
    %187 = tpu.matmul %184, %186, %cst_178 {dimension_numbers = #tpu.dot_dimension_numbers<[1], [0], [0], [1], [0, 0, 1, 1], [], []>} : vector<16x128xbf16>, vector<128x128xbf16>, vector<16x128xf32> -> vector<16x128xf32>
    %188 = arith.addf %180, %187 : vector<16x128xf32>
    %cst_179 = arith.constant 0.000000e+00 : f32
    %189 = vector.broadcast %cst_179 : f32 to vector<16x128xf32>
    %190 = arith.maximumf %188, %189 : vector<16x128xf32>
    %191 = arith.truncf %190 : vector<16x128xf32> to vector<16x128xbf16>
    %c0_180 = arith.constant 0 : index
    %c0_181 = arith.constant 0 : index
    %192 = vector.load %arg22[%c0_180, %c0_181] : memref<32x128xf32, #tpu.memory_space<vmem>>, vector<32x128xf32>
    %c0_182 = arith.constant 0 : index
    %c0_183 = arith.constant 0 : index
    %c0_184 = arith.constant 0 : index
    %193 = vector.load %arg21[%c0_182, %c0_183, %c0_184] : memref<3x32x16xbf16, #tpu.memory_space<vmem>>, vector<1x32x16xbf16>
    %194 = vector.shape_cast %193 : vector<1x32x16xbf16> to vector<32x16xbf16>
    %cst_185 = arith.constant dense<0.000000e+00> : vector<32x128xf32>
    %195 = tpu.matmul %194, %191, %cst_185 {dimension_numbers = #tpu.dot_dimension_numbers<[1], [0], [0], [1], [0, 0, 1, 1], [], []>} : vector<32x16xbf16>, vector<16x128xbf16>, vector<32x128xf32> -> vector<32x128xf32>
    %196 = arith.truncf %195 : vector<32x128xf32> to vector<32x128xbf16>
    %c0_186 = arith.constant 0 : index
    %c0_187 = arith.constant 0 : index
    %c0_188 = arith.constant 0 : index
    %197 = vector.load %arg20[%c0_186, %c0_187, %c0_188] : memref<3x128x128xbf16, #tpu.memory_space<vmem>>, vector<1x128x128xbf16>
    %198 = vector.shape_cast %197 : vector<1x128x128xbf16> to vector<128x128xbf16>
    %cst_189 = arith.constant dense<0.000000e+00> : vector<32x128xf32>
    %199 = tpu.matmul %196, %198, %cst_189 {dimension_numbers = #tpu.dot_dimension_numbers<[1], [0], [0], [1], [0, 0, 1, 1], [], []>} : vector<32x128xbf16>, vector<128x128xbf16>, vector<32x128xf32> -> vector<32x128xf32>
    %200 = arith.addf %192, %199 : vector<32x128xf32>
    %c1_190 = arith.constant 1 : index
    %c0_191 = arith.constant 0 : index
    %c0_192 = arith.constant 0 : index
    %201 = vector.load %arg21[%c1_190, %c0_191, %c0_192] : memref<3x32x16xbf16, #tpu.memory_space<vmem>>, vector<1x32x16xbf16>
    %202 = vector.shape_cast %201 : vector<1x32x16xbf16> to vector<32x16xbf16>
    %cst_193 = arith.constant dense<0.000000e+00> : vector<32x128xf32>
    %203 = tpu.matmul %202, %191, %cst_193 {dimension_numbers = #tpu.dot_dimension_numbers<[1], [0], [0], [1], [0, 0, 1, 1], [], []>} : vector<32x16xbf16>, vector<16x128xbf16>, vector<32x128xf32> -> vector<32x128xf32>
    %204 = arith.truncf %203 : vector<32x128xf32> to vector<32x128xbf16>
    %c1_194 = arith.constant 1 : index
    %c0_195 = arith.constant 0 : index
    %c0_196 = arith.constant 0 : index
    %205 = vector.load %arg20[%c1_194, %c0_195, %c0_196] : memref<3x128x128xbf16, #tpu.memory_space<vmem>>, vector<1x128x128xbf16>
    %206 = vector.shape_cast %205 : vector<1x128x128xbf16> to vector<128x128xbf16>
    %cst_197 = arith.constant dense<0.000000e+00> : vector<32x128xf32>
    %207 = tpu.matmul %204, %206, %cst_197 {dimension_numbers = #tpu.dot_dimension_numbers<[1], [0], [0], [1], [0, 0, 1, 1], [], []>} : vector<32x128xbf16>, vector<128x128xbf16>, vector<32x128xf32> -> vector<32x128xf32>
    %208 = arith.addf %200, %207 : vector<32x128xf32>
    %c2_198 = arith.constant 2 : index
    %c0_199 = arith.constant 0 : index
    %c0_200 = arith.constant 0 : index
    %209 = vector.load %arg21[%c2_198, %c0_199, %c0_200] : memref<3x32x16xbf16, #tpu.memory_space<vmem>>, vector<1x32x16xbf16>
    %210 = vector.shape_cast %209 : vector<1x32x16xbf16> to vector<32x16xbf16>
    %cst_201 = arith.constant dense<0.000000e+00> : vector<32x128xf32>
    %211 = tpu.matmul %210, %191, %cst_201 {dimension_numbers = #tpu.dot_dimension_numbers<[1], [0], [0], [1], [0, 0, 1, 1], [], []>} : vector<32x16xbf16>, vector<16x128xbf16>, vector<32x128xf32> -> vector<32x128xf32>
    %212 = arith.truncf %211 : vector<32x128xf32> to vector<32x128xbf16>
    %c2_202 = arith.constant 2 : index
    %c0_203 = arith.constant 0 : index
    %c0_204 = arith.constant 0 : index
    %213 = vector.load %arg20[%c2_202, %c0_203, %c0_204] : memref<3x128x128xbf16, #tpu.memory_space<vmem>>, vector<1x128x128xbf16>
    %214 = vector.shape_cast %213 : vector<1x128x128xbf16> to vector<128x128xbf16>
    %cst_205 = arith.constant dense<0.000000e+00> : vector<32x128xf32>
    %215 = tpu.matmul %212, %214, %cst_205 {dimension_numbers = #tpu.dot_dimension_numbers<[1], [0], [0], [1], [0, 0, 1, 1], [], []>} : vector<32x128xbf16>, vector<128x128xbf16>, vector<32x128xf32> -> vector<32x128xf32>
    %216 = arith.addf %208, %215 : vector<32x128xf32>
    %cst_206 = arith.constant 0.000000e+00 : f32
    %217 = vector.broadcast %cst_206 : f32 to vector<32x128xf32>
    %218 = arith.maximumf %216, %217 : vector<32x128xf32>
    %219 = arith.truncf %218 : vector<32x128xf32> to vector<32x128xbf16>
    %c0_207 = arith.constant 0 : index
    %c0_208 = arith.constant 0 : index
    %220 = vector.load %arg25[%c0_207, %c0_208] : memref<32x128xf32, #tpu.memory_space<vmem>>, vector<32x128xf32>
    %c0_209 = arith.constant 0 : index
    %c0_210 = arith.constant 0 : index
    %c0_211 = arith.constant 0 : index
    %221 = vector.load %arg24[%c0_209, %c0_210, %c0_211] : memref<3x32x32xbf16, #tpu.memory_space<vmem>>, vector<1x32x32xbf16>
    %222 = vector.shape_cast %221 : vector<1x32x32xbf16> to vector<32x32xbf16>
    %cst_212 = arith.constant dense<0.000000e+00> : vector<32x128xf32>
    %223 = tpu.matmul %222, %219, %cst_212 {dimension_numbers = #tpu.dot_dimension_numbers<[1], [0], [0], [1], [0, 0, 1, 1], [], []>} : vector<32x32xbf16>, vector<32x128xbf16>, vector<32x128xf32> -> vector<32x128xf32>
    %224 = arith.truncf %223 : vector<32x128xf32> to vector<32x128xbf16>
    %c0_213 = arith.constant 0 : index
    %c0_214 = arith.constant 0 : index
    %c0_215 = arith.constant 0 : index
    %225 = vector.load %arg23[%c0_213, %c0_214, %c0_215] : memref<3x128x128xbf16, #tpu.memory_space<vmem>>, vector<1x128x128xbf16>
    %226 = vector.shape_cast %225 : vector<1x128x128xbf16> to vector<128x128xbf16>
    %cst_216 = arith.constant dense<0.000000e+00> : vector<32x128xf32>
    %227 = tpu.matmul %224, %226, %cst_216 {dimension_numbers = #tpu.dot_dimension_numbers<[1], [0], [0], [1], [0, 0, 1, 1], [], []>} : vector<32x128xbf16>, vector<128x128xbf16>, vector<32x128xf32> -> vector<32x128xf32>
    %228 = arith.addf %220, %227 : vector<32x128xf32>
    %c1_217 = arith.constant 1 : index
    %c0_218 = arith.constant 0 : index
    %c0_219 = arith.constant 0 : index
    %229 = vector.load %arg24[%c1_217, %c0_218, %c0_219] : memref<3x32x32xbf16, #tpu.memory_space<vmem>>, vector<1x32x32xbf16>
    %230 = vector.shape_cast %229 : vector<1x32x32xbf16> to vector<32x32xbf16>
    %cst_220 = arith.constant dense<0.000000e+00> : vector<32x128xf32>
    %231 = tpu.matmul %230, %219, %cst_220 {dimension_numbers = #tpu.dot_dimension_numbers<[1], [0], [0], [1], [0, 0, 1, 1], [], []>} : vector<32x32xbf16>, vector<32x128xbf16>, vector<32x128xf32> -> vector<32x128xf32>
    %232 = arith.truncf %231 : vector<32x128xf32> to vector<32x128xbf16>
    %c1_221 = arith.constant 1 : index
    %c0_222 = arith.constant 0 : index
    %c0_223 = arith.constant 0 : index
    %233 = vector.load %arg23[%c1_221, %c0_222, %c0_223] : memref<3x128x128xbf16, #tpu.memory_space<vmem>>, vector<1x128x128xbf16>
    %234 = vector.shape_cast %233 : vector<1x128x128xbf16> to vector<128x128xbf16>
    %cst_224 = arith.constant dense<0.000000e+00> : vector<32x128xf32>
    %235 = tpu.matmul %232, %234, %cst_224 {dimension_numbers = #tpu.dot_dimension_numbers<[1], [0], [0], [1], [0, 0, 1, 1], [], []>} : vector<32x128xbf16>, vector<128x128xbf16>, vector<32x128xf32> -> vector<32x128xf32>
    %236 = arith.addf %228, %235 : vector<32x128xf32>
    %c2_225 = arith.constant 2 : index
    %c0_226 = arith.constant 0 : index
    %c0_227 = arith.constant 0 : index
    %237 = vector.load %arg24[%c2_225, %c0_226, %c0_227] : memref<3x32x32xbf16, #tpu.memory_space<vmem>>, vector<1x32x32xbf16>
    %238 = vector.shape_cast %237 : vector<1x32x32xbf16> to vector<32x32xbf16>
    %cst_228 = arith.constant dense<0.000000e+00> : vector<32x128xf32>
    %239 = tpu.matmul %238, %219, %cst_228 {dimension_numbers = #tpu.dot_dimension_numbers<[1], [0], [0], [1], [0, 0, 1, 1], [], []>} : vector<32x32xbf16>, vector<32x128xbf16>, vector<32x128xf32> -> vector<32x128xf32>
    %240 = arith.truncf %239 : vector<32x128xf32> to vector<32x128xbf16>
    %c2_229 = arith.constant 2 : index
    %c0_230 = arith.constant 0 : index
    %c0_231 = arith.constant 0 : index
    %241 = vector.load %arg23[%c2_229, %c0_230, %c0_231] : memref<3x128x128xbf16, #tpu.memory_space<vmem>>, vector<1x128x128xbf16>
    %242 = vector.shape_cast %241 : vector<1x128x128xbf16> to vector<128x128xbf16>
    %cst_232 = arith.constant dense<0.000000e+00> : vector<32x128xf32>
    %243 = tpu.matmul %240, %242, %cst_232 {dimension_numbers = #tpu.dot_dimension_numbers<[1], [0], [0], [1], [0, 0, 1, 1], [], []>} : vector<32x128xbf16>, vector<128x128xbf16>, vector<32x128xf32> -> vector<32x128xf32>
    %244 = arith.addf %236, %243 : vector<32x128xf32>
    %cst_233 = arith.constant 0.000000e+00 : f32
    %245 = vector.broadcast %cst_233 : f32 to vector<32x128xf32>
    %246 = arith.maximumf %244, %245 : vector<32x128xf32>
    %247 = arith.truncf %246 : vector<32x128xf32> to vector<32x128xbf16>
    %c0_234 = arith.constant 0 : index
    %c0_235 = arith.constant 0 : index
    %248 = vector.load %arg28[%c0_234, %c0_235] : memref<34x68xf32, #tpu.memory_space<vmem>>, vector<34x68xf32>
    %c0_236 = arith.constant 0 : index
    %c0_237 = arith.constant 0 : index
    %c0_238 = arith.constant 0 : index
    %249 = vector.load %arg27[%c0_236, %c0_237, %c0_238] : memref<4x34x32xbf16, #tpu.memory_space<vmem>>, vector<1x34x32xbf16>
    %250 = vector.shape_cast %249 : vector<1x34x32xbf16> to vector<34x32xbf16>
    %cst_239 = arith.constant dense<0.000000e+00> : vector<34x128xf32>
    %251 = tpu.matmul %250, %247, %cst_239 {dimension_numbers = #tpu.dot_dimension_numbers<[1], [0], [0], [1], [0, 0, 1, 1], [], []>} : vector<34x32xbf16>, vector<32x128xbf16>, vector<34x128xf32> -> vector<34x128xf32>
    %252 = arith.truncf %251 : vector<34x128xf32> to vector<34x128xbf16>
    %c0_240 = arith.constant 0 : index
    %c0_241 = arith.constant 0 : index
    %c0_242 = arith.constant 0 : index
    %253 = vector.load %arg26[%c0_240, %c0_241, %c0_242] : memref<4x128x68xbf16, #tpu.memory_space<vmem>>, vector<1x128x68xbf16>
    %254 = vector.shape_cast %253 : vector<1x128x68xbf16> to vector<128x68xbf16>
    %cst_243 = arith.constant dense<0.000000e+00> : vector<34x68xf32>
    %255 = tpu.matmul %252, %254, %cst_243 {dimension_numbers = #tpu.dot_dimension_numbers<[1], [0], [0], [1], [0, 0, 1, 1], [], []>} : vector<34x128xbf16>, vector<128x68xbf16>, vector<34x68xf32> -> vector<34x68xf32>
    %256 = arith.addf %248, %255 : vector<34x68xf32>
    %c1_244 = arith.constant 1 : index
    %c0_245 = arith.constant 0 : index
    %c0_246 = arith.constant 0 : index
    %257 = vector.load %arg27[%c1_244, %c0_245, %c0_246] : memref<4x34x32xbf16, #tpu.memory_space<vmem>>, vector<1x34x32xbf16>
    %258 = vector.shape_cast %257 : vector<1x34x32xbf16> to vector<34x32xbf16>
    %cst_247 = arith.constant dense<0.000000e+00> : vector<34x128xf32>
    %259 = tpu.matmul %258, %247, %cst_247 {dimension_numbers = #tpu.dot_dimension_numbers<[1], [0], [0], [1], [0, 0, 1, 1], [], []>} : vector<34x32xbf16>, vector<32x128xbf16>, vector<34x128xf32> -> vector<34x128xf32>
    %260 = arith.truncf %259 : vector<34x128xf32> to vector<34x128xbf16>
    %c1_248 = arith.constant 1 : index
    %c0_249 = arith.constant 0 : index
    %c0_250 = arith.constant 0 : index
    %261 = vector.load %arg26[%c1_248, %c0_249, %c0_250] : memref<4x128x68xbf16, #tpu.memory_space<vmem>>, vector<1x128x68xbf16>
    %262 = vector.shape_cast %261 : vector<1x128x68xbf16> to vector<128x68xbf16>
    %cst_251 = arith.constant dense<0.000000e+00> : vector<34x68xf32>
    %263 = tpu.matmul %260, %262, %cst_251 {dimension_numbers = #tpu.dot_dimension_numbers<[1], [0], [0], [1], [0, 0, 1, 1], [], []>} : vector<34x128xbf16>, vector<128x68xbf16>, vector<34x68xf32> -> vector<34x68xf32>
    %264 = arith.addf %256, %263 : vector<34x68xf32>
    %c2_252 = arith.constant 2 : index
    %c0_253 = arith.constant 0 : index
    %c0_254 = arith.constant 0 : index
    %265 = vector.load %arg27[%c2_252, %c0_253, %c0_254] : memref<4x34x32xbf16, #tpu.memory_space<vmem>>, vector<1x34x32xbf16>
    %266 = vector.shape_cast %265 : vector<1x34x32xbf16> to vector<34x32xbf16>
    %cst_255 = arith.constant dense<0.000000e+00> : vector<34x128xf32>
    %267 = tpu.matmul %266, %247, %cst_255 {dimension_numbers = #tpu.dot_dimension_numbers<[1], [0], [0], [1], [0, 0, 1, 1], [], []>} : vector<34x32xbf16>, vector<32x128xbf16>, vector<34x128xf32> -> vector<34x128xf32>
    %268 = arith.truncf %267 : vector<34x128xf32> to vector<34x128xbf16>
    %c2_256 = arith.constant 2 : index
    %c0_257 = arith.constant 0 : index
    %c0_258 = arith.constant 0 : index
    %269 = vector.load %arg26[%c2_256, %c0_257, %c0_258] : memref<4x128x68xbf16, #tpu.memory_space<vmem>>, vector<1x128x68xbf16>
    %270 = vector.shape_cast %269 : vector<1x128x68xbf16> to vector<128x68xbf16>
    %cst_259 = arith.constant dense<0.000000e+00> : vector<34x68xf32>
    %271 = tpu.matmul %268, %270, %cst_259 {dimension_numbers = #tpu.dot_dimension_numbers<[1], [0], [0], [1], [0, 0, 1, 1], [], []>} : vector<34x128xbf16>, vector<128x68xbf16>, vector<34x68xf32> -> vector<34x68xf32>
    %272 = arith.addf %264, %271 : vector<34x68xf32>
    %c3_260 = arith.constant 3 : index
    %c0_261 = arith.constant 0 : index
    %c0_262 = arith.constant 0 : index
    %273 = vector.load %arg27[%c3_260, %c0_261, %c0_262] : memref<4x34x32xbf16, #tpu.memory_space<vmem>>, vector<1x34x32xbf16>
    %274 = vector.shape_cast %273 : vector<1x34x32xbf16> to vector<34x32xbf16>
    %cst_263 = arith.constant dense<0.000000e+00> : vector<34x128xf32>
    %275 = tpu.matmul %274, %247, %cst_263 {dimension_numbers = #tpu.dot_dimension_numbers<[1], [0], [0], [1], [0, 0, 1, 1], [], []>} : vector<34x32xbf16>, vector<32x128xbf16>, vector<34x128xf32> -> vector<34x128xf32>
    %276 = arith.truncf %275 : vector<34x128xf32> to vector<34x128xbf16>
    %c3_264 = arith.constant 3 : index
    %c0_265 = arith.constant 0 : index
    %c0_266 = arith.constant 0 : index
    %277 = vector.load %arg26[%c3_264, %c0_265, %c0_266] : memref<4x128x68xbf16, #tpu.memory_space<vmem>>, vector<1x128x68xbf16>
    %278 = vector.shape_cast %277 : vector<1x128x68xbf16> to vector<128x68xbf16>
    %cst_267 = arith.constant dense<0.000000e+00> : vector<34x68xf32>
    %279 = tpu.matmul %276, %278, %cst_267 {dimension_numbers = #tpu.dot_dimension_numbers<[1], [0], [0], [1], [0, 0, 1, 1], [], []>} : vector<34x128xbf16>, vector<128x68xbf16>, vector<34x68xf32> -> vector<34x68xf32>
    %280 = arith.addf %272, %279 : vector<34x68xf32>
    %cst_268 = arith.constant 0.000000e+00 : f32
    %281 = vector.broadcast %cst_268 : f32 to vector<34x68xf32>
    %282 = arith.subf %281, %280 : vector<34x68xf32>
    %283 = math.exp %282 : vector<34x68xf32>
    %cst_269 = arith.constant 1.000000e+00 : f32
    %284 = vector.broadcast %cst_269 : f32 to vector<34x68xf32>
    %285 = arith.addf %284, %283 : vector<34x68xf32>
    %286 = tpu.reciprocal %285 {approx = true} : vector<34x68xf32> -> vector<34x68xf32>
    %c0_270 = arith.constant 0 : index
    %c0_271 = arith.constant 0 : index
    %287 = vector.load %arg29[%c0_270, %c0_271] : memref<34x68xf32, #tpu.memory_space<vmem>>, vector<34x68xf32>
    tpu.vector_store %arg29[%c0_270, %c0_271], %286 {strides = array<i32>} : memref<34x68xf32, #tpu.memory_space<vmem>>, vector<34x68xf32>,
    return
  }
}

</mosaic_0001>

<llo_original>
// kernel: _lambda_.1
$region0: #{_lambda_.1}
  #allocation0 [shape = 'u32[]', space=smem, size = 0x4, offset = 0x4, fixed_abs, tag = 'smem constant byte address 0x4 - core index']
  #allocation1 [shape = 'u32[144,128]{1,0:T(1,128)}', space=vmem, size = 0x12000, scoped, tag = 'internal scratch']
  %s0 = inlined_call_operand.smem [shape: u32[32], index: -1, kind: input, shape index: {}]
  %s1 = sld [smem:[%s0]]
  %s2 = scalar_lea.smem %s0, 1
  %s3 = sld [smem:[%s2]]
  %s4 = scalar_lea.smem %s0, 2
  %s5 = sld [smem:[%s4]]
  %s6 = scalar_lea.smem %s0, 3
  %s7 = sld [smem:[%s6]]
  %s8 = scalar_lea.smem %s0, 4
  %s9 = sld [smem:[%s8]]
  %s10 = scalar_lea.smem %s0, 5
  %s11 = sld [smem:[%s10]]
  %s12 = scalar_lea.smem %s0, 6
  %s13 = sld [smem:[%s12]]
  %s14 = scalar_lea.smem %s0, 7
  %s15 = sld [smem:[%s14]]
  %s16 = scalar_lea.smem %s0, 8
  %s17 = sld [smem:[%s16]]
  %s18 = scalar_lea.smem %s0, 9
  %s19 = sld [smem:[%s18]]
  %s20 = scalar_lea.smem %s0, 10
  %s21 = sld [smem:[%s20]]
  %s22 = scalar_lea.smem %s0, 11
  %s23 = sld [smem:[%s22]]
  %s24 = scalar_lea.smem %s0, 12
  %s25 = sld [smem:[%s24]]
  %s26 = scalar_lea.smem %s0, 13
  %s27 = sld [smem:[%s26]]
  %s28 = scalar_lea.smem %s0, 14
  %s29 = sld [smem:[%s28]]
  %s30 = scalar_lea.smem %s0, 15
  %s31 = sld [smem:[%s30]]
  %s32 = scalar_lea.smem %s0, 16
  %s33 = sld [smem:[%s32]]
  %s34 = scalar_lea.smem %s0, 17
  %s35 = sld [smem:[%s34]]
  %s36 = scalar_lea.smem %s0, 18
  %s37 = sld [smem:[%s36]]
  %s38 = scalar_lea.smem %s0, 19
  %s39 = sld [smem:[%s38]]
  %s40 = scalar_lea.smem %s0, 20
  %s41 = sld [smem:[%s40]]
  %s42 = scalar_lea.smem %s0, 21
  %s43 = sld [smem:[%s42]]
  %s44 = scalar_lea.smem %s0, 22
  %s45 = sld [smem:[%s44]]
  %s46 = scalar_lea.smem %s0, 23
  %s47 = sld [smem:[%s46]]
  %s48 = scalar_lea.smem %s0, 24
  %s49 = sld [smem:[%s48]]
  %s50 = scalar_lea.smem %s0, 25
  %s51 = sld [smem:[%s50]]
  %s52 = scalar_lea.smem %s0, 26
  %s53 = sld [smem:[%s52]]
  %s54 = scalar_lea.smem %s0, 27
  %s55 = sld [smem:[%s54]]
  %s56 = scalar_lea.smem %s0, 28
  %s57 = sld [smem:[%s56]]
  %s58 = scalar_lea.smem %s0, 29
  %s59 = sld [smem:[%s58]]
  %s60 = scalar_lea.smem %s0, 30
  %s61 = sld [smem:[%s60]]
  %s62 = scalar_lea.smem %s0, 31
  %s63 = sld [smem:[%s62]]
  %64 = xla_tuple %s59, %s61, %s63
  %s65 = sld [smem:[#allocation0]]
  $region234: #{_lambda_.1} parent=0
    _
  %s67 = ssub.s32 1, %s65
  %s68 = scalar_select 0, %s67, %s65
  $region1: #{_lambda_.1} parent=0
    #allocation2 [shape = 'u8[1024]{0}', space=vmem, size = 0x400, scoped, tag = 'input window, operand 1, single buffered']
    #allocation3 [shape = 's32[1]{0}', space=sflag, size = 0x4, scoped, tag = 'scoped memory for _lambda_.1']
    #allocation4 [shape = 's32[1]{0}', space=sflag, size = 0x4, scoped, tag = 'scoped memory for _lambda_.1']
    #allocation5 [shape = 'u8[24576]{0}', space=vmem, size = 0x6000, scoped, tag = 'input window, operand 3, single buffered']
    #allocation6 [shape = 's32[1]{0}', space=sflag, size = 0x4, scoped, tag = 'scoped memory for _lambda_.1']
    #allocation7 [shape = 'u8[16384]{0}', space=vmem, size = 0x4000, scoped, tag = 'input window, operand 4, single buffered']
    #allocation8 [shape = 'u8[98304]{0}', space=vmem, size = 0x18000, scoped, tag = 'input window, operand 5, single buffered']
    #allocation9 [shape = 's32[1]{0}', space=sflag, size = 0x4, scoped, tag = 'scoped memory for _lambda_.1']
    #allocation10 [shape = 'u8[12288]{0}', space=vmem, size = 0x3000, scoped, tag = 'input window, operand 6, single buffered']
    #allocation11 [shape = 'u8[8192]{0}', space=vmem, size = 0x2000, scoped, tag = 'input window, operand 7, single buffered']
    #allocation12 [shape = 's32[1]{0}', space=sflag, size = 0x4, scoped, tag = 'scoped memory for _lambda_.1']
    #allocation13 [shape = 'u8[98304]{0}', space=vmem, size = 0x18000, scoped, tag = 'input window, operand 8, single buffered']
    #allocation14 [shape = 'u8[6144]{0}', space=vmem, size = 0x1800, scoped, tag = 'input window, operand 9, single buffered']
    #allocation15 [shape = 's32[1]{0}', space=sflag, size = 0x4, scoped, tag = 'scoped memory for _lambda_.1']
    #allocation16 [shape = 'u8[4096]{0}', space=vmem, size = 0x1000, scoped, tag = 'input window, operand 10, single buffered']
    #allocation17 [shape = 'u8[2048]{0}', space=vmem, size = 0x800, scoped, tag = 'input window, operand 12, single buffered']
    #allocation18 [shape = 's32[1]{0}', space=sflag, size = 0x4, scoped, tag = 'scoped memory for _lambda_.1']
    #allocation19 [shape = 'u8[1024]{0}', space=vmem, size = 0x400, scoped, tag = 'input window, operand 13, single buffered']
    #allocation20 [shape = 'u8[16384]{0}', space=vmem, size = 0x4000, scoped, tag = 'input window, operand 14, single buffered']
    #allocation21 [shape = 's32[1]{0}', space=sflag, size = 0x4, scoped, tag = 'scoped memory for _lambda_.1']
    #allocation22 [shape = 'u8[8192]{0}', space=vmem, size = 0x2000, scoped, tag = 'input window, operand 15, single buffered']
    #allocation23 [shape = 'u8[4096]{0}', space=vmem, size = 0x1000, scoped, tag = 'input window, operand 16, single buffered']
    #allocation24 [shape = 's32[1]{0}', space=sflag, size = 0x4, scoped, tag = 'scoped memory for _lambda_.1']
    #allocation25 [shape = 'u8[98304]{0}', space=vmem, size = 0x18000, scoped, tag = 'input window, operand 17, single buffered']
    #allocation26 [shape = 'u8[8192]{0}', space=vmem, size = 0x2000, scoped, tag = 'input window, operand 19, single buffered']
    #allocation27 [shape = 's32[1]{0}', space=sflag, size = 0x4, scoped, tag = 'scoped memory for _lambda_.1']
    #allocation28 [shape = 'u8[98304]{0}', space=vmem, size = 0x18000, scoped, tag = 'input window, operand 20, single buffered']
    #allocation29 [shape = 'u8[24576]{0}', space=vmem, size = 0x6000, scoped, tag = 'input window, operand 21, single buffered']
    #allocation30 [shape = 's32[1]{0}', space=sflag, size = 0x4, scoped, tag = 'scoped memory for _lambda_.1']
    #allocation31 [shape = 'u8[16384]{0}', space=vmem, size = 0x4000, scoped, tag = 'input window, operand 22, single buffered']
    #allocation32 [shape = 'u8[98304]{0}', space=vmem, size = 0x18000, scoped, tag = 'input window, operand 23, single buffered']
    #allocation33 [shape = 's32[1]{0}', space=sflag, size = 0x4, scoped, tag = 'scoped memory for _lambda_.1']
    #allocation34 [shape = 'u8[16384]{0}', space=vmem, size = 0x4000, scoped, tag = 'input window, operand 25, single buffered']
    #allocation35 [shape = 'u8[40960]{0}', space=vmem, size = 0xa000, scoped, tag = 'input window, operand 27, single buffered']
    #allocation36 [shape = 's32[1]{0}', space=sflag, size = 0x4, scoped, tag = 'scoped memory for _lambda_.1']
    #allocation37 [shape = 'u8[20480]{0}', space=vmem, size = 0x5000, scoped, tag = 'input window, operand 28, single buffered']
    #allocation38 [shape = 'u8[1024]{0}', space=vmem, size = 0x400, scoped, tag = 'output window, operand 1, single buffered']
    #allocation39 [shape = 'u8[1024]{0}', space=vmem, size = 0x400, scoped, tag = 'output window, operand 2, single buffered']
    #allocation40 [shape = 's32[1]{0}', space=sflag, size = 0x4, scoped, tag = 'scoped memory for _lambda_.1']
    %69 = vsyncpa [#allocation3], 0
    %70 = vsyncpa [#allocation6], 0
    %71 = vsyncpa [#allocation9], 0
    %72 = vsyncpa [#allocation12], 0
    %73 = vsyncpa [#allocation15], 0
    %74 = vsyncpa [#allocation18], 0
    %75 = vsyncpa [#allocation21], 0
    %76 = vsyncpa [#allocation24], 0
    %77 = vsyncpa [#allocation27], 0
    %78 = vsyncpa [#allocation30], 0
    %79 = vsyncpa [#allocation33], 0
    %80 = vsyncpa [#allocation36], 0
    %81 = vsyncpa [#allocation4], 0
    %82 = vsyncpa [#allocation40], 0
    // Predicated region
    $region2: #{_lambda_.1} parent=1 // pred_check
      _
    $region3: #{_lambda_.1} parent=1 // pred_check_branch
      %84 = sbr.rel (0) target = $region5
    $region4: #{_lambda_.1} parent=1 // pred_region
      _
    $region5: #{_lambda_.1} parent=1 // pred_fallthru
      _
    // Predicated region
    $region6: #{_lambda_.1} parent=1 // pred_check
      _
    $region7: #{_lambda_.1} parent=1 // pred_check_branch
      %86 = sbr.rel (0) target = $region9
    $region8: #{_lambda_.1} parent=1 // pred_region
      %s88 = ssub.s32 32, 32
      %89 = vsyncadd [#allocation3], %s88
      %s91 = sshll.u32 [#allocation2], 4
      %s92 = int_to_ptr.vmem [resolvable:$true] %s91
      %94 = dma.hbm_to_vmem [thread:$0]  %s3, 32, %s92, [#allocation3]
    $region9: #{_lambda_.1} parent=1 // pred_fallthru
      _
    // Predicated region
    $region10: #{_lambda_.1} parent=1 // pred_check
      _
    $region11: #{_lambda_.1} parent=1 // pred_check_branch
      %96 = sbr.rel (0) target = $region13
    $region12: #{_lambda_.1} parent=1 // pred_region
      _
    $region13: #{_lambda_.1} parent=1 // pred_fallthru
      _
    // Predicated region
    $region14: #{_lambda_.1} parent=1 // pred_check
      _
    $region15: #{_lambda_.1} parent=1 // pred_check_branch
      %98 = sbr.rel (0) target = $region17
    $region16: #{_lambda_.1} parent=1 // pred_region
      %s100 = ssub.s32 768, 768
      %101 = vsyncadd [#allocation6], %s100
      %s102 = sshll.u32 [#allocation5], 4
      %s103 = int_to_ptr.vmem [resolvable:$true] %s102
      %108 = dma.hbm_to_vmem [thread:$0]  %s7, 768, %s103, [#allocation6], 64, 64, 4
    $region17: #{_lambda_.1} parent=1 // pred_fallthru
      _
    // Predicated region
    $region18: #{_lambda_.1} parent=1 // pred_check
      _
    $region19: #{_lambda_.1} parent=1 // pred_check_branch
      %110 = sbr.rel (0) target = $region21
    $region20: #{_lambda_.1} parent=1 // pred_region
      %s112 = ssub.s32 512, 512
      %113 = vsyncadd [#allocation6], %s112
      %s114 = sshll.u32 [#allocation7], 4
      %s115 = int_to_ptr.vmem [resolvable:$true] %s114
      %120 = dma.hbm_to_vmem [thread:$0]  %s9, 512, %s115, [#allocation6], 128, 128, 8
    $region21: #{_lambda_.1} parent=1 // pred_fallthru
      _
    // Predicated region
    $region22: #{_lambda_.1} parent=1 // pred_check
      _
    $region23: #{_lambda_.1} parent=1 // pred_check_branch
      %122 = sbr.rel (0) target = $region25
    $region24: #{_lambda_.1} parent=1 // pred_region
      %s124 = ssub.s32 3072, 3072
      %125 = vsyncadd [#allocation9], %s124
      %s126 = sshll.u32 [#allocation8], 4
      %s127 = int_to_ptr.vmem [resolvable:$true] %s126
      %132 = dma.hbm_to_vmem [thread:$0]  %s11, 3072, %s127, [#allocation9], 64, 64, 4
    $region25: #{_lambda_.1} parent=1 // pred_fallthru
      _
    // Predicated region
    $region26: #{_lambda_.1} parent=1 // pred_check
      _
    $region27: #{_lambda_.1} parent=1 // pred_check_branch
      %134 = sbr.rel (0) target = $region29
    $region28: #{_lambda_.1} parent=1 // pred_region
      %s136 = ssub.s32 384, 384
      %137 = vsyncadd [#allocation9], %s136
      %s138 = sshll.u32 [#allocation10], 4
      %s139 = int_to_ptr.vmem [resolvable:$true] %s138
      %144 = dma.hbm_to_vmem [thread:$0]  %s13, 384, %s139, [#allocation9], 64, 64, 4
    $region29: #{_lambda_.1} parent=1 // pred_fallthru
      _
    // Predicated region
    $region30: #{_lambda_.1} parent=1 // pred_check
      _
    $region31: #{_lambda_.1} parent=1 // pred_check_branch
      %146 = sbr.rel (0) target = $region33
    $region32: #{_lambda_.1} parent=1 // pred_region
      %s148 = ssub.s32 256, 256
      %149 = vsyncadd [#allocation12], %s148
      %s150 = sshll.u32 [#allocation11], 4
      %s151 = int_to_ptr.vmem [resolvable:$true] %s150
      %156 = dma.hbm_to_vmem [thread:$0]  %s15, 256, %s151, [#allocation12], 128, 128, 8
    $region33: #{_lambda_.1} parent=1 // pred_fallthru
      _
    // Predicated region
    $region34: #{_lambda_.1} parent=1 // pred_check
      _
    $region35: #{_lambda_.1} parent=1 // pred_check_branch
      %158 = sbr.rel (0) target = $region37
    $region36: #{_lambda_.1} parent=1 // pred_region
      %s160 = ssub.s32 3072, 3072
      %161 = vsyncadd [#allocation12], %s160
      %s162 = sshll.u32 [#allocation13], 4
      %s163 = int_to_ptr.vmem [resolvable:$true] %s162
      %168 = dma.hbm_to_vmem [thread:$0]  %s17, 3072, %s163, [#allocation12], 64, 64, 4
    $region37: #{_lambda_.1} parent=1 // pred_fallthru
      _
    // Predicated region
    $region38: #{_lambda_.1} parent=1 // pred_check
      _
    $region39: #{_lambda_.1} parent=1 // pred_check_branch
      %170 = sbr.rel (0) target = $region41
    $region40: #{_lambda_.1} parent=1 // pred_region
      %s172 = ssub.s32 192, 192
      %173 = vsyncadd [#allocation15], %s172
      %s174 = sshll.u32 [#allocation14], 4
      %s175 = int_to_ptr.vmem [resolvable:$true] %s174
      %180 = dma.hbm_to_vmem [thread:$0]  %s19, 192, %s175, [#allocation15], 64, 64, 4
    $region41: #{_lambda_.1} parent=1 // pred_fallthru
      _
    // Predicated region
    $region42: #{_lambda_.1} parent=1 // pred_check
      _
    $region43: #{_lambda_.1} parent=1 // pred_check_branch
      %182 = sbr.rel (0) target = $region45
    $region44: #{_lambda_.1} parent=1 // pred_region
      %s184 = ssub.s32 128, 128
      %185 = vsyncadd [#allocation15], %s184
      %s187 = sshll.u32 [#allocation16], 4
      %s188 = int_to_ptr.vmem [resolvable:$true] %s187
      %190 = dma.hbm_to_vmem [thread:$0]  %s21, 128, %s188, [#allocation15]
    $region45: #{_lambda_.1} parent=1 // pred_fallthru
      _
    // Predicated region
    $region46: #{_lambda_.1} parent=1 // pred_check
      _
    $region47: #{_lambda_.1} parent=1 // pred_check_branch
      %192 = sbr.rel (0) target = $region49
    $region48: #{_lambda_.1} parent=1 // pred_region
      _
    $region49: #{_lambda_.1} parent=1 // pred_fallthru
      _
    // Predicated region
    $region50: #{_lambda_.1} parent=1 // pred_check
      _
    $region51: #{_lambda_.1} parent=1 // pred_check_branch
      %194 = sbr.rel (0) target = $region53
    $region52: #{_lambda_.1} parent=1 // pred_region
      %s196 = ssub.s32 64, 64
      %197 = vsyncadd [#allocation18], %s196
      %s198 = sshll.u32 [#allocation17], 4
      %s199 = int_to_ptr.vmem [resolvable:$true] %s198
      %204 = dma.hbm_to_vmem [thread:$0]  %s25, 64, %s199, [#allocation18], 16, 16, 1
    $region53: #{_lambda_.1} parent=1 // pred_fallthru
      _
    // Predicated region
    $region54: #{_lambda_.1} parent=1 // pred_check
      _
    $region55: #{_lambda_.1} parent=1 // pred_check_branch
      %206 = sbr.rel (0) target = $region57
    $region56: #{_lambda_.1} parent=1 // pred_region
      %s208 = ssub.s32 32, 32
      %209 = vsyncadd [#allocation18], %s208
      %s211 = sshll.u32 [#allocation19], 4
      %s212 = int_to_ptr.vmem [resolvable:$true] %s211
      %214 = dma.hbm_to_vmem [thread:$0]  %s27, 32, %s212, [#allocation18]
    $region57: #{_lambda_.1} parent=1 // pred_fallthru
      _
    // Predicated region
    $region58: #{_lambda_.1} parent=1 // pred_check
      _
    $region59: #{_lambda_.1} parent=1 // pred_check_branch
      %216 = sbr.rel (0) target = $region61
    $region60: #{_lambda_.1} parent=1 // pred_region
      %s218 = ssub.s32 512, 512
      %219 = vsyncadd [#allocation21], %s218
      %s220 = sshll.u32 [#allocation20], 4
      %s221 = int_to_ptr.vmem [resolvable:$true] %s220
      %226 = dma.hbm_to_vmem [thread:$0]  %s29, 512, %s221, [#allocation21], 64, 64, 4
    $region61: #{_lambda_.1} parent=1 // pred_fallthru
      _
    // Predicated region
    $region62: #{_lambda_.1} parent=1 // pred_check
      _
    $region63: #{_lambda_.1} parent=1 // pred_check_branch
      %228 = sbr.rel (0) target = $region65
    $region64: #{_lambda_.1} parent=1 // pred_region
      %s230 = ssub.s32 256, 256
      %231 = vsyncadd [#allocation21], %s230
      %s232 = sshll.u32 [#allocation22], 4
      %s233 = int_to_ptr.vmem [resolvable:$true] %s232
      %238 = dma.hbm_to_vmem [thread:$0]  %s31, 256, %s233, [#allocation21], 64, 64, 4
    $region65: #{_lambda_.1} parent=1 // pred_fallthru
      _
    // Predicated region
    $region66: #{_lambda_.1} parent=1 // pred_check
      _
    $region67: #{_lambda_.1} parent=1 // pred_check_branch
      %240 = sbr.rel (0) target = $region69
    $region68: #{_lambda_.1} parent=1 // pred_region
      %s242 = ssub.s32 128, 128
      %243 = vsyncadd [#allocation24], %s242
      %s245 = sshll.u32 [#allocation23], 4
      %s246 = int_to_ptr.vmem [resolvable:$true] %s245
      %248 = dma.hbm_to_vmem [thread:$0]  %s33, 128, %s246, [#allocation24]
    $region69: #{_lambda_.1} parent=1 // pred_fallthru
      _
    // Predicated region
    $region70: #{_lambda_.1} parent=1 // pred_check
      _
    $region71: #{_lambda_.1} parent=1 // pred_check_branch
      %250 = sbr.rel (0) target = $region73
    $region72: #{_lambda_.1} parent=1 // pred_region
      %s252 = ssub.s32 3072, 3072
      %253 = vsyncadd [#allocation24], %s252
      %s254 = sshll.u32 [#allocation25], 4
      %s255 = int_to_ptr.vmem [resolvable:$true] %s254
      %260 = dma.hbm_to_vmem [thread:$0]  %s35, 3072, %s255, [#allocation24], 64, 64, 4
    $region73: #{_lambda_.1} parent=1 // pred_fallthru
      _
    // Predicated region
    $region74: #{_lambda_.1} parent=1 // pred_check
      _
    $region75: #{_lambda_.1} parent=1 // pred_check_branch
      %262 = sbr.rel (0) target = $region77
    $region76: #{_lambda_.1} parent=1 // pred_region
      _
    $region77: #{_lambda_.1} parent=1 // pred_fallthru
      _
    // Predicated region
    $region78: #{_lambda_.1} parent=1 // pred_check
      _
    $region79: #{_lambda_.1} parent=1 // pred_check_branch
      %264 = sbr.rel (0) target = $region81
    $region80: #{_lambda_.1} parent=1 // pred_region
      %s266 = ssub.s32 256, 256
      %267 = vsyncadd [#allocation27], %s266
      %s268 = sshll.u32 [#allocation26], 4
      %s269 = int_to_ptr.vmem [resolvable:$true] %s268
      %274 = dma.hbm_to_vmem [thread:$0]  %s39, 256, %s269, [#allocation27], 128, 128, 8
    $region81: #{_lambda_.1} parent=1 // pred_fallthru
      _
    // Predicated region
    $region82: #{_lambda_.1} parent=1 // pred_check
      _
    $region83: #{_lambda_.1} parent=1 // pred_check_branch
      %276 = sbr.rel (0) target = $region85
    $region84: #{_lambda_.1} parent=1 // pred_region
      %s278 = ssub.s32 3072, 3072
      %279 = vsyncadd [#allocation27], %s278
      %s280 = sshll.u32 [#allocation28], 4
      %s281 = int_to_ptr.vmem [resolvable:$true] %s280
      %286 = dma.hbm_to_vmem [thread:$0]  %s41, 3072, %s281, [#allocation27], 64, 64, 4
    $region85: #{_lambda_.1} parent=1 // pred_fallthru
      _
    // Predicated region
    $region86: #{_lambda_.1} parent=1 // pred_check
      _
    $region87: #{_lambda_.1} parent=1 // pred_check_branch
      %288 = sbr.rel (0) target = $region89
    $region88: #{_lambda_.1} parent=1 // pred_region
      %s290 = ssub.s32 768, 768
      %291 = vsyncadd [#allocation30], %s290
      %s292 = sshll.u32 [#allocation29], 4
      %s293 = int_to_ptr.vmem [resolvable:$true] %s292
      %298 = dma.hbm_to_vmem [thread:$0]  %s43, 768, %s293, [#allocation30], 64, 64, 4
    $region89: #{_lambda_.1} parent=1 // pred_fallthru
      _
    // Predicated region
    $region90: #{_lambda_.1} parent=1 // pred_check
      _
    $region91: #{_lambda_.1} parent=1 // pred_check_branch
      %300 = sbr.rel (0) target = $region93
    $region92: #{_lambda_.1} parent=1 // pred_region
      %s302 = ssub.s32 512, 512
      %303 = vsyncadd [#allocation30], %s302
      %s304 = sshll.u32 [#allocation31], 4
      %s305 = int_to_ptr.vmem [resolvable:$true] %s304
      %310 = dma.hbm_to_vmem [thread:$0]  %s45, 512, %s305, [#allocation30], 128, 128, 8
    $region93: #{_lambda_.1} parent=1 // pred_fallthru
      _
    // Predicated region
    $region94: #{_lambda_.1} parent=1 // pred_check
      _
    $region95: #{_lambda_.1} parent=1 // pred_check_branch
      %312 = sbr.rel (0) target = $region97
    $region96: #{_lambda_.1} parent=1 // pred_region
      %s314 = ssub.s32 3072, 3072
      %315 = vsyncadd [#allocation33], %s314
      %s316 = sshll.u32 [#allocation32], 4
      %s317 = int_to_ptr.vmem [resolvable:$true] %s316
      %322 = dma.hbm_to_vmem [thread:$0]  %s47, 3072, %s317, [#allocation33], 64, 64, 4
    $region97: #{_lambda_.1} parent=1 // pred_fallthru
      _
    // Predicated region
    $region98: #{_lambda_.1} parent=1 // pred_check
      _
    $region99: #{_lambda_.1} parent=1 // pred_check_branch
      %324 = sbr.rel (0) target = $region101
    $region100: #{_lambda_.1} parent=1 // pred_region
      _
    $region101: #{_lambda_.1} parent=1 // pred_fallthru
      _
    // Predicated region
    $region102: #{_lambda_.1} parent=1 // pred_check
      _
    $region103: #{_lambda_.1} parent=1 // pred_check_branch
      %326 = sbr.rel (0) target = $region105
    $region104: #{_lambda_.1} parent=1 // pred_region
      %s328 = ssub.s32 512, 512
      %329 = vsyncadd [#allocation33], %s328
      %s330 = sshll.u32 [#allocation34], 4
      %s331 = int_to_ptr.vmem [resolvable:$true] %s330
      %336 = dma.hbm_to_vmem [thread:$0]  %s51, 512, %s331, [#allocation33], 128, 128, 8
    $region105: #{_lambda_.1} parent=1 // pred_fallthru
      _
    // Predicated region
    $region106: #{_lambda_.1} parent=1 // pred_check
      _
    $region107: #{_lambda_.1} parent=1 // pred_check_branch
      %338 = sbr.rel (0) target = $region109
    $region108: #{_lambda_.1} parent=1 // pred_region
      _
    $region109: #{_lambda_.1} parent=1 // pred_fallthru
      _
    // Predicated region
    $region110: #{_lambda_.1} parent=1 // pred_check
      _
    $region111: #{_lambda_.1} parent=1 // pred_check_branch
      %340 = sbr.rel (0) target = $region113
    $region112: #{_lambda_.1} parent=1 // pred_region
      %s342 = ssub.s32 1280, 1280
      %343 = vsyncadd [#allocation36], %s342
      %s344 = sshll.u32 [#allocation35], 4
      %s345 = int_to_ptr.vmem [resolvable:$true] %s344
      %350 = dma.hbm_to_vmem [thread:$0]  %s55, 1280, %s345, [#allocation36], 64, 64, 4
    $region113: #{_lambda_.1} parent=1 // pred_fallthru
      _
    // Predicated region
    $region114: #{_lambda_.1} parent=1 // pred_check
      _
    $region115: #{_lambda_.1} parent=1 // pred_check_branch
      %352 = sbr.rel (0) target = $region117
    $region116: #{_lambda_.1} parent=1 // pred_region
      %s354 = ssub.s32 640, 640
      %355 = vsyncadd [#allocation36], %s354
      %s356 = sshll.u32 [#allocation37], 4
      %s357 = int_to_ptr.vmem [resolvable:$true] %s356
      %362 = dma.hbm_to_vmem [thread:$0]  %s57, 640, %s357, [#allocation36], 128, 128, 8
    $region117: #{_lambda_.1} parent=1 // pred_fallthru
      _
    // Predicated region
    $region118: #{_lambda_.1} parent=1 // pred_check
      _
    $region119: #{_lambda_.1} parent=1 // pred_check_branch
      %364 = sbr.rel (0) target = $region121
    $region120: #{_lambda_.1} parent=1 // pred_region
      %365 = dma.done [#allocation3], 32
    $region121: #{_lambda_.1} parent=1 // pred_fallthru
      _
    // Predicated region
    $region122: #{_lambda_.1} parent=1 // pred_check
      _
    $region123: #{_lambda_.1} parent=1 // pred_check_branch
      %367 = sbr.rel (0) target = $region125
    $region124: #{_lambda_.1} parent=1 // pred_region
      %368 = dma.done [#allocation6], 768
    $region125: #{_lambda_.1} parent=1 // pred_fallthru
      _
    // Predicated region
    $region126: #{_lambda_.1} parent=1 // pred_check
      _
    $region127: #{_lambda_.1} parent=1 // pred_check_branch
      %370 = sbr.rel (0) target = $region129
    $region128: #{_lambda_.1} parent=1 // pred_region
      %371 = dma.done [#allocation6], 512
    $region129: #{_lambda_.1} parent=1 // pred_fallthru
      _
    // Predicated region
    $region130: #{_lambda_.1} parent=1 // pred_check
      _
    $region131: #{_lambda_.1} parent=1 // pred_check_branch
      %373 = sbr.rel (0) target = $region133
    $region132: #{_lambda_.1} parent=1 // pred_region
      %374 = dma.done [#allocation9], 3072
    $region133: #{_lambda_.1} parent=1 // pred_fallthru
      _
    // Predicated region
    $region134: #{_lambda_.1} parent=1 // pred_check
      _
    $region135: #{_lambda_.1} parent=1 // pred_check_branch
      %376 = sbr.rel (0) target = $region137
    $region136: #{_lambda_.1} parent=1 // pred_region
      %377 = dma.done [#allocation9], 384
    $region137: #{_lambda_.1} parent=1 // pred_fallthru
      _
    // Predicated region
    $region138: #{_lambda_.1} parent=1 // pred_check
      _
    $region139: #{_lambda_.1} parent=1 // pred_check_branch
      %379 = sbr.rel (0) target = $region141
    $region140: #{_lambda_.1} parent=1 // pred_region
      %380 = dma.done [#allocation12], 256
    $region141: #{_lambda_.1} parent=1 // pred_fallthru
      _
    // Predicated region
    $region142: #{_lambda_.1} parent=1 // pred_check
      _
    $region143: #{_lambda_.1} parent=1 // pred_check_branch
      %382 = sbr.rel (0) target = $region145
    $region144: #{_lambda_.1} parent=1 // pred_region
      %383 = dma.done [#allocation12], 3072
    $region145: #{_lambda_.1} parent=1 // pred_fallthru
      _
    // Predicated region
    $region146: #{_lambda_.1} parent=1 // pred_check
      _
    $region147: #{_lambda_.1} parent=1 // pred_check_branch
      %385 = sbr.rel (0) target = $region149
    $region148: #{_lambda_.1} parent=1 // pred_region
      %386 = dma.done [#allocation15], 192
    $region149: #{_lambda_.1} parent=1 // pred_fallthru
      _
    // Predicated region
    $region150: #{_lambda_.1} parent=1 // pred_check
      _
    $region151: #{_lambda_.1} parent=1 // pred_check_branch
      %388 = sbr.rel (0) target = $region153
    $region152: #{_lambda_.1} parent=1 // pred_region
      %389 = dma.done [#allocation15], 128
    $region153: #{_lambda_.1} parent=1 // pred_fallthru
      _
    // Predicated region
    $region154: #{_lambda_.1} parent=1 // pred_check
      _
    $region155: #{_lambda_.1} parent=1 // pred_check_branch
      %391 = sbr.rel (0) target = $region157
    $region156: #{_lambda_.1} parent=1 // pred_region
      %392 = dma.done [#allocation18], 64
    $region157: #{_lambda_.1} parent=1 // pred_fallthru
      _
    // Predicated region
    $region158: #{_lambda_.1} parent=1 // pred_check
      _
    $region159: #{_lambda_.1} parent=1 // pred_check_branch
      %394 = sbr.rel (0) target = $region161
    $region160: #{_lambda_.1} parent=1 // pred_region
      %395 = dma.done [#allocation18], 32
    $region161: #{_lambda_.1} parent=1 // pred_fallthru
      _
    // Predicated region
    $region162: #{_lambda_.1} parent=1 // pred_check
      _
    $region163: #{_lambda_.1} parent=1 // pred_check_branch
      %397 = sbr.rel (0) target = $region165
    $region164: #{_lambda_.1} parent=1 // pred_region
      %398 = dma.done [#allocation21], 512
    $region165: #{_lambda_.1} parent=1 // pred_fallthru
      _
    // Predicated region
    $region166: #{_lambda_.1} parent=1 // pred_check
      _
    $region167: #{_lambda_.1} parent=1 // pred_check_branch
      %400 = sbr.rel (0) target = $region169
    $region168: #{_lambda_.1} parent=1 // pred_region
      %401 = dma.done [#allocation21], 256
    $region169: #{_lambda_.1} parent=1 // pred_fallthru
      _
    // Predicated region
    $region170: #{_lambda_.1} parent=1 // pred_check
      _
    $region171: #{_lambda_.1} parent=1 // pred_check_branch
      %403 = sbr.rel (0) target = $region173
    $region172: #{_lambda_.1} parent=1 // pred_region
      %404 = dma.done [#allocation24], 128
    $region173: #{_lambda_.1} parent=1 // pred_fallthru
      _
    // Predicated region
    $region174: #{_lambda_.1} parent=1 // pred_check
      _
    $region175: #{_lambda_.1} parent=1 // pred_check_branch
      %406 = sbr.rel (0) target = $region177
    $region176: #{_lambda_.1} parent=1 // pred_region
      %407 = dma.done [#allocation24], 3072
    $region177: #{_lambda_.1} parent=1 // pred_fallthru
      _
    // Predicated region
    $region178: #{_lambda_.1} parent=1 // pred_check
      _
    $region179: #{_lambda_.1} parent=1 // pred_check_branch
      %409 = sbr.rel (0) target = $region181
    $region180: #{_lambda_.1} parent=1 // pred_region
      %410 = dma.done [#allocation27], 256
    $region181: #{_lambda_.1} parent=1 // pred_fallthru
      _
    // Predicated region
    $region182: #{_lambda_.1} parent=1 // pred_check
      _
    $region183: #{_lambda_.1} parent=1 // pred_check_branch
      %412 = sbr.rel (0) target = $region185
    $region184: #{_lambda_.1} parent=1 // pred_region
      %413 = dma.done [#allocation27], 3072
    $region185: #{_lambda_.1} parent=1 // pred_fallthru
      _
    // Predicated region
    $region186: #{_lambda_.1} parent=1 // pred_check
      _
    $region187: #{_lambda_.1} parent=1 // pred_check_branch
      %415 = sbr.rel (0) target = $region189
    $region188: #{_lambda_.1} parent=1 // pred_region
      %416 = dma.done [#allocation30], 768
    $region189: #{_lambda_.1} parent=1 // pred_fallthru
      _
    // Predicated region
    $region190: #{_lambda_.1} parent=1 // pred_check
      _
    $region191: #{_lambda_.1} parent=1 // pred_check_branch
      %418 = sbr.rel (0) target = $region193
    $region192: #{_lambda_.1} parent=1 // pred_region
      %419 = dma.done [#allocation30], 512
    $region193: #{_lambda_.1} parent=1 // pred_fallthru
      _
    // Predicated region
    $region194: #{_lambda_.1} parent=1 // pred_check
      _
    $region195: #{_lambda_.1} parent=1 // pred_check_branch
      %421 = sbr.rel (0) target = $region197
    $region196: #{_lambda_.1} parent=1 // pred_region
      %422 = dma.done [#allocation33], 3072
    $region197: #{_lambda_.1} parent=1 // pred_fallthru
      _
    // Predicated region
    $region198: #{_lambda_.1} parent=1 // pred_check
      _
    $region199: #{_lambda_.1} parent=1 // pred_check_branch
      %424 = sbr.rel (0) target = $region201
    $region200: #{_lambda_.1} parent=1 // pred_region
      %425 = dma.done [#allocation33], 512
    $region201: #{_lambda_.1} parent=1 // pred_fallthru
      _
    // Predicated region
    $region202: #{_lambda_.1} parent=1 // pred_check
      _
    $region203: #{_lambda_.1} parent=1 // pred_check_branch
      %427 = sbr.rel (0) target = $region205
    $region204: #{_lambda_.1} parent=1 // pred_region
      %428 = dma.done [#allocation36], 1280
    $region205: #{_lambda_.1} parent=1 // pred_fallthru
      _
    // Predicated region
    $region206: #{_lambda_.1} parent=1 // pred_check
      _
    $region207: #{_lambda_.1} parent=1 // pred_check_branch
      %430 = sbr.rel (0) target = $region209
    $region208: #{_lambda_.1} parent=1 // pred_region
      %431 = dma.done [#allocation36], 640
    $region209: #{_lambda_.1} parent=1 // pred_fallthru
      _
    %v433 = vld [vmem:[%s1] sm:$0xff]
    %v434 = vld [vmem:[%s1 + $0x8] sm:$0xff]
    %v435 = vld [vmem:[%s1 + $0x10] sm:$0xff]
    %v436 = vld [vmem:[%s1 + $0x18] sm:$0xff]
    %v437 = vpack.c.bf16 %v434, %v433
    %v438 = vpack.c.bf16 %v436, %v435
    %v439 = vld [vmem:[#allocation7] sm:$0xff]
    %v440 = vld [vmem:[#allocation7 + $0x8] sm:$0xff]
    %v441 = vld [vmem:[#allocation7 + $0x10] sm:$0xff]
    %v442 = vld [vmem:[#allocation7 + $0x18] sm:$0xff]
    %v443 = vld [vmem:[#allocation5] sm:$0xf]
    %v444 = vld [vmem:[#allocation5 + $0x4] sm:$0xf]
    %v445 = vld [vmem:[#allocation5 + $0x8] sm:$0xf]
    %v446 = vld [vmem:[#allocation5 + $0xc] sm:$0xf]
    %v451 = vunpack.c.l.b16 %v443
    %v452 = vunpack.c.l.b16 %v444
    %v453 = vunpack.c.l.b16 %v445
    %v454 = vunpack.c.l.b16 %v446
    %v455 = vpack.c.b16 %v452, %v451
    %v456 = vpack.c.b16 %v454, %v453
    %vm457 = vcmask 261120
    %v459 = vsel %vm457, %v455, 0
    %v462 = vsel %vm457, %v456, 0
    %464 = vmatprep.subr.bf16.mxu0 0
    %465 = vmatpush1.bf16.msra.mxu0 %v437
    %466 = vmatprep.subr.bf16.mxu0 0
    %467 = vmatpush1.bf16.msra.mxu0 %v438
    %468 = vmatprep.subr.bf16.mxu0 0
    %469 = vmatpush1.bf16.msra.mxu0 0
    %470 = vmatprep.subr.bf16.mxu0 0
    %471 = vmatpush1.bf16.msra.mxu0 0
    %472 = vmatprep.subr.bf16.mxu0 0
    %473 = vmatpush1.bf16.msra.mxu0 0
    %474 = vmatprep.subr.bf16.mxu0 0
    %475 = vmatpush1.bf16.msra.mxu0 0
    %476 = vmatprep.subr.bf16.mxu0 0
    %477 = vmatpush1.bf16.msra.mxu0 0
    %478 = vmatprep.subr.bf16.mxu0 0
    %479 = vmatpush1.bf16.msra.mxu0 0
    %480 = vmatprep.subr.bf16.mxu0 0
    %481 = vmatpush1.bf16.msra.mxu0 0
    %482 = vmatprep.subr.bf16.mxu0 0
    %483 = vmatpush1.bf16.msra.mxu0 0
    %484 = vmatprep.subr.bf16.mxu0 0
    %485 = vmatpush1.bf16.msra.mxu0 0
    %486 = vmatprep.subr.bf16.mxu0 0
    %487 = vmatpush1.bf16.msra.mxu0 0
    %488 = vmatprep.subr.bf16.mxu0 0
    %489 = vmatpush1.bf16.msra.mxu0 0
    %490 = vmatprep.subr.bf16.mxu0 0
    %491 = vmatpush1.bf16.msra.mxu0 0
    %492 = vmatprep.subr.bf16.mxu0 0
    %493 = vmatpush1.bf16.msra.mxu0 0
    %494 = vmatprep.subr.bf16.mxu0 0
    %495 = vmatpush1.bf16.msra.mxu0 0
    %496 = vmatprep.mubr.bf16.mxu0 0
    %497 = vmatmul.mubr.bf16.gmra.mrb[0].mxu0 %v459
    %v498 = vpop.f32.mrb[0].mxu0
    %v499 = vadd.f32 0.0, %v498
    %v500 = vpop.f32.mrb[0].mxu0
    %v501 = vpop.f32.mrb[0].mxu0
    %v502 = vadd.f32 0.0, %v501
    %v503 = vpop.f32.mrb[0].mxu0
    %504 = vmatprep.mubr.bf16.mxu0 0
    %505 = vmatmul.mubr.bf16.gmra.mrb[0].mxu0 %v462
    %v506 = vpop.f32.mrb[0].mxu0
    %v507 = vadd.f32 0.0, %v506
    %v508 = vpop.f32.mrb[0].mxu0
    %v509 = vpop.f32.mrb[0].mxu0
    %v510 = vadd.f32 0.0, %v509
    %v511 = vpop.f32.mrb[0].mxu0
    %512 = vdwg.mxu0
    %v513 = vpack.c.bf16 %v502, %v499
    %v514 = vpack.c.bf16 %v510, %v507
    %v515 = vld [vmem:[%s5] sm:$0xf]
    %v516 = vld [vmem:[%s5 + $0x4] sm:$0xf]
    %v517 = vld [vmem:[%s5 + $0x8] sm:$0xf]
    %v518 = vld [vmem:[%s5 + $0xc] sm:$0xf]
    %v519 = vld [vmem:[%s5 + $0x10] sm:$0xf]
    %v520 = vld [vmem:[%s5 + $0x14] sm:$0xf]
    %v521 = vld [vmem:[%s5 + $0x18] sm:$0xf]
    %v522 = vld [vmem:[%s5 + $0x1c] sm:$0xf]
    %v531 = vunpack.c.l.b16 %v515
    %v532 = vunpack.c.l.b16 %v516
    %v533 = vunpack.c.l.b16 %v517
    %v534 = vunpack.c.l.b16 %v518
    %v535 = vunpack.c.l.b16 %v519
    %v536 = vunpack.c.l.b16 %v520
    %v537 = vunpack.c.l.b16 %v521
    %v538 = vunpack.c.l.b16 %v522
    %v539 = vpack.c.b16 %v532, %v531
    %v540 = vpack.c.b16 %v534, %v533
    %v541 = vpack.c.b16 %v536, %v535
    %v542 = vpack.c.b16 %v538, %v537
    %vm547 = vcmask 523264
    %v549 = vsel %vm547, %v513, 0
    %v552 = vsel %vm547, %v514, 0
    %554 = vmatprep.subr.bf16.mxu0 0
    %555 = vmatpush1.bf16.msra.mxu0 %v539
    %556 = vmatprep.subr.bf16.mxu0 0
    %557 = vmatpush1.bf16.msra.mxu0 %v540
    %558 = vmatprep.subr.bf16.mxu0 0
    %559 = vmatpush1.bf16.msra.mxu0 %v541
    %560 = vmatprep.subr.bf16.mxu0 0
    %561 = vmatpush1.bf16.msra.mxu0 %v542
    %562 = vmatprep.subr.bf16.mxu0 0
    %563 = vmatpush1.bf16.msra.mxu0 0
    %564 = vmatprep.subr.bf16.mxu0 0
    %565 = vmatpush1.bf16.msra.mxu0 0
    %566 = vmatprep.subr.bf16.mxu0 0
    %567 = vmatpush1.bf16.msra.mxu0 0
    %568 = vmatprep.subr.bf16.mxu0 0
    %569 = vmatpush1.bf16.msra.mxu0 0
    %570 = vmatprep.subr.bf16.mxu0 0
    %571 = vmatpush1.bf16.msra.mxu0 0
    %572 = vmatprep.subr.bf16.mxu0 0
    %573 = vmatpush1.bf16.msra.mxu0 0
    %574 = vmatprep.subr.bf16.mxu0 0
    %575 = vmatpush1.bf16.msra.mxu0 0
    %576 = vmatprep.subr.bf16.mxu0 0
    %577 = vmatpush1.bf16.msra.mxu0 0
    %578 = vmatprep.subr.bf16.mxu0 0
    %579 = vmatpush1.bf16.msra.mxu0 0
    %580 = vmatprep.subr.bf16.mxu0 0
    %581 = vmatpush1.bf16.msra.mxu0 0
    %582 = vmatprep.subr.bf16.mxu0 0
    %583 = vmatpush1.bf16.msra.mxu0 0
    %584 = vmatprep.subr.bf16.mxu0 0
    %585 = vmatpush1.bf16.msra.mxu0 0
    %586 = vmatprep.mubr.bf16.mxu0 0
    %587 = vmatmul.mubr.bf16.gmra.mrb[0].mxu0 %v549
    %v588 = vpop.f32.mrb[0].mxu0
    %v589 = vadd.f32 0.0, %v588
    %v590 = vpop.f32.mrb[0].mxu0
    %v591 = vpop.f32.mrb[0].mxu0
    %v592 = vadd.f32 0.0, %v591
    %v593 = vpop.f32.mrb[0].mxu0
    %594 = vmatprep.mubr.bf16.mxu0 0
    %595 = vmatmul.mubr.bf16.gmra.mrb[0].mxu0 %v552
    %v596 = vpop.f32.mrb[0].mxu0
    %v597 = vadd.f32 0.0, %v596
    %v598 = vpop.f32.mrb[0].mxu0
    %v599 = vpop.f32.mrb[0].mxu0
    %v600 = vadd.f32 0.0, %v599
    %v601 = vpop.f32.mrb[0].mxu0
    %602 = vdwg.mxu0
    %v603 = vadd.f32 %v439, %v589
    %v604 = vadd.f32 %v440, %v592
    %v605 = vadd.f32 %v441, %v597
    %v606 = vadd.f32 %v442, %v600
    %s607 = scalar_lea.vmem [#allocation5], 16
    %v608 = vld [vmem:[%s607] sm:$0xf]
    %v609 = vld [vmem:[%s607 + $0x4] sm:$0xf]
    %v610 = vld [vmem:[%s607 + $0x8] sm:$0xf]
    %v611 = vld [vmem:[%s607 + $0xc] sm:$0xf]
    %v616 = vunpack.c.l.b16 %v608
    %v617 = vunpack.c.l.b16 %v609
    %v618 = vunpack.c.l.b16 %v610
    %v619 = vunpack.c.l.b16 %v611
    %v620 = vpack.c.b16 %v617, %v616
    %v621 = vpack.c.b16 %v619, %v618
    %v623 = vsel %vm457, %v620, 0
    %v626 = vsel %vm457, %v621, 0
    %628 = vmatprep.subr.bf16.mxu0 0
    %629 = vmatpush1.bf16.msra.mxu0 %v437
    %630 = vmatprep.subr.bf16.mxu0 0
    %631 = vmatpush1.bf16.msra.mxu0 %v438
    %632 = vmatprep.subr.bf16.mxu0 0
    %633 = vmatpush1.bf16.msra.mxu0 0
    %634 = vmatprep.subr.bf16.mxu0 0
    %635 = vmatpush1.bf16.msra.mxu0 0
    %636 = vmatprep.subr.bf16.mxu0 0
    %637 = vmatpush1.bf16.msra.mxu0 0
    %638 = vmatprep.subr.bf16.mxu0 0
    %639 = vmatpush1.bf16.msra.mxu0 0
    %640 = vmatprep.subr.bf16.mxu0 0
    %641 = vmatpush1.bf16.msra.mxu0 0
    %642 = vmatprep.subr.bf16.mxu0 0
    %643 = vmatpush1.bf16.msra.mxu0 0
    %644 = vmatprep.subr.bf16.mxu0 0
    %645 = vmatpush1.bf16.msra.mxu0 0
    %646 = vmatprep.subr.bf16.mxu0 0
    %647 = vmatpush1.bf16.msra.mxu0 0
    %648 = vmatprep.subr.bf16.mxu0 0
    %649 = vmatpush1.bf16.msra.mxu0 0
    %650 = vmatprep.subr.bf16.mxu0 0
    %651 = vmatpush1.bf16.msra.mxu0 0
    %652 = vmatprep.subr.bf16.mxu0 0
    %653 = vmatpush1.bf16.msra.mxu0 0
    %654 = vmatprep.subr.bf16.mxu0 0
    %655 = vmatpush1.bf16.msra.mxu0 0
    %656 = vmatprep.subr.bf16.mxu0 0
    %657 = vmatpush1.bf16.msra.mxu0 0
    %658 = vmatprep.subr.bf16.mxu0 0
    %659 = vmatpush1.bf16.msra.mxu0 0
    %660 = vmatprep.mubr.bf16.mxu0 0
    %661 = vmatmul.mubr.bf16.gmra.mrb[0].mxu0 %v623
    %v662 = vpop.f32.mrb[0].mxu0
    %v663 = vadd.f32 0.0, %v662
    %v664 = vpop.f32.mrb[0].mxu0
    %v665 = vpop.f32.mrb[0].mxu0
    %v666 = vadd.f32 0.0, %v665
    %v667 = vpop.f32.mrb[0].mxu0
    %668 = vmatprep.mubr.bf16.mxu0 0
    %669 = vmatmul.mubr.bf16.gmra.mrb[0].mxu0 %v626
    %v670 = vpop.f32.mrb[0].mxu0
    %v671 = vadd.f32 0.0, %v670
    %v672 = vpop.f32.mrb[0].mxu0
    %v673 = vpop.f32.mrb[0].mxu0
    %v674 = vadd.f32 0.0, %v673
    %v675 = vpop.f32.mrb[0].mxu0
    %676 = vdwg.mxu0
    %v677 = vpack.c.bf16 %v666, %v663
    %v678 = vpack.c.bf16 %v674, %v671
    %s679 = scalar_lea.vmem %s5, 32
    %v680 = vld [vmem:[%s679] sm:$0xf]
    %v681 = vld [vmem:[%s679 + $0x4] sm:$0xf]
    %v682 = vld [vmem:[%s679 + $0x8] sm:$0xf]
    %v683 = vld [vmem:[%s679 + $0xc] sm:$0xf]
    %v684 = vld [vmem:[%s679 + $0x10] sm:$0xf]
    %v685 = vld [vmem:[%s679 + $0x14] sm:$0xf]
    %v686 = vld [vmem:[%s679 + $0x18] sm:$0xf]
    %v687 = vld [vmem:[%s679 + $0x1c] sm:$0xf]
    %v696 = vunpack.c.l.b16 %v680
    %v697 = vunpack.c.l.b16 %v681
    %v698 = vunpack.c.l.b16 %v682
    %v699 = vunpack.c.l.b16 %v683
    %v700 = vunpack.c.l.b16 %v684
    %v701 = vunpack.c.l.b16 %v685
    %v702 = vunpack.c.l.b16 %v686
    %v703 = vunpack.c.l.b16 %v687
    %v704 = vpack.c.b16 %v697, %v696
    %v705 = vpack.c.b16 %v699, %v698
    %v706 = vpack.c.b16 %v701, %v700
    %v707 = vpack.c.b16 %v703, %v702
    %v713 = vsel %vm547, %v677, 0
    %v716 = vsel %vm547, %v678, 0
    %718 = vmatprep.subr.bf16.mxu0 0
    %719 = vmatpush1.bf16.msra.mxu0 %v704
    %720 = vmatprep.subr.bf16.mxu0 0
    %721 = vmatpush1.bf16.msra.mxu0 %v705
    %722 = vmatprep.subr.bf16.mxu0 0
    %723 = vmatpush1.bf16.msra.mxu0 %v706
    %724 = vmatprep.subr.bf16.mxu0 0
    %725 = vmatpush1.bf16.msra.mxu0 %v707
    %726 = vmatprep.subr.bf16.mxu0 0
    %727 = vmatpush1.bf16.msra.mxu0 0
    %728 = vmatprep.subr.bf16.mxu0 0
    %729 = vmatpush1.bf16.msra.mxu0 0
    %730 = vmatprep.subr.bf16.mxu0 0
    %731 = vmatpush1.bf16.msra.mxu0 0
    %732 = vmatprep.subr.bf16.mxu0 0
    %733 = vmatpush1.bf16.msra.mxu0 0
    %734 = vmatprep.subr.bf16.mxu0 0
    %735 = vmatpush1.bf16.msra.mxu0 0
    %736 = vmatprep.subr.bf16.mxu0 0
    %737 = vmatpush1.bf16.msra.mxu0 0
    %738 = vmatprep.subr.bf16.mxu0 0
    %739 = vmatpush1.bf16.msra.mxu0 0
    %740 = vmatprep.subr.bf16.mxu0 0
    %741 = vmatpush1.bf16.msra.mxu0 0
    %742 = vmatprep.subr.bf16.mxu0 0
    %743 = vmatpush1.bf16.msra.mxu0 0
    %744 = vmatprep.subr.bf16.mxu0 0
    %745 = vmatpush1.bf16.msra.mxu0 0
    %746 = vmatprep.subr.bf16.mxu0 0
    %747 = vmatpush1.bf16.msra.mxu0 0
    %748 = vmatprep.subr.bf16.mxu0 0
    %749 = vmatpush1.bf16.msra.mxu0 0
    %750 = vmatprep.mubr.bf16.mxu0 0
    %751 = vmatmul.mubr.bf16.gmra.mrb[0].mxu0 %v713
    %v752 = vpop.f32.mrb[0].mxu0
    %v753 = vadd.f32 0.0, %v752
    %v754 = vpop.f32.mrb[0].mxu0
    %v755 = vpop.f32.mrb[0].mxu0
    %v756 = vadd.f32 0.0, %v755
    %v757 = vpop.f32.mrb[0].mxu0
    %758 = vmatprep.mubr.bf16.mxu0 0
    %759 = vmatmul.mubr.bf16.gmra.mrb[0].mxu0 %v716
    %v760 = vpop.f32.mrb[0].mxu0
    %v761 = vadd.f32 0.0, %v760
    %v762 = vpop.f32.mrb[0].mxu0
    %v763 = vpop.f32.mrb[0].mxu0
    %v764 = vadd.f32 0.0, %v763
    %v765 = vpop.f32.mrb[0].mxu0
    %766 = vdwg.mxu0
    %v767 = vadd.f32 %v603, %v753
    %v768 = vadd.f32 %v604, %v756
    %v769 = vadd.f32 %v605, %v761
    %v770 = vadd.f32 %v606, %v764
    %s771 = scalar_lea.vmem [#allocation5], 32
    %v772 = vld [vmem:[%s771] sm:$0xf]
    %v773 = vld [vmem:[%s771 + $0x4] sm:$0xf]
    %v774 = vld [vmem:[%s771 + $0x8] sm:$0xf]
    %v775 = vld [vmem:[%s771 + $0xc] sm:$0xf]
    %v780 = vunpack.c.l.b16 %v772
    %v781 = vunpack.c.l.b16 %v773
    %v782 = vunpack.c.l.b16 %v774
    %v783 = vunpack.c.l.b16 %v775
    %v784 = vpack.c.b16 %v781, %v780
    %v785 = vpack.c.b16 %v783, %v782
    %v787 = vsel %vm457, %v784, 0
    %v790 = vsel %vm457, %v785, 0
    %792 = vmatprep.subr.bf16.mxu0 0
    %793 = vmatpush1.bf16.msra.mxu0 %v437
    %794 = vmatprep.subr.bf16.mxu0 0
    %795 = vmatpush1.bf16.msra.mxu0 %v438
    %796 = vmatprep.subr.bf16.mxu0 0
    %797 = vmatpush1.bf16.msra.mxu0 0
    %798 = vmatprep.subr.bf16.mxu0 0
    %799 = vmatpush1.bf16.msra.mxu0 0
    %800 = vmatprep.subr.bf16.mxu0 0
    %801 = vmatpush1.bf16.msra.mxu0 0
    %802 = vmatprep.subr.bf16.mxu0 0
    %803 = vmatpush1.bf16.msra.mxu0 0
    %804 = vmatprep.subr.bf16.mxu0 0
    %805 = vmatpush1.bf16.msra.mxu0 0
    %806 = vmatprep.subr.bf16.mxu0 0
    %807 = vmatpush1.bf16.msra.mxu0 0
    %808 = vmatprep.subr.bf16.mxu0 0
    %809 = vmatpush1.bf16.msra.mxu0 0
    %810 = vmatprep.subr.bf16.mxu0 0
    %811 = vmatpush1.bf16.msra.mxu0 0
    %812 = vmatprep.subr.bf16.mxu0 0
    %813 = vmatpush1.bf16.msra.mxu0 0
    %814 = vmatprep.subr.bf16.mxu0 0
    %815 = vmatpush1.bf16.msra.mxu0 0
    %816 = vmatprep.subr.bf16.mxu0 0
    %817 = vmatpush1.bf16.msra.mxu0 0
    %818 = vmatprep.subr.bf16.mxu0 0
    %819 = vmatpush1.bf16.msra.mxu0 0
    %820 = vmatprep.subr.bf16.mxu0 0
    %821 = vmatpush1.bf16.msra.mxu0 0
    %822 = vmatprep.subr.bf16.mxu0 0
    %823 = vmatpush1.bf16.msra.mxu0 0
    %824 = vmatprep.mubr.bf16.mxu0 0
    %825 = vmatmul.mubr.bf16.gmra.mrb[0].mxu0 %v787
    %v826 = vpop.f32.mrb[0].mxu0
    %v827 = vadd.f32 0.0, %v826
    %v828 = vpop.f32.mrb[0].mxu0
    %v829 = vpop.f32.mrb[0].mxu0
    %v830 = vadd.f32 0.0, %v829
    %v831 = vpop.f32.mrb[0].mxu0
    %832 = vmatprep.mubr.bf16.mxu0 0
    %833 = vmatmul.mubr.bf16.gmra.mrb[0].mxu0 %v790
    %v834 = vpop.f32.mrb[0].mxu0
    %v835 = vadd.f32 0.0, %v834
    %v836 = vpop.f32.mrb[0].mxu0
    %v837 = vpop.f32.mrb[0].mxu0
    %v838 = vadd.f32 0.0, %v837
    %v839 = vpop.f32.mrb[0].mxu0
    %840 = vdwg.mxu0
    %v841 = vpack.c.bf16 %v830, %v827
    %v842 = vpack.c.bf16 %v838, %v835
    %s843 = scalar_lea.vmem %s5, 64
    %v844 = vld [vmem:[%s843] sm:$0xf]
    %v845 = vld [vmem:[%s843 + $0x4] sm:$0xf]
    %v846 = vld [vmem:[%s843 + $0x8] sm:$0xf]
    %v847 = vld [vmem:[%s843 + $0xc] sm:$0xf]
    %v848 = vld [vmem:[%s843 + $0x10] sm:$0xf]
    %v849 = vld [vmem:[%s843 + $0x14] sm:$0xf]
    %v850 = vld [vmem:[%s843 + $0x18] sm:$0xf]
    %v851 = vld [vmem:[%s843 + $0x1c] sm:$0xf]
    %v860 = vunpack.c.l.b16 %v844
    %v861 = vunpack.c.l.b16 %v845
    %v862 = vunpack.c.l.b16 %v846
    %v863 = vunpack.c.l.b16 %v847
    %v864 = vunpack.c.l.b16 %v848
    %v865 = vunpack.c.l.b16 %v849
    %v866 = vunpack.c.l.b16 %v850
    %v867 = vunpack.c.l.b16 %v851
    %v868 = vpack.c.b16 %v861, %v860
    %v869 = vpack.c.b16 %v863, %v862
    %v870 = vpack.c.b16 %v865, %v864
    %v871 = vpack.c.b16 %v867, %v866
    %v877 = vsel %vm547, %v841, 0
    %v880 = vsel %vm547, %v842, 0
    %882 = vmatprep.subr.bf16.mxu0 0
    %883 = vmatpush1.bf16.msra.mxu0 %v868
    %884 = vmatprep.subr.bf16.mxu0 0
    %885 = vmatpush1.bf16.msra.mxu0 %v869
    %886 = vmatprep.subr.bf16.mxu0 0
    %887 = vmatpush1.bf16.msra.mxu0 %v870
    %888 = vmatprep.subr.bf16.mxu0 0
    %889 = vmatpush1.bf16.msra.mxu0 %v871
    %890 = vmatprep.subr.bf16.mxu0 0
    %891 = vmatpush1.bf16.msra.mxu0 0
    %892 = vmatprep.subr.bf16.mxu0 0
    %893 = vmatpush1.bf16.msra.mxu0 0
    %894 = vmatprep.subr.bf16.mxu0 0
    %895 = vmatpush1.bf16.msra.mxu0 0
    %896 = vmatprep.subr.bf16.mxu0 0
    %897 = vmatpush1.bf16.msra.mxu0 0
    %898 = vmatprep.subr.bf16.mxu0 0
    %899 = vmatpush1.bf16.msra.mxu0 0
    %900 = vmatprep.subr.bf16.mxu0 0
    %901 = vmatpush1.bf16.msra.mxu0 0
    %902 = vmatprep.subr.bf16.mxu0 0
    %903 = vmatpush1.bf16.msra.mxu0 0
    %904 = vmatprep.subr.bf16.mxu0 0
    %905 = vmatpush1.bf16.msra.mxu0 0
    %906 = vmatprep.subr.bf16.mxu0 0
    %907 = vmatpush1.bf16.msra.mxu0 0
    %908 = vmatprep.subr.bf16.mxu0 0
    %909 = vmatpush1.bf16.msra.mxu0 0
    %910 = vmatprep.subr.bf16.mxu0 0
    %911 = vmatpush1.bf16.msra.mxu0 0
    %912 = vmatprep.subr.bf16.mxu0 0
    %913 = vmatpush1.bf16.msra.mxu0 0
    %914 = vmatprep.mubr.bf16.mxu0 0
    %915 = vmatmul.mubr.bf16.gmra.mrb[0].mxu0 %v877
    %v916 = vpop.f32.mrb[0].mxu0
    %v917 = vadd.f32 0.0, %v916
    %v918 = vpop.f32.mrb[0].mxu0
    %v919 = vpop.f32.mrb[0].mxu0
    %v920 = vadd.f32 0.0, %v919
    %v921 = vpop.f32.mrb[0].mxu0
    %922 = vmatprep.mubr.bf16.mxu0 0
    %923 = vmatmul.mubr.bf16.gmra.mrb[0].mxu0 %v880
    %v924 = vpop.f32.mrb[0].mxu0
    %v925 = vadd.f32 0.0, %v924
    %v926 = vpop.f32.mrb[0].mxu0
    %v927 = vpop.f32.mrb[0].mxu0
    %v928 = vadd.f32 0.0, %v927
    %v929 = vpop.f32.mrb[0].mxu0
    %930 = vdwg.mxu0
    %v931 = vadd.f32 %v767, %v917
    %v932 = vadd.f32 %v768, %v920
    %v933 = vadd.f32 %v769, %v925
    %v934 = vadd.f32 %v770, %v928
    %v935 = vmax.f32 %v931, 0.0
    %v936 = vmax.f32 %v932, 0.0
    %v937 = vmax.f32 %v933, 0.0
    %v938 = vmax.f32 %v934, 0.0
    %v939 = vpack.c.bf16 %v936, %v935
    %v940 = vpack.c.bf16 %v938, %v937
    %v941 = vld [vmem:[#allocation11] sm:$0xff]
    %v942 = vld [vmem:[#allocation11 + $0x8] sm:$0xff]
    %v943 = vld [vmem:[#allocation10] sm:$0xf]
    %v944 = vld [vmem:[#allocation10 + $0x4] sm:$0xf]
    %v947 = vunpack.c.l.b16 %v943
    %v948 = vunpack.c.l.b16 %v944
    %v949 = vpack.c.b16 %v948, %v947
    %v951 = vsel %vm457, %v949, 0
    %953 = vmatprep.subr.bf16.mxu0 0
    %954 = vmatpush1.bf16.msra.mxu0 %v939
    %955 = vmatprep.subr.bf16.mxu0 0
    %956 = vmatpush1.bf16.msra.mxu0 %v940
    %957 = vmatprep.subr.bf16.mxu0 0
    %958 = vmatpush1.bf16.msra.mxu0 0
    %959 = vmatprep.subr.bf16.mxu0 0
    %960 = vmatpush1.bf16.msra.mxu0 0
    %961 = vmatprep.subr.bf16.mxu0 0
    %962 = vmatpush1.bf16.msra.mxu0 0
    %963 = vmatprep.subr.bf16.mxu0 0
    %964 = vmatpush1.bf16.msra.mxu0 0
    %965 = vmatprep.subr.bf16.mxu0 0
    %966 = vmatpush1.bf16.msra.mxu0 0
    %967 = vmatprep.subr.bf16.mxu0 0
    %968 = vmatpush1.bf16.msra.mxu0 0
    %969 = vmatprep.subr.bf16.mxu0 0
    %970 = vmatpush1.bf16.msra.mxu0 0
    %971 = vmatprep.subr.bf16.mxu0 0
    %972 = vmatpush1.bf16.msra.mxu0 0
    %973 = vmatprep.subr.bf16.mxu0 0
    %974 = vmatpush1.bf16.msra.mxu0 0
    %975 = vmatprep.subr.bf16.mxu0 0
    %976 = vmatpush1.bf16.msra.mxu0 0
    %977 = vmatprep.subr.bf16.mxu0 0
    %978 = vmatpush1.bf16.msra.mxu0 0
    %979 = vmatprep.subr.bf16.mxu0 0
    %980 = vmatpush1.bf16.msra.mxu0 0
    %981 = vmatprep.subr.bf16.mxu0 0
    %982 = vmatpush1.bf16.msra.mxu0 0
    %983 = vmatprep.subr.bf16.mxu0 0
    %984 = vmatpush1.bf16.msra.mxu0 0
    %985 = vmatprep.mubr.bf16.mxu0 0
    %986 = vmatmul.mubr.bf16.gmra.mrb[0].mxu0 %v951
    %v987 = vpop.f32.mrb[0].mxu0
    %v988 = vadd.f32 0.0, %v987
    %v989 = vpop.f32.mrb[0].mxu0
    %v990 = vpop.f32.mrb[0].mxu0
    %v991 = vadd.f32 0.0, %v990
    %v992 = vpop.f32.mrb[0].mxu0
    %993 = vdwg.mxu0
    %v994 = vpack.c.bf16 %v991, %v988
    %v995 = vld [vmem:[#allocation8] sm:$0xf]
    %v996 = vld [vmem:[#allocation8 + $0x4] sm:$0xf]
    %v997 = vld [vmem:[#allocation8 + $0x8] sm:$0xf]
    %v998 = vld [vmem:[#allocation8 + $0xc] sm:$0xf]
    %v999 = vld [vmem:[#allocation8 + $0x10] sm:$0xf]
    %v1000 = vld [vmem:[#allocation8 + $0x14] sm:$0xf]
    %v1001 = vld [vmem:[#allocation8 + $0x18] sm:$0xf]
    %v1002 = vld [vmem:[#allocation8 + $0x1c] sm:$0xf]
    %v1003 = vld [vmem:[#allocation8 + $0x20] sm:$0xf]
    %v1004 = vld [vmem:[#allocation8 + $0x24] sm:$0xf]
    %v1005 = vld [vmem:[#allocation8 + $0x28] sm:$0xf]
    %v1006 = vld [vmem:[#allocation8 + $0x2c] sm:$0xf]
    %v1007 = vld [vmem:[#allocation8 + $0x30] sm:$0xf]
    %v1008 = vld [vmem:[#allocation8 + $0x34] sm:$0xf]
    %v1009 = vld [vmem:[#allocation8 + $0x38] sm:$0xf]
    %v1010 = vld [vmem:[#allocation8 + $0x3c] sm:$0xf]
    %v1027 = vunpack.c.l.b16 %v995
    %v1028 = vunpack.c.l.b16 %v996
    %v1029 = vunpack.c.l.b16 %v997
    %v1030 = vunpack.c.l.b16 %v998
    %v1031 = vunpack.c.l.b16 %v999
    %v1032 = vunpack.c.l.b16 %v1000
    %v1033 = vunpack.c.l.b16 %v1001
    %v1034 = vunpack.c.l.b16 %v1002
    %v1035 = vunpack.c.l.b16 %v1003
    %v1036 = vunpack.c.l.b16 %v1004
    %v1037 = vunpack.c.l.b16 %v1005
    %v1038 = vunpack.c.l.b16 %v1006
    %v1039 = vunpack.c.l.b16 %v1007
    %v1040 = vunpack.c.l.b16 %v1008
    %v1041 = vunpack.c.l.b16 %v1009
    %v1042 = vunpack.c.l.b16 %v1010
    %v1043 = vpack.c.b16 %v1028, %v1027
    %v1044 = vpack.c.b16 %v1030, %v1029
    %v1045 = vpack.c.b16 %v1032, %v1031
    %v1046 = vpack.c.b16 %v1034, %v1033
    %v1047 = vpack.c.b16 %v1036, %v1035
    %v1048 = vpack.c.b16 %v1038, %v1037
    %v1049 = vpack.c.b16 %v1040, %v1039
    %v1050 = vpack.c.b16 %v1042, %v1041
    %1059 = vmatprep.subr.bf16.mxu0 0
    %1060 = vmatpush1.bf16.msra.mxu0 %v1043
    %1061 = vmatprep.subr.bf16.mxu0 0
    %1062 = vmatpush1.bf16.msra.mxu0 %v1044
    %1063 = vmatprep.subr.bf16.mxu0 0
    %1064 = vmatpush1.bf16.msra.mxu0 %v1045
    %1065 = vmatprep.subr.bf16.mxu0 0
    %1066 = vmatpush1.bf16.msra.mxu0 %v1046
    %1067 = vmatprep.subr.bf16.mxu0 0
    %1068 = vmatpush1.bf16.msra.mxu0 %v1047
    %1069 = vmatprep.subr.bf16.mxu0 0
    %1070 = vmatpush1.bf16.msra.mxu0 %v1048
    %1071 = vmatprep.subr.bf16.mxu0 0
    %1072 = vmatpush1.bf16.msra.mxu0 %v1049
    %1073 = vmatprep.subr.bf16.mxu0 0
    %1074 = vmatpush1.bf16.msra.mxu0 %v1050
    %1075 = vmatprep.subr.bf16.mxu0 0
    %1076 = vmatpush1.bf16.msra.mxu0 0
    %1077 = vmatprep.subr.bf16.mxu0 0
    %1078 = vmatpush1.bf16.msra.mxu0 0
    %1079 = vmatprep.subr.bf16.mxu0 0
    %1080 = vmatpush1.bf16.msra.mxu0 0
    %1081 = vmatprep.subr.bf16.mxu0 0
    %1082 = vmatpush1.bf16.msra.mxu0 0
    %1083 = vmatprep.subr.bf16.mxu0 0
    %1084 = vmatpush1.bf16.msra.mxu0 0
    %1085 = vmatprep.subr.bf16.mxu0 0
    %1086 = vmatpush1.bf16.msra.mxu0 0
    %1087 = vmatprep.subr.bf16.mxu0 0
    %1088 = vmatpush1.bf16.msra.mxu0 0
    %1089 = vmatprep.subr.bf16.mxu0 0
    %1090 = vmatpush1.bf16.msra.mxu0 0
    %1091 = vmatprep.mubr.bf16.mxu0 0
    %1092 = vmatmul.mubr.bf16.gmra.mrb[0].mxu0 %v994
    %v1093 = vpop.f32.mrb[0].mxu0
    %v1094 = vadd.f32 0.0, %v1093
    %v1095 = vpop.f32.mrb[0].mxu0
    %v1096 = vpop.f32.mrb[0].mxu0
    %v1097 = vadd.f32 0.0, %v1096
    %v1098 = vpop.f32.mrb[0].mxu0
    %1099 = vdwg.mxu0
    %v1100 = vadd.f32 %v941, %v1094
    %v1101 = vadd.f32 %v942, %v1097
    %s1102 = scalar_lea.vmem [#allocation10], 8
    %v1103 = vld [vmem:[%s1102] sm:$0xf]
    %v1104 = vld [vmem:[%s1102 + $0x4] sm:$0xf]
    %v1107 = vunpack.c.l.b16 %v1103
    %v1108 = vunpack.c.l.b16 %v1104
    %v1109 = vpack.c.b16 %v1108, %v1107
    %v1111 = vsel %vm457, %v1109, 0
    %1113 = vmatprep.subr.bf16.mxu0 0
    %1114 = vmatpush1.bf16.msra.mxu0 %v939
    %1115 = vmatprep.subr.bf16.mxu0 0
    %1116 = vmatpush1.bf16.msra.mxu0 %v940
    %1117 = vmatprep.subr.bf16.mxu0 0
    %1118 = vmatpush1.bf16.msra.mxu0 0
    %1119 = vmatprep.subr.bf16.mxu0 0
    %1120 = vmatpush1.bf16.msra.mxu0 0
    %1121 = vmatprep.subr.bf16.mxu0 0
    %1122 = vmatpush1.bf16.msra.mxu0 0
    %1123 = vmatprep.subr.bf16.mxu0 0
    %1124 = vmatpush1.bf16.msra.mxu0 0
    %1125 = vmatprep.subr.bf16.mxu0 0
    %1126 = vmatpush1.bf16.msra.mxu0 0
    %1127 = vmatprep.subr.bf16.mxu0 0
    %1128 = vmatpush1.bf16.msra.mxu0 0
    %1129 = vmatprep.subr.bf16.mxu0 0
    %1130 = vmatpush1.bf16.msra.mxu0 0
    %1131 = vmatprep.subr.bf16.mxu0 0
    %1132 = vmatpush1.bf16.msra.mxu0 0
    %1133 = vmatprep.subr.bf16.mxu0 0
    %1134 = vmatpush1.bf16.msra.mxu0 0
    %1135 = vmatprep.subr.bf16.mxu0 0
    %1136 = vmatpush1.bf16.msra.mxu0 0
    %1137 = vmatprep.subr.bf16.mxu0 0
    %1138 = vmatpush1.bf16.msra.mxu0 0
    %1139 = vmatprep.subr.bf16.mxu0 0
    %1140 = vmatpush1.bf16.msra.mxu0 0
    %1141 = vmatprep.subr.bf16.mxu0 0
    %1142 = vmatpush1.bf16.msra.mxu0 0
    %1143 = vmatprep.subr.bf16.mxu0 0
    %1144 = vmatpush1.bf16.msra.mxu0 0
    %1145 = vmatprep.mubr.bf16.mxu0 0
    %1146 = vmatmul.mubr.bf16.gmra.mrb[0].mxu0 %v1111
    %v1147 = vpop.f32.mrb[0].mxu0
    %v1148 = vadd.f32 0.0, %v1147
    %v1149 = vpop.f32.mrb[0].mxu0
    %v1150 = vpop.f32.mrb[0].mxu0
    %v1151 = vadd.f32 0.0, %v1150
    %v1152 = vpop.f32.mrb[0].mxu0
    %1153 = vdwg.mxu0
    %v1154 = vpack.c.bf16 %v1151, %v1148
    %s1155 = scalar_lea.vmem [#allocation8], 64
    %v1156 = vld [vmem:[%s1155] sm:$0xf]
    %v1157 = vld [vmem:[%s1155 + $0x4] sm:$0xf]
    %v1158 = vld [vmem:[%s1155 + $0x8] sm:$0xf]
    %v1159 = vld [vmem:[%s1155 + $0xc] sm:$0xf]
    %v1160 = vld [vmem:[%s1155 + $0x10] sm:$0xf]
    %v1161 = vld [vmem:[%s1155 + $0x14] sm:$0xf]
    %v1162 = vld [vmem:[%s1155 + $0x18] sm:$0xf]
    %v1163 = vld [vmem:[%s1155 + $0x1c] sm:$0xf]
    %v1164 = vld [vmem:[%s1155 + $0x20] sm:$0xf]
    %v1165 = vld [vmem:[%s1155 + $0x24] sm:$0xf]
    %v1166 = vld [vmem:[%s1155 + $0x28] sm:$0xf]
    %v1167 = vld [vmem:[%s1155 + $0x2c] sm:$0xf]
    %v1168 = vld [vmem:[%s1155 + $0x30] sm:$0xf]
    %v1169 = vld [vmem:[%s1155 + $0x34] sm:$0xf]
    %v1170 = vld [vmem:[%s1155 + $0x38] sm:$0xf]
    %v1171 = vld [vmem:[%s1155 + $0x3c] sm:$0xf]
    %v1188 = vunpack.c.l.b16 %v1156
    %v1189 = vunpack.c.l.b16 %v1157
    %v1190 = vunpack.c.l.b16 %v1158
    %v1191 = vunpack.c.l.b16 %v1159
    %v1192 = vunpack.c.l.b16 %v1160
    %v1193 = vunpack.c.l.b16 %v1161
    %v1194 = vunpack.c.l.b16 %v1162
    %v1195 = vunpack.c.l.b16 %v1163
    %v1196 = vunpack.c.l.b16 %v1164
    %v1197 = vunpack.c.l.b16 %v1165
    %v1198 = vunpack.c.l.b16 %v1166
    %v1199 = vunpack.c.l.b16 %v1167
    %v1200 = vunpack.c.l.b16 %v1168
    %v1201 = vunpack.c.l.b16 %v1169
    %v1202 = vunpack.c.l.b16 %v1170
    %v1203 = vunpack.c.l.b16 %v1171
    %v1204 = vpack.c.b16 %v1189, %v1188
    %v1205 = vpack.c.b16 %v1191, %v1190
    %v1206 = vpack.c.b16 %v1193, %v1192
    %v1207 = vpack.c.b16 %v1195, %v1194
    %v1208 = vpack.c.b16 %v1197, %v1196
    %v1209 = vpack.c.b16 %v1199, %v1198
    %v1210 = vpack.c.b16 %v1201, %v1200
    %v1211 = vpack.c.b16 %v1203, %v1202
    %1220 = vmatprep.subr.bf16.mxu0 0
    %1221 = vmatpush1.bf16.msra.mxu0 %v1204
    %1222 = vmatprep.subr.bf16.mxu0 0
    %1223 = vmatpush1.bf16.msra.mxu0 %v1205
    %1224 = vmatprep.subr.bf16.mxu0 0
    %1225 = vmatpush1.bf16.msra.mxu0 %v1206
    %1226 = vmatprep.subr.bf16.mxu0 0
    %1227 = vmatpush1.bf16.msra.mxu0 %v1207
    %1228 = vmatprep.subr.bf16.mxu0 0
    %1229 = vmatpush1.bf16.msra.mxu0 %v1208
    %1230 = vmatprep.subr.bf16.mxu0 0
    %1231 = vmatpush1.bf16.msra.mxu0 %v1209
    %1232 = vmatprep.subr.bf16.mxu0 0
    %1233 = vmatpush1.bf16.msra.mxu0 %v1210
    %1234 = vmatprep.subr.bf16.mxu0 0
    %1235 = vmatpush1.bf16.msra.mxu0 %v1211
    %1236 = vmatprep.subr.bf16.mxu0 0
    %1237 = vmatpush1.bf16.msra.mxu0 0
    %1238 = vmatprep.subr.bf16.mxu0 0
    %1239 = vmatpush1.bf16.msra.mxu0 0
    %1240 = vmatprep.subr.bf16.mxu0 0
    %1241 = vmatpush1.bf16.msra.mxu0 0
    %1242 = vmatprep.subr.bf16.mxu0 0
    %1243 = vmatpush1.bf16.msra.mxu0 0
    %1244 = vmatprep.subr.bf16.mxu0 0
    %1245 = vmatpush1.bf16.msra.mxu0 0
    %1246 = vmatprep.subr.bf16.mxu0 0
    %1247 = vmatpush1.bf16.msra.mxu0 0
    %1248 = vmatprep.subr.bf16.mxu0 0
    %1249 = vmatpush1.bf16.msra.mxu0 0
    %1250 = vmatprep.subr.bf16.mxu0 0
    %1251 = vmatpush1.bf16.msra.mxu0 0
    %1252 = vmatprep.mubr.bf16.mxu0 0
    %1253 = vmatmul.mubr.bf16.gmra.mrb[0].mxu0 %v1154
    %v1254 = vpop.f32.mrb[0].mxu0
    %v1255 = vadd.f32 0.0, %v1254
    %v1256 = vpop.f32.mrb[0].mxu0
    %v1257 = vpop.f32.mrb[0].mxu0
    %v1258 = vadd.f32 0.0, %v1257
    %v1259 = vpop.f32.mrb[0].mxu0
    %1260 = vdwg.mxu0
    %v1261 = vadd.f32 %v1100, %v1255
    %v1262 = vadd.f32 %v1101, %v1258
    %s1263 = scalar_lea.vmem [#allocation10], 16
    %v1264 = vld [vmem:[%s1263] sm:$0xf]
    %v1265 = vld [vmem:[%s1263 + $0x4] sm:$0xf]
    %v1268 = vunpack.c.l.b16 %v1264
    %v1269 = vunpack.c.l.b16 %v1265
    %v1270 = vpack.c.b16 %v1269, %v1268
    %v1272 = vsel %vm457, %v1270, 0
    %1274 = vmatprep.subr.bf16.mxu0 0
    %1275 = vmatpush1.bf16.msra.mxu0 %v939
    %1276 = vmatprep.subr.bf16.mxu0 0
    %1277 = vmatpush1.bf16.msra.mxu0 %v940
    %1278 = vmatprep.subr.bf16.mxu0 0
    %1279 = vmatpush1.bf16.msra.mxu0 0
    %1280 = vmatprep.subr.bf16.mxu0 0
    %1281 = vmatpush1.bf16.msra.mxu0 0
    %1282 = vmatprep.subr.bf16.mxu0 0
    %1283 = vmatpush1.bf16.msra.mxu0 0
    %1284 = vmatprep.subr.bf16.mxu0 0
    %1285 = vmatpush1.bf16.msra.mxu0 0
    %1286 = vmatprep.subr.bf16.mxu0 0
    %1287 = vmatpush1.bf16.msra.mxu0 0
    %1288 = vmatprep.subr.bf16.mxu0 0
    %1289 = vmatpush1.bf16.msra.mxu0 0
    %1290 = vmatprep.subr.bf16.mxu0 0
    %1291 = vmatpush1.bf16.msra.mxu0 0
    %1292 = vmatprep.subr.bf16.mxu0 0
    %1293 = vmatpush1.bf16.msra.mxu0 0
    %1294 = vmatprep.subr.bf16.mxu0 0
    %1295 = vmatpush1.bf16.msra.mxu0 0
    %1296 = vmatprep.subr.bf16.mxu0 0
    %1297 = vmatpush1.bf16.msra.mxu0 0
    %1298 = vmatprep.subr.bf16.mxu0 0
    %1299 = vmatpush1.bf16.msra.mxu0 0
    %1300 = vmatprep.subr.bf16.mxu0 0
    %1301 = vmatpush1.bf16.msra.mxu0 0
    %1302 = vmatprep.subr.bf16.mxu0 0
    %1303 = vmatpush1.bf16.msra.mxu0 0
    %1304 = vmatprep.subr.bf16.mxu0 0
    %1305 = vmatpush1.bf16.msra.mxu0 0
    %1306 = vmatprep.mubr.bf16.mxu0 0
    %1307 = vmatmul.mubr.bf16.gmra.mrb[0].mxu0 %v1272
    %v1308 = vpop.f32.mrb[0].mxu0
    %v1309 = vadd.f32 0.0, %v1308
    %v1310 = vpop.f32.mrb[0].mxu0
    %v1311 = vpop.f32.mrb[0].mxu0
    %v1312 = vadd.f32 0.0, %v1311
    %v1313 = vpop.f32.mrb[0].mxu0
    %1314 = vdwg.mxu0
    %v1315 = vpack.c.bf16 %v1312, %v1309
    %s1316 = scalar_lea.vmem [#allocation8], 128
    %v1317 = vld [vmem:[%s1316] sm:$0xf]
    %v1318 = vld [vmem:[%s1316 + $0x4] sm:$0xf]
    %v1319 = vld [vmem:[%s1316 + $0x8] sm:$0xf]
    %v1320 = vld [vmem:[%s1316 + $0xc] sm:$0xf]
    %v1321 = vld [vmem:[%s1316 + $0x10] sm:$0xf]
    %v1322 = vld [vmem:[%s1316 + $0x14] sm:$0xf]
    %v1323 = vld [vmem:[%s1316 + $0x18] sm:$0xf]
    %v1324 = vld [vmem:[%s1316 + $0x1c] sm:$0xf]
    %v1325 = vld [vmem:[%s1316 + $0x20] sm:$0xf]
    %v1326 = vld [vmem:[%s1316 + $0x24] sm:$0xf]
    %v1327 = vld [vmem:[%s1316 + $0x28] sm:$0xf]
    %v1328 = vld [vmem:[%s1316 + $0x2c] sm:$0xf]
    %v1329 = vld [vmem:[%s1316 + $0x30] sm:$0xf]
    %v1330 = vld [vmem:[%s1316 + $0x34] sm:$0xf]
    %v1331 = vld [vmem:[%s1316 + $0x38] sm:$0xf]
    %v1332 = vld [vmem:[%s1316 + $0x3c] sm:$0xf]
    %v1349 = vunpack.c.l.b16 %v1317
    %v1350 = vunpack.c.l.b16 %v1318
    %v1351 = vunpack.c.l.b16 %v1319
    %v1352 = vunpack.c.l.b16 %v1320
    %v1353 = vunpack.c.l.b16 %v1321
    %v1354 = vunpack.c.l.b16 %v1322
    %v1355 = vunpack.c.l.b16 %v1323
    %v1356 = vunpack.c.l.b16 %v1324
    %v1357 = vunpack.c.l.b16 %v1325
    %v1358 = vunpack.c.l.b16 %v1326
    %v1359 = vunpack.c.l.b16 %v1327
    %v1360 = vunpack.c.l.b16 %v1328
    %v1361 = vunpack.c.l.b16 %v1329
    %v1362 = vunpack.c.l.b16 %v1330
    %v1363 = vunpack.c.l.b16 %v1331
    %v1364 = vunpack.c.l.b16 %v1332
    %v1365 = vpack.c.b16 %v1350, %v1349
    %v1366 = vpack.c.b16 %v1352, %v1351
    %v1367 = vpack.c.b16 %v1354, %v1353
    %v1368 = vpack.c.b16 %v1356, %v1355
    %v1369 = vpack.c.b16 %v1358, %v1357
    %v1370 = vpack.c.b16 %v1360, %v1359
    %v1371 = vpack.c.b16 %v1362, %v1361
    %v1372 = vpack.c.b16 %v1364, %v1363
    %1381 = vmatprep.subr.bf16.mxu0 0
    %1382 = vmatpush1.bf16.msra.mxu0 %v1365
    %1383 = vmatprep.subr.bf16.mxu0 0
    %1384 = vmatpush1.bf16.msra.mxu0 %v1366
    %1385 = vmatprep.subr.bf16.mxu0 0
    %1386 = vmatpush1.bf16.msra.mxu0 %v1367
    %1387 = vmatprep.subr.bf16.mxu0 0
    %1388 = vmatpush1.bf16.msra.mxu0 %v1368
    %1389 = vmatprep.subr.bf16.mxu0 0
    %1390 = vmatpush1.bf16.msra.mxu0 %v1369
    %1391 = vmatprep.subr.bf16.mxu0 0
    %1392 = vmatpush1.bf16.msra.mxu0 %v1370
    %1393 = vmatprep.subr.bf16.mxu0 0
    %1394 = vmatpush1.bf16.msra.mxu0 %v1371
    %1395 = vmatprep.subr.bf16.mxu0 0
    %1396 = vmatpush1.bf16.msra.mxu0 %v1372
    %1397 = vmatprep.subr.bf16.mxu0 0
    %1398 = vmatpush1.bf16.msra.mxu0 0
    %1399 = vmatprep.subr.bf16.mxu0 0
    %1400 = vmatpush1.bf16.msra.mxu0 0
    %1401 = vmatprep.subr.bf16.mxu0 0
    %1402 = vmatpush1.bf16.msra.mxu0 0
    %1403 = vmatprep.subr.bf16.mxu0 0
    %1404 = vmatpush1.bf16.msra.mxu0 0
    %1405 = vmatprep.subr.bf16.mxu0 0
    %1406 = vmatpush1.bf16.msra.mxu0 0
    %1407 = vmatprep.subr.bf16.mxu0 0
    %1408 = vmatpush1.bf16.msra.mxu0 0
    %1409 = vmatprep.subr.bf16.mxu0 0
    %1410 = vmatpush1.bf16.msra.mxu0 0
    %1411 = vmatprep.subr.bf16.mxu0 0
    %1412 = vmatpush1.bf16.msra.mxu0 0
    %1413 = vmatprep.mubr.bf16.mxu0 0
    %1414 = vmatmul.mubr.bf16.gmra.mrb[0].mxu0 %v1315
    %v1415 = vpop.f32.mrb[0].mxu0
    %v1416 = vadd.f32 0.0, %v1415
    %v1417 = vpop.f32.mrb[0].mxu0
    %v1418 = vpop.f32.mrb[0].mxu0
    %v1419 = vadd.f32 0.0, %v1418
    %v1420 = vpop.f32.mrb[0].mxu0
    %1421 = vdwg.mxu0
    %v1422 = vadd.f32 %v1261, %v1416
    %v1423 = vadd.f32 %v1262, %v1419
    %v1424 = vmax.f32 %v1422, 0.0
    %v1425 = vmax.f32 %v1423, 0.0
    %v1426 = vpack.c.bf16 %v1425, %v1424
    %v1427 = vld [vmem:[#allocation16] sm:$0xff]
    %v1428 = vld [vmem:[#allocation14] sm:$0xf]
    %vm1429 = vcmask 130048
    %v1431 = vsel %vm1429, %v1428, 0
    %1433 = vmatprep.subr.bf16.mxu0 0
    %1434 = vmatpush1.bf16.msra.mxu0 %v1426
    %1435 = vmatprep.subr.bf16.mxu0 0
    %1436 = vmatpush1.bf16.msra.mxu0 0
    %1437 = vmatprep.subr.bf16.mxu0 0
    %1438 = vmatpush1.bf16.msra.mxu0 0
    %1439 = vmatprep.subr.bf16.mxu0 0
    %1440 = vmatpush1.bf16.msra.mxu0 0
    %1441 = vmatprep.subr.bf16.mxu0 0
    %1442 = vmatpush1.bf16.msra.mxu0 0
    %1443 = vmatprep.subr.bf16.mxu0 0
    %1444 = vmatpush1.bf16.msra.mxu0 0
    %1445 = vmatprep.subr.bf16.mxu0 0
    %1446 = vmatpush1.bf16.msra.mxu0 0
    %1447 = vmatprep.subr.bf16.mxu0 0
    %1448 = vmatpush1.bf16.msra.mxu0 0
    %1449 = vmatprep.subr.bf16.mxu0 0
    %1450 = vmatpush1.bf16.msra.mxu0 0
    %1451 = vmatprep.subr.bf16.mxu0 0
    %1452 = vmatpush1.bf16.msra.mxu0 0
    %1453 = vmatprep.subr.bf16.mxu0 0
    %1454 = vmatpush1.bf16.msra.mxu0 0
    %1455 = vmatprep.subr.bf16.mxu0 0
    %1456 = vmatpush1.bf16.msra.mxu0 0
    %1457 = vmatprep.subr.bf16.mxu0 0
    %1458 = vmatpush1.bf16.msra.mxu0 0
    %1459 = vmatprep.subr.bf16.mxu0 0
    %1460 = vmatpush1.bf16.msra.mxu0 0
    %1461 = vmatprep.subr.bf16.mxu0 0
    %1462 = vmatpush1.bf16.msra.mxu0 0
    %1463 = vmatprep.subr.bf16.mxu0 0
    %1464 = vmatpush1.bf16.msra.mxu0 0
    %1465 = vmatprep.mubr.bf16.mxu0 0
    %1466 = vmatmul.mubr.bf16.gmra.mrb[0].mxu0 %v1431
    %v1467 = vpop.f32.mrb[0].mxu0
    %v1468 = vadd.f32 0.0, %v1467
    %v1469 = vpop.f32.mrb[0].mxu0
    %v1470 = vpop.f32.mrb[0].mxu0
    %v1471 = vpop.f32.mrb[0].mxu0
    %1472 = vdwg.mxu0
    %v1473 = vpack.c.bf16 %v1468, %v1468
    %v1474 = vld [vmem:[#allocation13] sm:$0xf]
    %v1475 = vld [vmem:[#allocation13 + $0x4] sm:$0xf]
    %v1476 = vld [vmem:[#allocation13 + $0x8] sm:$0xf]
    %v1477 = vld [vmem:[#allocation13 + $0xc] sm:$0xf]
    %v1478 = vld [vmem:[#allocation13 + $0x10] sm:$0xf]
    %v1479 = vld [vmem:[#allocation13 + $0x14] sm:$0xf]
    %v1480 = vld [vmem:[#allocation13 + $0x18] sm:$0xf]
    %v1481 = vld [vmem:[#allocation13 + $0x1c] sm:$0xf]
    %v1482 = vld [vmem:[#allocation13 + $0x20] sm:$0xf]
    %v1483 = vld [vmem:[#allocation13 + $0x24] sm:$0xf]
    %v1484 = vld [vmem:[#allocation13 + $0x28] sm:$0xf]
    %v1485 = vld [vmem:[#allocation13 + $0x2c] sm:$0xf]
    %v1486 = vld [vmem:[#allocation13 + $0x30] sm:$0xf]
    %v1487 = vld [vmem:[#allocation13 + $0x34] sm:$0xf]
    %v1488 = vld [vmem:[#allocation13 + $0x38] sm:$0xf]
    %v1489 = vld [vmem:[#allocation13 + $0x3c] sm:$0xf]
    %v1506 = vunpack.c.l.b16 %v1474
    %v1507 = vunpack.c.l.b16 %v1475
    %v1508 = vunpack.c.l.b16 %v1476
    %v1509 = vunpack.c.l.b16 %v1477
    %v1510 = vunpack.c.l.b16 %v1478
    %v1511 = vunpack.c.l.b16 %v1479
    %v1512 = vunpack.c.l.b16 %v1480
    %v1513 = vunpack.c.l.b16 %v1481
    %v1514 = vunpack.c.l.b16 %v1482
    %v1515 = vunpack.c.l.b16 %v1483
    %v1516 = vunpack.c.l.b16 %v1484
    %v1517 = vunpack.c.l.b16 %v1485
    %v1518 = vunpack.c.l.b16 %v1486
    %v1519 = vunpack.c.l.b16 %v1487
    %v1520 = vunpack.c.l.b16 %v1488
    %v1521 = vunpack.c.l.b16 %v1489
    %v1522 = vpack.c.b16 %v1507, %v1506
    %v1523 = vpack.c.b16 %v1509, %v1508
    %v1524 = vpack.c.b16 %v1511, %v1510
    %v1525 = vpack.c.b16 %v1513, %v1512
    %v1526 = vpack.c.b16 %v1515, %v1514
    %v1527 = vpack.c.b16 %v1517, %v1516
    %v1528 = vpack.c.b16 %v1519, %v1518
    %v1529 = vpack.c.b16 %v1521, %v1520
    %1538 = vmatprep.subr.bf16.mxu0 0
    %1539 = vmatpush1.bf16.msra.mxu0 %v1522
    %1540 = vmatprep.subr.bf16.mxu0 0
    %1541 = vmatpush1.bf16.msra.mxu0 %v1523
    %1542 = vmatprep.subr.bf16.mxu0 0
    %1543 = vmatpush1.bf16.msra.mxu0 %v1524
    %1544 = vmatprep.subr.bf16.mxu0 0
    %1545 = vmatpush1.bf16.msra.mxu0 %v1525
    %1546 = vmatprep.subr.bf16.mxu0 0
    %1547 = vmatpush1.bf16.msra.mxu0 %v1526
    %1548 = vmatprep.subr.bf16.mxu0 0
    %1549 = vmatpush1.bf16.msra.mxu0 %v1527
    %1550 = vmatprep.subr.bf16.mxu0 0
    %1551 = vmatpush1.bf16.msra.mxu0 %v1528
    %1552 = vmatprep.subr.bf16.mxu0 0
    %1553 = vmatpush1.bf16.msra.mxu0 %v1529
    %1554 = vmatprep.subr.bf16.mxu0 0
    %1555 = vmatpush1.bf16.msra.mxu0 0
    %1556 = vmatprep.subr.bf16.mxu0 0
    %1557 = vmatpush1.bf16.msra.mxu0 0
    %1558 = vmatprep.subr.bf16.mxu0 0
    %1559 = vmatpush1.bf16.msra.mxu0 0
    %1560 = vmatprep.subr.bf16.mxu0 0
    %1561 = vmatpush1.bf16.msra.mxu0 0
    %1562 = vmatprep.subr.bf16.mxu0 0
    %1563 = vmatpush1.bf16.msra.mxu0 0
    %1564 = vmatprep.subr.bf16.mxu0 0
    %1565 = vmatpush1.bf16.msra.mxu0 0
    %1566 = vmatprep.subr.bf16.mxu0 0
    %1567 = vmatpush1.bf16.msra.mxu0 0
    %1568 = vmatprep.subr.bf16.mxu0 0
    %1569 = vmatpush1.bf16.msra.mxu0 0
    %1570 = vmatprep.mubr.bf16.mxu0 0
    %1571 = vmatmul.mubr.bf16.gmra.mrb[0].mxu0 %v1473
    %v1572 = vpop.f32.mrb[0].mxu0
    %v1573 = vadd.f32 0.0, %v1572
    %v1574 = vpop.f32.mrb[0].mxu0
    %v1575 = vpop.f32.mrb[0].mxu0
    %v1576 = vpop.f32.mrb[0].mxu0
    %1577 = vdwg.mxu0
    %v1578 = vadd.f32 %v1427, %v1573
    %s1579 = scalar_lea.vmem [#allocation14], 4
    %v1580 = vld [vmem:[%s1579] sm:$0xf]
    %v1582 = vsel %vm1429, %v1580, 0
    %1584 = vmatprep.subr.bf16.mxu0 0
    %1585 = vmatpush1.bf16.msra.mxu0 %v1426
    %1586 = vmatprep.subr.bf16.mxu0 0
    %1587 = vmatpush1.bf16.msra.mxu0 0
    %1588 = vmatprep.subr.bf16.mxu0 0
    %1589 = vmatpush1.bf16.msra.mxu0 0
    %1590 = vmatprep.subr.bf16.mxu0 0
    %1591 = vmatpush1.bf16.msra.mxu0 0
    %1592 = vmatprep.subr.bf16.mxu0 0
    %1593 = vmatpush1.bf16.msra.mxu0 0
    %1594 = vmatprep.subr.bf16.mxu0 0
    %1595 = vmatpush1.bf16.msra.mxu0 0
    %1596 = vmatprep.subr.bf16.mxu0 0
    %1597 = vmatpush1.bf16.msra.mxu0 0
    %1598 = vmatprep.subr.bf16.mxu0 0
    %1599 = vmatpush1.bf16.msra.mxu0 0
    %1600 = vmatprep.subr.bf16.mxu0 0
    %1601 = vmatpush1.bf16.msra.mxu0 0
    %1602 = vmatprep.subr.bf16.mxu0 0
    %1603 = vmatpush1.bf16.msra.mxu0 0
    %1604 = vmatprep.subr.bf16.mxu0 0
    %1605 = vmatpush1.bf16.msra.mxu0 0
    %1606 = vmatprep.subr.bf16.mxu0 0
    %1607 = vmatpush1.bf16.msra.mxu0 0
    %1608 = vmatprep.subr.bf16.mxu0 0
    %1609 = vmatpush1.bf16.msra.mxu0 0
    %1610 = vmatprep.subr.bf16.mxu0 0
    %1611 = vmatpush1.bf16.msra.mxu0 0
    %1612 = vmatprep.subr.bf16.mxu0 0
    %1613 = vmatpush1.bf16.msra.mxu0 0
    %1614 = vmatprep.subr.bf16.mxu0 0
    %1615 = vmatpush1.bf16.msra.mxu0 0
    %1616 = vmatprep.mubr.bf16.mxu0 0
    %1617 = vmatmul.mubr.bf16.gmra.mrb[0].mxu0 %v1582
    %v1618 = vpop.f32.mrb[0].mxu0
    %v1619 = vadd.f32 0.0, %v1618
    %v1620 = vpop.f32.mrb[0].mxu0
    %v1621 = vpop.f32.mrb[0].mxu0
    %v1622 = vpop.f32.mrb[0].mxu0
    %1623 = vdwg.mxu0
    %v1624 = vpack.c.bf16 %v1619, %v1619
    %s1625 = scalar_lea.vmem [#allocation13], 64
    %v1626 = vld [vmem:[%s1625] sm:$0xf]
    %v1627 = vld [vmem:[%s1625 + $0x4] sm:$0xf]
    %v1628 = vld [vmem:[%s1625 + $0x8] sm:$0xf]
    %v1629 = vld [vmem:[%s1625 + $0xc] sm:$0xf]
    %v1630 = vld [vmem:[%s1625 + $0x10] sm:$0xf]
    %v1631 = vld [vmem:[%s1625 + $0x14] sm:$0xf]
    %v1632 = vld [vmem:[%s1625 + $0x18] sm:$0xf]
    %v1633 = vld [vmem:[%s1625 + $0x1c] sm:$0xf]
    %v1634 = vld [vmem:[%s1625 + $0x20] sm:$0xf]
    %v1635 = vld [vmem:[%s1625 + $0x24] sm:$0xf]
    %v1636 = vld [vmem:[%s1625 + $0x28] sm:$0xf]
    %v1637 = vld [vmem:[%s1625 + $0x2c] sm:$0xf]
    %v1638 = vld [vmem:[%s1625 + $0x30] sm:$0xf]
    %v1639 = vld [vmem:[%s1625 + $0x34] sm:$0xf]
    %v1640 = vld [vmem:[%s1625 + $0x38] sm:$0xf]
    %v1641 = vld [vmem:[%s1625 + $0x3c] sm:$0xf]
    %v1658 = vunpack.c.l.b16 %v1626
    %v1659 = vunpack.c.l.b16 %v1627
    %v1660 = vunpack.c.l.b16 %v1628
    %v1661 = vunpack.c.l.b16 %v1629
    %v1662 = vunpack.c.l.b16 %v1630
    %v1663 = vunpack.c.l.b16 %v1631
    %v1664 = vunpack.c.l.b16 %v1632
    %v1665 = vunpack.c.l.b16 %v1633
    %v1666 = vunpack.c.l.b16 %v1634
    %v1667 = vunpack.c.l.b16 %v1635
    %v1668 = vunpack.c.l.b16 %v1636
    %v1669 = vunpack.c.l.b16 %v1637
    %v1670 = vunpack.c.l.b16 %v1638
    %v1671 = vunpack.c.l.b16 %v1639
    %v1672 = vunpack.c.l.b16 %v1640
    %v1673 = vunpack.c.l.b16 %v1641
    %v1674 = vpack.c.b16 %v1659, %v1658
    %v1675 = vpack.c.b16 %v1661, %v1660
    %v1676 = vpack.c.b16 %v1663, %v1662
    %v1677 = vpack.c.b16 %v1665, %v1664
    %v1678 = vpack.c.b16 %v1667, %v1666
    %v1679 = vpack.c.b16 %v1669, %v1668
    %v1680 = vpack.c.b16 %v1671, %v1670
    %v1681 = vpack.c.b16 %v1673, %v1672
    %1690 = vmatprep.subr.bf16.mxu0 0
    %1691 = vmatpush1.bf16.msra.mxu0 %v1674
    %1692 = vmatprep.subr.bf16.mxu0 0
    %1693 = vmatpush1.bf16.msra.mxu0 %v1675
    %1694 = vmatprep.subr.bf16.mxu0 0
    %1695 = vmatpush1.bf16.msra.mxu0 %v1676
    %1696 = vmatprep.subr.bf16.mxu0 0
    %1697 = vmatpush1.bf16.msra.mxu0 %v1677
    %1698 = vmatprep.subr.bf16.mxu0 0
    %1699 = vmatpush1.bf16.msra.mxu0 %v1678
    %1700 = vmatprep.subr.bf16.mxu0 0
    %1701 = vmatpush1.bf16.msra.mxu0 %v1679
    %1702 = vmatprep.subr.bf16.mxu0 0
    %1703 = vmatpush1.bf16.msra.mxu0 %v1680
    %1704 = vmatprep.subr.bf16.mxu0 0
    %1705 = vmatpush1.bf16.msra.mxu0 %v1681
    %1706 = vmatprep.subr.bf16.mxu0 0
    %1707 = vmatpush1.bf16.msra.mxu0 0
    %1708 = vmatprep.subr.bf16.mxu0 0
    %1709 = vmatpush1.bf16.msra.mxu0 0
    %1710 = vmatprep.subr.bf16.mxu0 0
    %1711 = vmatpush1.bf16.msra.mxu0 0
    %1712 = vmatprep.subr.bf16.mxu0 0
    %1713 = vmatpush1.bf16.msra.mxu0 0
    %1714 = vmatprep.subr.bf16.mxu0 0
    %1715 = vmatpush1.bf16.msra.mxu0 0
    %1716 = vmatprep.subr.bf16.mxu0 0
    %1717 = vmatpush1.bf16.msra.mxu0 0
    %1718 = vmatprep.subr.bf16.mxu0 0
    %1719 = vmatpush1.bf16.msra.mxu0 0
    %1720 = vmatprep.subr.bf16.mxu0 0
    %1721 = vmatpush1.bf16.msra.mxu0 0
    %1722 = vmatprep.mubr.bf16.mxu0 0
    %1723 = vmatmul.mubr.bf16.gmra.mrb[0].mxu0 %v1624
    %v1724 = vpop.f32.mrb[0].mxu0
    %v1725 = vadd.f32 0.0, %v1724
    %v1726 = vpop.f32.mrb[0].mxu0
    %v1727 = vpop.f32.mrb[0].mxu0
    %v1728 = vpop.f32.mrb[0].mxu0
    %1729 = vdwg.mxu0
    %v1730 = vadd.f32 %v1578, %v1725
    %s1731 = scalar_lea.vmem [#allocation14], 8
    %v1732 = vld [vmem:[%s1731] sm:$0xf]
    %v1734 = vsel %vm1429, %v1732, 0
    %1736 = vmatprep.subr.bf16.mxu0 0
    %1737 = vmatpush1.bf16.msra.mxu0 %v1426
    %1738 = vmatprep.subr.bf16.mxu0 0
    %1739 = vmatpush1.bf16.msra.mxu0 0
    %1740 = vmatprep.subr.bf16.mxu0 0
    %1741 = vmatpush1.bf16.msra.mxu0 0
    %1742 = vmatprep.subr.bf16.mxu0 0
    %1743 = vmatpush1.bf16.msra.mxu0 0
    %1744 = vmatprep.subr.bf16.mxu0 0
    %1745 = vmatpush1.bf16.msra.mxu0 0
    %1746 = vmatprep.subr.bf16.mxu0 0
    %1747 = vmatpush1.bf16.msra.mxu0 0
    %1748 = vmatprep.subr.bf16.mxu0 0
    %1749 = vmatpush1.bf16.msra.mxu0 0
    %1750 = vmatprep.subr.bf16.mxu0 0
    %1751 = vmatpush1.bf16.msra.mxu0 0
    %1752 = vmatprep.subr.bf16.mxu0 0
    %1753 = vmatpush1.bf16.msra.mxu0 0
    %1754 = vmatprep.subr.bf16.mxu0 0
    %1755 = vmatpush1.bf16.msra.mxu0 0
    %1756 = vmatprep.subr.bf16.mxu0 0
    %1757 = vmatpush1.bf16.msra.mxu0 0
    %1758 = vmatprep.subr.bf16.mxu0 0
    %1759 = vmatpush1.bf16.msra.mxu0 0
    %1760 = vmatprep.subr.bf16.mxu0 0
    %1761 = vmatpush1.bf16.msra.mxu0 0
    %1762 = vmatprep.subr.bf16.mxu0 0
    %1763 = vmatpush1.bf16.msra.mxu0 0
    %1764 = vmatprep.subr.bf16.mxu0 0
    %1765 = vmatpush1.bf16.msra.mxu0 0
    %1766 = vmatprep.subr.bf16.mxu0 0
    %1767 = vmatpush1.bf16.msra.mxu0 0
    %1768 = vmatprep.mubr.bf16.mxu0 0
    %1769 = vmatmul.mubr.bf16.gmra.mrb[0].mxu0 %v1734
    %v1770 = vpop.f32.mrb[0].mxu0
    %v1771 = vadd.f32 0.0, %v1770
    %v1772 = vpop.f32.mrb[0].mxu0
    %v1773 = vpop.f32.mrb[0].mxu0
    %v1774 = vpop.f32.mrb[0].mxu0
    %1775 = vdwg.mxu0
    %v1776 = vpack.c.bf16 %v1771, %v1771
    %s1777 = scalar_lea.vmem [#allocation13], 128
    %v1778 = vld [vmem:[%s1777] sm:$0xf]
    %v1779 = vld [vmem:[%s1777 + $0x4] sm:$0xf]
    %v1780 = vld [vmem:[%s1777 + $0x8] sm:$0xf]
    %v1781 = vld [vmem:[%s1777 + $0xc] sm:$0xf]
    %v1782 = vld [vmem:[%s1777 + $0x10] sm:$0xf]
    %v1783 = vld [vmem:[%s1777 + $0x14] sm:$0xf]
    %v1784 = vld [vmem:[%s1777 + $0x18] sm:$0xf]
    %v1785 = vld [vmem:[%s1777 + $0x1c] sm:$0xf]
    %v1786 = vld [vmem:[%s1777 + $0x20] sm:$0xf]
    %v1787 = vld [vmem:[%s1777 + $0x24] sm:$0xf]
    %v1788 = vld [vmem:[%s1777 + $0x28] sm:$0xf]
    %v1789 = vld [vmem:[%s1777 + $0x2c] sm:$0xf]
    %v1790 = vld [vmem:[%s1777 + $0x30] sm:$0xf]
    %v1791 = vld [vmem:[%s1777 + $0x34] sm:$0xf]
    %v1792 = vld [vmem:[%s1777 + $0x38] sm:$0xf]
    %v1793 = vld [vmem:[%s1777 + $0x3c] sm:$0xf]
    %v1810 = vunpack.c.l.b16 %v1778
    %v1811 = vunpack.c.l.b16 %v1779
    %v1812 = vunpack.c.l.b16 %v1780
    %v1813 = vunpack.c.l.b16 %v1781
    %v1814 = vunpack.c.l.b16 %v1782
    %v1815 = vunpack.c.l.b16 %v1783
    %v1816 = vunpack.c.l.b16 %v1784
    %v1817 = vunpack.c.l.b16 %v1785
    %v1818 = vunpack.c.l.b16 %v1786
    %v1819 = vunpack.c.l.b16 %v1787
    %v1820 = vunpack.c.l.b16 %v1788
    %v1821 = vunpack.c.l.b16 %v1789
    %v1822 = vunpack.c.l.b16 %v1790
    %v1823 = vunpack.c.l.b16 %v1791
    %v1824 = vunpack.c.l.b16 %v1792
    %v1825 = vunpack.c.l.b16 %v1793
    %v1826 = vpack.c.b16 %v1811, %v1810
    %v1827 = vpack.c.b16 %v1813, %v1812
    %v1828 = vpack.c.b16 %v1815, %v1814
    %v1829 = vpack.c.b16 %v1817, %v1816
    %v1830 = vpack.c.b16 %v1819, %v1818
    %v1831 = vpack.c.b16 %v1821, %v1820
    %v1832 = vpack.c.b16 %v1823, %v1822
    %v1833 = vpack.c.b16 %v1825, %v1824
    %1842 = vmatprep.subr.bf16.mxu0 0
    %1843 = vmatpush1.bf16.msra.mxu0 %v1826
    %1844 = vmatprep.subr.bf16.mxu0 0
    %1845 = vmatpush1.bf16.msra.mxu0 %v1827
    %1846 = vmatprep.subr.bf16.mxu0 0
    %1847 = vmatpush1.bf16.msra.mxu0 %v1828
    %1848 = vmatprep.subr.bf16.mxu0 0
    %1849 = vmatpush1.bf16.msra.mxu0 %v1829
    %1850 = vmatprep.subr.bf16.mxu0 0
    %1851 = vmatpush1.bf16.msra.mxu0 %v1830
    %1852 = vmatprep.subr.bf16.mxu0 0
    %1853 = vmatpush1.bf16.msra.mxu0 %v1831
    %1854 = vmatprep.subr.bf16.mxu0 0
    %1855 = vmatpush1.bf16.msra.mxu0 %v1832
    %1856 = vmatprep.subr.bf16.mxu0 0
    %1857 = vmatpush1.bf16.msra.mxu0 %v1833
    %1858 = vmatprep.subr.bf16.mxu0 0
    %1859 = vmatpush1.bf16.msra.mxu0 0
    %1860 = vmatprep.subr.bf16.mxu0 0
    %1861 = vmatpush1.bf16.msra.mxu0 0
    %1862 = vmatprep.subr.bf16.mxu0 0
    %1863 = vmatpush1.bf16.msra.mxu0 0
    %1864 = vmatprep.subr.bf16.mxu0 0
    %1865 = vmatpush1.bf16.msra.mxu0 0
    %1866 = vmatprep.subr.bf16.mxu0 0
    %1867 = vmatpush1.bf16.msra.mxu0 0
    %1868 = vmatprep.subr.bf16.mxu0 0
    %1869 = vmatpush1.bf16.msra.mxu0 0
    %1870 = vmatprep.subr.bf16.mxu0 0
    %1871 = vmatpush1.bf16.msra.mxu0 0
    %1872 = vmatprep.subr.bf16.mxu0 0
    %1873 = vmatpush1.bf16.msra.mxu0 0
    %1874 = vmatprep.mubr.bf16.mxu0 0
    %1875 = vmatmul.mubr.bf16.gmra.mrb[0].mxu0 %v1776
    %v1876 = vpop.f32.mrb[0].mxu0
    %v1877 = vadd.f32 0.0, %v1876
    %v1878 = vpop.f32.mrb[0].mxu0
    %v1879 = vpop.f32.mrb[0].mxu0
    %v1880 = vpop.f32.mrb[0].mxu0
    %1881 = vdwg.mxu0
    %v1882 = vadd.f32 %v1730, %v1877
    %v1883 = vmax.f32 %v1882, 0.0
    %v1884 = vpack.c.bf16 %v1883, %v1883
    %v1885 = vld [vmem:[#allocation19] sm:$0x3]
    %v1886 = vld [vmem:[#allocation17] sm:$0x1]
    %vm1887 = vcmask 64512
    %v1889 = vsel %vm1887, %v1886, 0
    %vm1891 = vcmask 1043456
    %v1893 = vsel %vm1891, %v1884, 0
    %1895 = vmatprep.subr.bf16.mxu0 0
    %1896 = vmatpush1.bf16.msra.mxu0 %v1893
    %1897 = vmatprep.subr.bf16.mxu0 0
    %1898 = vmatpush1.bf16.msra.mxu0 0
    %1899 = vmatprep.subr.bf16.mxu0 0
    %1900 = vmatpush1.bf16.msra.mxu0 0
    %1901 = vmatprep.subr.bf16.mxu0 0
    %1902 = vmatpush1.bf16.msra.mxu0 0
    %1903 = vmatprep.subr.bf16.mxu0 0
    %1904 = vmatpush1.bf16.msra.mxu0 0
    %1905 = vmatprep.subr.bf16.mxu0 0
    %1906 = vmatpush1.bf16.msra.mxu0 0
    %1907 = vmatprep.subr.bf16.mxu0 0
    %1908 = vmatpush1.bf16.msra.mxu0 0
    %1909 = vmatprep.subr.bf16.mxu0 0
    %1910 = vmatpush1.bf16.msra.mxu0 0
    %1911 = vmatprep.subr.bf16.mxu0 0
    %1912 = vmatpush1.bf16.msra.mxu0 0
    %1913 = vmatprep.subr.bf16.mxu0 0
    %1914 = vmatpush1.bf16.msra.mxu0 0
    %1915 = vmatprep.subr.bf16.mxu0 0
    %1916 = vmatpush1.bf16.msra.mxu0 0
    %1917 = vmatprep.subr.bf16.mxu0 0
    %1918 = vmatpush1.bf16.msra.mxu0 0
    %1919 = vmatprep.subr.bf16.mxu0 0
    %1920 = vmatpush1.bf16.msra.mxu0 0
    %1921 = vmatprep.subr.bf16.mxu0 0
    %1922 = vmatpush1.bf16.msra.mxu0 0
    %1923 = vmatprep.subr.bf16.mxu0 0
    %1924 = vmatpush1.bf16.msra.mxu0 0
    %1925 = vmatprep.subr.bf16.mxu0 0
    %1926 = vmatpush1.bf16.msra.mxu0 0
    %1927 = vmatprep.mubr.bf16.mxu0 0
    %1928 = vmatmul.mubr.bf16.gmra.mrb[0].mxu0 %v1889
    %v1929 = vpop.f32.mrb[0].mxu0
    %v1930 = vadd.f32 0.0, %v1929
    %v1931 = vpop.f32.mrb[0].mxu0
    %v1932 = vpop.f32.mrb[0].mxu0
    %v1933 = vpop.f32.mrb[0].mxu0
    %1934 = vdwg.mxu0
    %v1935 = vpack.c.bf16 %v1930, %v1930
    %v1936 = vld [vmem:[%s23] sm:$0xf]
    %v1937 = vld [vmem:[%s23 + $0x4] sm:$0xf]
    %v1938 = vld [vmem:[%s23 + $0x8] sm:$0xf]
    %v1939 = vld [vmem:[%s23 + $0xc] sm:$0xf]
    %v1940 = vld [vmem:[%s23 + $0x10] sm:$0xf]
    %v1941 = vld [vmem:[%s23 + $0x14] sm:$0xf]
    %v1942 = vld [vmem:[%s23 + $0x18] sm:$0xf]
    %v1943 = vld [vmem:[%s23 + $0x1c] sm:$0xf]
    %v1944 = vld [vmem:[%s23 + $0x20] sm:$0xf]
    %v1945 = vld [vmem:[%s23 + $0x24] sm:$0xf]
    %v1946 = vld [vmem:[%s23 + $0x28] sm:$0xf]
    %v1947 = vld [vmem:[%s23 + $0x2c] sm:$0xf]
    %v1948 = vld [vmem:[%s23 + $0x30] sm:$0xf]
    %v1949 = vld [vmem:[%s23 + $0x34] sm:$0xf]
    %v1950 = vld [vmem:[%s23 + $0x38] sm:$0xf]
    %v1951 = vld [vmem:[%s23 + $0x3c] sm:$0xf]
    %v1968 = vunpack.c.l.b16 %v1936
    %v1969 = vunpack.c.l.b16 %v1937
    %v1970 = vunpack.c.l.b16 %v1938
    %v1971 = vunpack.c.l.b16 %v1939
    %v1972 = vunpack.c.l.b16 %v1940
    %v1973 = vunpack.c.l.b16 %v1941
    %v1974 = vunpack.c.l.b16 %v1942
    %v1975 = vunpack.c.l.b16 %v1943
    %v1976 = vunpack.c.l.b16 %v1944
    %v1977 = vunpack.c.l.b16 %v1945
    %v1978 = vunpack.c.l.b16 %v1946
    %v1979 = vunpack.c.l.b16 %v1947
    %v1980 = vunpack.c.l.b16 %v1948
    %v1981 = vunpack.c.l.b16 %v1949
    %v1982 = vunpack.c.l.b16 %v1950
    %v1983 = vunpack.c.l.b16 %v1951
    %v1984 = vpack.c.b16 %v1969, %v1968
    %v1985 = vpack.c.b16 %v1971, %v1970
    %v1986 = vpack.c.b16 %v1973, %v1972
    %v1987 = vpack.c.b16 %v1975, %v1974
    %v1988 = vpack.c.b16 %v1977, %v1976
    %v1989 = vpack.c.b16 %v1979, %v1978
    %v1990 = vpack.c.b16 %v1981, %v1980
    %v1991 = vpack.c.b16 %v1983, %v1982
    %2000 = vmatprep.subr.bf16.mxu0 0
    %2001 = vmatpush1.bf16.msra.mxu0 %v1984
    %2002 = vmatprep.subr.bf16.mxu0 0
    %2003 = vmatpush1.bf16.msra.mxu0 %v1985
    %2004 = vmatprep.subr.bf16.mxu0 0
    %2005 = vmatpush1.bf16.msra.mxu0 %v1986
    %2006 = vmatprep.subr.bf16.mxu0 0
    %2007 = vmatpush1.bf16.msra.mxu0 %v1987
    %2008 = vmatprep.subr.bf16.mxu0 0
    %2009 = vmatpush1.bf16.msra.mxu0 %v1988
    %2010 = vmatprep.subr.bf16.mxu0 0
    %2011 = vmatpush1.bf16.msra.mxu0 %v1989
    %2012 = vmatprep.subr.bf16.mxu0 0
    %2013 = vmatpush1.bf16.msra.mxu0 %v1990
    %2014 = vmatprep.subr.bf16.mxu0 0
    %2015 = vmatpush1.bf16.msra.mxu0 %v1991
    %2016 = vmatprep.subr.bf16.mxu0 0
    %2017 = vmatpush1.bf16.msra.mxu0 0
    %2018 = vmatprep.subr.bf16.mxu0 0
    %2019 = vmatpush1.bf16.msra.mxu0 0
    %2020 = vmatprep.subr.bf16.mxu0 0
    %2021 = vmatpush1.bf16.msra.mxu0 0
    %2022 = vmatprep.subr.bf16.mxu0 0
    %2023 = vmatpush1.bf16.msra.mxu0 0
    %2024 = vmatprep.subr.bf16.mxu0 0
    %2025 = vmatpush1.bf16.msra.mxu0 0
    %2026 = vmatprep.subr.bf16.mxu0 0
    %2027 = vmatpush1.bf16.msra.mxu0 0
    %2028 = vmatprep.subr.bf16.mxu0 0
    %2029 = vmatpush1.bf16.msra.mxu0 0
    %2030 = vmatprep.subr.bf16.mxu0 0
    %2031 = vmatpush1.bf16.msra.mxu0 0
    %2032 = vmatprep.mubr.bf16.mxu0 0
    %2033 = vmatmul.mubr.bf16.gmra.mrb[0].mxu0 %v1935
    %v2034 = vpop.f32.mrb[0].mxu0
    %v2035 = vadd.f32 0.0, %v2034
    %v2036 = vpop.f32.mrb[0].mxu0
    %v2037 = vpop.f32.mrb[0].mxu0
    %v2038 = vpop.f32.mrb[0].mxu0
    %2039 = vdwg.mxu0
    %v2040 = vadd.f32 %v1885, %v2035
    %s2041 = scalar_lea.vmem [#allocation17], 1
    %v2042 = vld [vmem:[%s2041] sm:$0x1]
    %v2044 = vsel %vm1887, %v2042, 0
    %2046 = vmatprep.subr.bf16.mxu0 0
    %2047 = vmatpush1.bf16.msra.mxu0 %v1893
    %2048 = vmatprep.subr.bf16.mxu0 0
    %2049 = vmatpush1.bf16.msra.mxu0 0
    %2050 = vmatprep.subr.bf16.mxu0 0
    %2051 = vmatpush1.bf16.msra.mxu0 0
    %2052 = vmatprep.subr.bf16.mxu0 0
    %2053 = vmatpush1.bf16.msra.mxu0 0
    %2054 = vmatprep.subr.bf16.mxu0 0
    %2055 = vmatpush1.bf16.msra.mxu0 0
    %2056 = vmatprep.subr.bf16.mxu0 0
    %2057 = vmatpush1.bf16.msra.mxu0 0
    %2058 = vmatprep.subr.bf16.mxu0 0
    %2059 = vmatpush1.bf16.msra.mxu0 0
    %2060 = vmatprep.subr.bf16.mxu0 0
    %2061 = vmatpush1.bf16.msra.mxu0 0
    %2062 = vmatprep.subr.bf16.mxu0 0
    %2063 = vmatpush1.bf16.msra.mxu0 0
    %2064 = vmatprep.subr.bf16.mxu0 0
    %2065 = vmatpush1.bf16.msra.mxu0 0
    %2066 = vmatprep.subr.bf16.mxu0 0
    %2067 = vmatpush1.bf16.msra.mxu0 0
    %2068 = vmatprep.subr.bf16.mxu0 0
    %2069 = vmatpush1.bf16.msra.mxu0 0
    %2070 = vmatprep.subr.bf16.mxu0 0
    %2071 = vmatpush1.bf16.msra.mxu0 0
    %2072 = vmatprep.subr.bf16.mxu0 0
    %2073 = vmatpush1.bf16.msra.mxu0 0
    %2074 = vmatprep.subr.bf16.mxu0 0
    %2075 = vmatpush1.bf16.msra.mxu0 0
    %2076 = vmatprep.subr.bf16.mxu0 0
    %2077 = vmatpush1.bf16.msra.mxu0 0
    %2078 = vmatprep.mubr.bf16.mxu0 0
    %2079 = vmatmul.mubr.bf16.gmra.mrb[0].mxu0 %v2044
    %v2080 = vpop.f32.mrb[0].mxu0
    %v2081 = vadd.f32 0.0, %v2080
    %v2082 = vpop.f32.mrb[0].mxu0
    %v2083 = vpop.f32.mrb[0].mxu0
    %v2084 = vpop.f32.mrb[0].mxu0
    %2085 = vdwg.mxu0
    %v2086 = vpack.c.bf16 %v2081, %v2081
    %s2087 = scalar_lea.vmem %s23, 64
    %v2088 = vld [vmem:[%s2087] sm:$0xf]
    %v2089 = vld [vmem:[%s2087 + $0x4] sm:$0xf]
    %v2090 = vld [vmem:[%s2087 + $0x8] sm:$0xf]
    %v2091 = vld [vmem:[%s2087 + $0xc] sm:$0xf]
    %v2092 = vld [vmem:[%s2087 + $0x10] sm:$0xf]
    %v2093 = vld [vmem:[%s2087 + $0x14] sm:$0xf]
    %v2094 = vld [vmem:[%s2087 + $0x18] sm:$0xf]
    %v2095 = vld [vmem:[%s2087 + $0x1c] sm:$0xf]
    %v2096 = vld [vmem:[%s2087 + $0x20] sm:$0xf]
    %v2097 = vld [vmem:[%s2087 + $0x24] sm:$0xf]
    %v2098 = vld [vmem:[%s2087 + $0x28] sm:$0xf]
    %v2099 = vld [vmem:[%s2087 + $0x2c] sm:$0xf]
    %v2100 = vld [vmem:[%s2087 + $0x30] sm:$0xf]
    %v2101 = vld [vmem:[%s2087 + $0x34] sm:$0xf]
    %v2102 = vld [vmem:[%s2087 + $0x38] sm:$0xf]
    %v2103 = vld [vmem:[%s2087 + $0x3c] sm:$0xf]
    %v2120 = vunpack.c.l.b16 %v2088
    %v2121 = vunpack.c.l.b16 %v2089
    %v2122 = vunpack.c.l.b16 %v2090
    %v2123 = vunpack.c.l.b16 %v2091
    %v2124 = vunpack.c.l.b16 %v2092
    %v2125 = vunpack.c.l.b16 %v2093
    %v2126 = vunpack.c.l.b16 %v2094
    %v2127 = vunpack.c.l.b16 %v2095
    %v2128 = vunpack.c.l.b16 %v2096
    %v2129 = vunpack.c.l.b16 %v2097
    %v2130 = vunpack.c.l.b16 %v2098
    %v2131 = vunpack.c.l.b16 %v2099
    %v2132 = vunpack.c.l.b16 %v2100
    %v2133 = vunpack.c.l.b16 %v2101
    %v2134 = vunpack.c.l.b16 %v2102
    %v2135 = vunpack.c.l.b16 %v2103
    %v2136 = vpack.c.b16 %v2121, %v2120
    %v2137 = vpack.c.b16 %v2123, %v2122
    %v2138 = vpack.c.b16 %v2125, %v2124
    %v2139 = vpack.c.b16 %v2127, %v2126
    %v2140 = vpack.c.b16 %v2129, %v2128
    %v2141 = vpack.c.b16 %v2131, %v2130
    %v2142 = vpack.c.b16 %v2133, %v2132
    %v2143 = vpack.c.b16 %v2135, %v2134
    %2152 = vmatprep.subr.bf16.mxu0 0
    %2153 = vmatpush1.bf16.msra.mxu0 %v2136
    %2154 = vmatprep.subr.bf16.mxu0 0
    %2155 = vmatpush1.bf16.msra.mxu0 %v2137
    %2156 = vmatprep.subr.bf16.mxu0 0
    %2157 = vmatpush1.bf16.msra.mxu0 %v2138
    %2158 = vmatprep.subr.bf16.mxu0 0
    %2159 = vmatpush1.bf16.msra.mxu0 %v2139
    %2160 = vmatprep.subr.bf16.mxu0 0
    %2161 = vmatpush1.bf16.msra.mxu0 %v2140
    %2162 = vmatprep.subr.bf16.mxu0 0
    %2163 = vmatpush1.bf16.msra.mxu0 %v2141
    %2164 = vmatprep.subr.bf16.mxu0 0
    %2165 = vmatpush1.bf16.msra.mxu0 %v2142
    %2166 = vmatprep.subr.bf16.mxu0 0
    %2167 = vmatpush1.bf16.msra.mxu0 %v2143
    %2168 = vmatprep.subr.bf16.mxu0 0
    %2169 = vmatpush1.bf16.msra.mxu0 0
    %2170 = vmatprep.subr.bf16.mxu0 0
    %2171 = vmatpush1.bf16.msra.mxu0 0
    %2172 = vmatprep.subr.bf16.mxu0 0
    %2173 = vmatpush1.bf16.msra.mxu0 0
    %2174 = vmatprep.subr.bf16.mxu0 0
    %2175 = vmatpush1.bf16.msra.mxu0 0
    %2176 = vmatprep.subr.bf16.mxu0 0
    %2177 = vmatpush1.bf16.msra.mxu0 0
    %2178 = vmatprep.subr.bf16.mxu0 0
    %2179 = vmatpush1.bf16.msra.mxu0 0
    %2180 = vmatprep.subr.bf16.mxu0 0
    %2181 = vmatpush1.bf16.msra.mxu0 0
    %2182 = vmatprep.subr.bf16.mxu0 0
    %2183 = vmatpush1.bf16.msra.mxu0 0
    %2184 = vmatprep.mubr.bf16.mxu0 0
    %2185 = vmatmul.mubr.bf16.gmra.mrb[0].mxu0 %v2086
    %v2186 = vpop.f32.mrb[0].mxu0
    %v2187 = vadd.f32 0.0, %v2186
    %v2188 = vpop.f32.mrb[0].mxu0
    %v2189 = vpop.f32.mrb[0].mxu0
    %v2190 = vpop.f32.mrb[0].mxu0
    %2191 = vdwg.mxu0
    %v2192 = vadd.f32 %v2040, %v2187
    %s2193 = scalar_lea.vmem [#allocation17], 2
    %v2194 = vld [vmem:[%s2193] sm:$0x1]
    %v2196 = vsel %vm1887, %v2194, 0
    %2198 = vmatprep.subr.bf16.mxu0 0
    %2199 = vmatpush1.bf16.msra.mxu0 %v1893
    %2200 = vmatprep.subr.bf16.mxu0 0
    %2201 = vmatpush1.bf16.msra.mxu0 0
    %2202 = vmatprep.subr.bf16.mxu0 0
    %2203 = vmatpush1.bf16.msra.mxu0 0
    %2204 = vmatprep.subr.bf16.mxu0 0
    %2205 = vmatpush1.bf16.msra.mxu0 0
    %2206 = vmatprep.subr.bf16.mxu0 0
    %2207 = vmatpush1.bf16.msra.mxu0 0
    %2208 = vmatprep.subr.bf16.mxu0 0
    %2209 = vmatpush1.bf16.msra.mxu0 0
    %2210 = vmatprep.subr.bf16.mxu0 0
    %2211 = vmatpush1.bf16.msra.mxu0 0
    %2212 = vmatprep.subr.bf16.mxu0 0
    %2213 = vmatpush1.bf16.msra.mxu0 0
    %2214 = vmatprep.subr.bf16.mxu0 0
    %2215 = vmatpush1.bf16.msra.mxu0 0
    %2216 = vmatprep.subr.bf16.mxu0 0
    %2217 = vmatpush1.bf16.msra.mxu0 0
    %2218 = vmatprep.subr.bf16.mxu0 0
    %2219 = vmatpush1.bf16.msra.mxu0 0
    %2220 = vmatprep.subr.bf16.mxu0 0
    %2221 = vmatpush1.bf16.msra.mxu0 0
    %2222 = vmatprep.subr.bf16.mxu0 0
    %2223 = vmatpush1.bf16.msra.mxu0 0
    %2224 = vmatprep.subr.bf16.mxu0 0
    %2225 = vmatpush1.bf16.msra.mxu0 0
    %2226 = vmatprep.subr.bf16.mxu0 0
    %2227 = vmatpush1.bf16.msra.mxu0 0
    %2228 = vmatprep.subr.bf16.mxu0 0
    %2229 = vmatpush1.bf16.msra.mxu0 0
    %2230 = vmatprep.mubr.bf16.mxu0 0
    %2231 = vmatmul.mubr.bf16.gmra.mrb[0].mxu0 %v2196
    %v2232 = vpop.f32.mrb[0].mxu0
    %v2233 = vadd.f32 0.0, %v2232
    %v2234 = vpop.f32.mrb[0].mxu0
    %v2235 = vpop.f32.mrb[0].mxu0
    %v2236 = vpop.f32.mrb[0].mxu0
    %2237 = vdwg.mxu0
    %v2238 = vpack.c.bf16 %v2233, %v2233
    %s2239 = scalar_lea.vmem %s23, 128
    %v2240 = vld [vmem:[%s2239] sm:$0xf]
    %v2241 = vld [vmem:[%s2239 + $0x4] sm:$0xf]
    %v2242 = vld [vmem:[%s2239 + $0x8] sm:$0xf]
    %v2243 = vld [vmem:[%s2239 + $0xc] sm:$0xf]
    %v2244 = vld [vmem:[%s2239 + $0x10] sm:$0xf]
    %v2245 = vld [vmem:[%s2239 + $0x14] sm:$0xf]
    %v2246 = vld [vmem:[%s2239 + $0x18] sm:$0xf]
    %v2247 = vld [vmem:[%s2239 + $0x1c] sm:$0xf]
    %v2248 = vld [vmem:[%s2239 + $0x20] sm:$0xf]
    %v2249 = vld [vmem:[%s2239 + $0x24] sm:$0xf]
    %v2250 = vld [vmem:[%s2239 + $0x28] sm:$0xf]
    %v2251 = vld [vmem:[%s2239 + $0x2c] sm:$0xf]
    %v2252 = vld [vmem:[%s2239 + $0x30] sm:$0xf]
    %v2253 = vld [vmem:[%s2239 + $0x34] sm:$0xf]
    %v2254 = vld [vmem:[%s2239 + $0x38] sm:$0xf]
    %v2255 = vld [vmem:[%s2239 + $0x3c] sm:$0xf]
    %v2272 = vunpack.c.l.b16 %v2240
    %v2273 = vunpack.c.l.b16 %v2241
    %v2274 = vunpack.c.l.b16 %v2242
    %v2275 = vunpack.c.l.b16 %v2243
    %v2276 = vunpack.c.l.b16 %v2244
    %v2277 = vunpack.c.l.b16 %v2245
    %v2278 = vunpack.c.l.b16 %v2246
    %v2279 = vunpack.c.l.b16 %v2247
    %v2280 = vunpack.c.l.b16 %v2248
    %v2281 = vunpack.c.l.b16 %v2249
    %v2282 = vunpack.c.l.b16 %v2250
    %v2283 = vunpack.c.l.b16 %v2251
    %v2284 = vunpack.c.l.b16 %v2252
    %v2285 = vunpack.c.l.b16 %v2253
    %v2286 = vunpack.c.l.b16 %v2254
    %v2287 = vunpack.c.l.b16 %v2255
    %v2288 = vpack.c.b16 %v2273, %v2272
    %v2289 = vpack.c.b16 %v2275, %v2274
    %v2290 = vpack.c.b16 %v2277, %v2276
    %v2291 = vpack.c.b16 %v2279, %v2278
    %v2292 = vpack.c.b16 %v2281, %v2280
    %v2293 = vpack.c.b16 %v2283, %v2282
    %v2294 = vpack.c.b16 %v2285, %v2284
    %v2295 = vpack.c.b16 %v2287, %v2286
    %2304 = vmatprep.subr.bf16.mxu0 0
    %2305 = vmatpush1.bf16.msra.mxu0 %v2288
    %2306 = vmatprep.subr.bf16.mxu0 0
    %2307 = vmatpush1.bf16.msra.mxu0 %v2289
    %2308 = vmatprep.subr.bf16.mxu0 0
    %2309 = vmatpush1.bf16.msra.mxu0 %v2290
    %2310 = vmatprep.subr.bf16.mxu0 0
    %2311 = vmatpush1.bf16.msra.mxu0 %v2291
    %2312 = vmatprep.subr.bf16.mxu0 0
    %2313 = vmatpush1.bf16.msra.mxu0 %v2292
    %2314 = vmatprep.subr.bf16.mxu0 0
    %2315 = vmatpush1.bf16.msra.mxu0 %v2293
    %2316 = vmatprep.subr.bf16.mxu0 0
    %2317 = vmatpush1.bf16.msra.mxu0 %v2294
    %2318 = vmatprep.subr.bf16.mxu0 0
    %2319 = vmatpush1.bf16.msra.mxu0 %v2295
    %2320 = vmatprep.subr.bf16.mxu0 0
    %2321 = vmatpush1.bf16.msra.mxu0 0
    %2322 = vmatprep.subr.bf16.mxu0 0
    %2323 = vmatpush1.bf16.msra.mxu0 0
    %2324 = vmatprep.subr.bf16.mxu0 0
    %2325 = vmatpush1.bf16.msra.mxu0 0
    %2326 = vmatprep.subr.bf16.mxu0 0
    %2327 = vmatpush1.bf16.msra.mxu0 0
    %2328 = vmatprep.subr.bf16.mxu0 0
    %2329 = vmatpush1.bf16.msra.mxu0 0
    %2330 = vmatprep.subr.bf16.mxu0 0
    %2331 = vmatpush1.bf16.msra.mxu0 0
    %2332 = vmatprep.subr.bf16.mxu0 0
    %2333 = vmatpush1.bf16.msra.mxu0 0
    %2334 = vmatprep.subr.bf16.mxu0 0
    %2335 = vmatpush1.bf16.msra.mxu0 0
    %2336 = vmatprep.mubr.bf16.mxu0 0
    %2337 = vmatmul.mubr.bf16.gmra.mrb[0].mxu0 %v2238
    %v2338 = vpop.f32.mrb[0].mxu0
    %v2339 = vadd.f32 0.0, %v2338
    %v2340 = vpop.f32.mrb[0].mxu0
    %v2341 = vpop.f32.mrb[0].mxu0
    %v2342 = vpop.f32.mrb[0].mxu0
    %2343 = vdwg.mxu0
    %v2344 = vadd.f32 %v2192, %v2339
    %s2345 = scalar_lea.vmem [#allocation17], 3
    %v2346 = vld [vmem:[%s2345] sm:$0x1]
    %v2348 = vsel %vm1887, %v2346, 0
    %2350 = vmatprep.subr.bf16.mxu0 0
    %2351 = vmatpush1.bf16.msra.mxu0 %v1893
    %2352 = vmatprep.subr.bf16.mxu0 0
    %2353 = vmatpush1.bf16.msra.mxu0 0
    %2354 = vmatprep.subr.bf16.mxu0 0
    %2355 = vmatpush1.bf16.msra.mxu0 0
    %2356 = vmatprep.subr.bf16.mxu0 0
    %2357 = vmatpush1.bf16.msra.mxu0 0
    %2358 = vmatprep.subr.bf16.mxu0 0
    %2359 = vmatpush1.bf16.msra.mxu0 0
    %2360 = vmatprep.subr.bf16.mxu0 0
    %2361 = vmatpush1.bf16.msra.mxu0 0
    %2362 = vmatprep.subr.bf16.mxu0 0
    %2363 = vmatpush1.bf16.msra.mxu0 0
    %2364 = vmatprep.subr.bf16.mxu0 0
    %2365 = vmatpush1.bf16.msra.mxu0 0
    %2366 = vmatprep.subr.bf16.mxu0 0
    %2367 = vmatpush1.bf16.msra.mxu0 0
    %2368 = vmatprep.subr.bf16.mxu0 0
    %2369 = vmatpush1.bf16.msra.mxu0 0
    %2370 = vmatprep.subr.bf16.mxu0 0
    %2371 = vmatpush1.bf16.msra.mxu0 0
    %2372 = vmatprep.subr.bf16.mxu0 0
    %2373 = vmatpush1.bf16.msra.mxu0 0
    %2374 = vmatprep.subr.bf16.mxu0 0
    %2375 = vmatpush1.bf16.msra.mxu0 0
    %2376 = vmatprep.subr.bf16.mxu0 0
    %2377 = vmatpush1.bf16.msra.mxu0 0
    %2378 = vmatprep.subr.bf16.mxu0 0
    %2379 = vmatpush1.bf16.msra.mxu0 0
    %2380 = vmatprep.subr.bf16.mxu0 0
    %2381 = vmatpush1.bf16.msra.mxu0 0
    %2382 = vmatprep.mubr.bf16.mxu0 0
    %2383 = vmatmul.mubr.bf16.gmra.mrb[0].mxu0 %v2348
    %v2384 = vpop.f32.mrb[0].mxu0
    %v2385 = vadd.f32 0.0, %v2384
    %v2386 = vpop.f32.mrb[0].mxu0
    %v2387 = vpop.f32.mrb[0].mxu0
    %v2388 = vpop.f32.mrb[0].mxu0
    %2389 = vdwg.mxu0
    %v2390 = vpack.c.bf16 %v2385, %v2385
    %s2391 = scalar_lea.vmem %s23, 192
    %v2392 = vld [vmem:[%s2391] sm:$0xf]
    %v2393 = vld [vmem:[%s2391 + $0x4] sm:$0xf]
    %v2394 = vld [vmem:[%s2391 + $0x8] sm:$0xf]
    %v2395 = vld [vmem:[%s2391 + $0xc] sm:$0xf]
    %v2396 = vld [vmem:[%s2391 + $0x10] sm:$0xf]
    %v2397 = vld [vmem:[%s2391 + $0x14] sm:$0xf]
    %v2398 = vld [vmem:[%s2391 + $0x18] sm:$0xf]
    %v2399 = vld [vmem:[%s2391 + $0x1c] sm:$0xf]
    %v2400 = vld [vmem:[%s2391 + $0x20] sm:$0xf]
    %v2401 = vld [vmem:[%s2391 + $0x24] sm:$0xf]
    %v2402 = vld [vmem:[%s2391 + $0x28] sm:$0xf]
    %v2403 = vld [vmem:[%s2391 + $0x2c] sm:$0xf]
    %v2404 = vld [vmem:[%s2391 + $0x30] sm:$0xf]
    %v2405 = vld [vmem:[%s2391 + $0x34] sm:$0xf]
    %v2406 = vld [vmem:[%s2391 + $0x38] sm:$0xf]
    %v2407 = vld [vmem:[%s2391 + $0x3c] sm:$0xf]
    %v2424 = vunpack.c.l.b16 %v2392
    %v2425 = vunpack.c.l.b16 %v2393
    %v2426 = vunpack.c.l.b16 %v2394
    %v2427 = vunpack.c.l.b16 %v2395
    %v2428 = vunpack.c.l.b16 %v2396
    %v2429 = vunpack.c.l.b16 %v2397
    %v2430 = vunpack.c.l.b16 %v2398
    %v2431 = vunpack.c.l.b16 %v2399
    %v2432 = vunpack.c.l.b16 %v2400
    %v2433 = vunpack.c.l.b16 %v2401
    %v2434 = vunpack.c.l.b16 %v2402
    %v2435 = vunpack.c.l.b16 %v2403
    %v2436 = vunpack.c.l.b16 %v2404
    %v2437 = vunpack.c.l.b16 %v2405
    %v2438 = vunpack.c.l.b16 %v2406
    %v2439 = vunpack.c.l.b16 %v2407
    %v2440 = vpack.c.b16 %v2425, %v2424
    %v2441 = vpack.c.b16 %v2427, %v2426
    %v2442 = vpack.c.b16 %v2429, %v2428
    %v2443 = vpack.c.b16 %v2431, %v2430
    %v2444 = vpack.c.b16 %v2433, %v2432
    %v2445 = vpack.c.b16 %v2435, %v2434
    %v2446 = vpack.c.b16 %v2437, %v2436
    %v2447 = vpack.c.b16 %v2439, %v2438
    %2456 = vmatprep.subr.bf16.mxu0 0
    %2457 = vmatpush1.bf16.msra.mxu0 %v2440
    %2458 = vmatprep.subr.bf16.mxu0 0
    %2459 = vmatpush1.bf16.msra.mxu0 %v2441
    %2460 = vmatprep.subr.bf16.mxu0 0
    %2461 = vmatpush1.bf16.msra.mxu0 %v2442
    %2462 = vmatprep.subr.bf16.mxu0 0
    %2463 = vmatpush1.bf16.msra.mxu0 %v2443
    %2464 = vmatprep.subr.bf16.mxu0 0
    %2465 = vmatpush1.bf16.msra.mxu0 %v2444
    %2466 = vmatprep.subr.bf16.mxu0 0
    %2467 = vmatpush1.bf16.msra.mxu0 %v2445
    %2468 = vmatprep.subr.bf16.mxu0 0
    %2469 = vmatpush1.bf16.msra.mxu0 %v2446
    %2470 = vmatprep.subr.bf16.mxu0 0
    %2471 = vmatpush1.bf16.msra.mxu0 %v2447
    %2472 = vmatprep.subr.bf16.mxu0 0
    %2473 = vmatpush1.bf16.msra.mxu0 0
    %2474 = vmatprep.subr.bf16.mxu0 0
    %2475 = vmatpush1.bf16.msra.mxu0 0
    %2476 = vmatprep.subr.bf16.mxu0 0
    %2477 = vmatpush1.bf16.msra.mxu0 0
    %2478 = vmatprep.subr.bf16.mxu0 0
    %2479 = vmatpush1.bf16.msra.mxu0 0
    %2480 = vmatprep.subr.bf16.mxu0 0
    %2481 = vmatpush1.bf16.msra.mxu0 0
    %2482 = vmatprep.subr.bf16.mxu0 0
    %2483 = vmatpush1.bf16.msra.mxu0 0
    %2484 = vmatprep.subr.bf16.mxu0 0
    %2485 = vmatpush1.bf16.msra.mxu0 0
    %2486 = vmatprep.subr.bf16.mxu0 0
    %2487 = vmatpush1.bf16.msra.mxu0 0
    %2488 = vmatprep.mubr.bf16.mxu0 0
    %2489 = vmatmul.mubr.bf16.gmra.mrb[0].mxu0 %v2390
    %v2490 = vpop.f32.mrb[0].mxu0
    %v2491 = vadd.f32 0.0, %v2490
    %v2492 = vpop.f32.mrb[0].mxu0
    %v2493 = vpop.f32.mrb[0].mxu0
    %v2494 = vpop.f32.mrb[0].mxu0
    %2495 = vdwg.mxu0
    %v2496 = vadd.f32 %v2344, %v2491
    %vm2497 = vcmask 123904
    %2498 = vst.msk [vmem:[#allocation38] sm:$0x3] %vm2497, %v2496
    %2500 = vrot.lane.b32.xlu0 %v2496, 112
    %v2501 = vpop.permute.xlu0 %2500
    %2503 = vst.msk [vmem:[#allocation39] sm:$0x3] %vm2497, %v2501
    %v2504 = vld [vmem:[#allocation2] sm:$0x3]
    %v2505 = vmul.f32 %v2496, 0.5
    %v2506 = vmul.f32 %v2505, 1.442695
    %v2507 = vpow.pop %v2506
    %2509 = vrot.lane.b32.xlu0 %v2507, 112
    %v2510 = vpop.permute.xlu0 %2509
    %v2512 = vmul.f32 %v2504, %v2510
    %v2513 = vadd.f32 %v2496, %v2512
    %v2514 = vpack.c.bf16 %v2513, %v2513
    %v2515 = vld [vmem:[#allocation23] sm:$0xff]
    %v2516 = vld [vmem:[#allocation22] sm:$0xf]
    %vm2517 = vcmask 15360
    %v2519 = vsel %vm2517, %v2516, 0
    %vm2521 = vcmask 1040384
    %v2523 = vsel %vm2521, %v2514, 0
    %2525 = vmatprep.subr.bf16.mxu0 0
    %2526 = vmatpush1.bf16.msra.mxu0 %v2523
    %2527 = vmatprep.subr.bf16.mxu0 0
    %2528 = vmatpush1.bf16.msra.mxu0 0
    %2529 = vmatprep.subr.bf16.mxu0 0
    %2530 = vmatpush1.bf16.msra.mxu0 0
    %2531 = vmatprep.subr.bf16.mxu0 0
    %2532 = vmatpush1.bf16.msra.mxu0 0
    %2533 = vmatprep.subr.bf16.mxu0 0
    %2534 = vmatpush1.bf16.msra.mxu0 0
    %2535 = vmatprep.subr.bf16.mxu0 0
    %2536 = vmatpush1.bf16.msra.mxu0 0
    %2537 = vmatprep.subr.bf16.mxu0 0
    %2538 = vmatpush1.bf16.msra.mxu0 0
    %2539 = vmatprep.subr.bf16.mxu0 0
    %2540 = vmatpush1.bf16.msra.mxu0 0
    %2541 = vmatprep.subr.bf16.mxu0 0
    %2542 = vmatpush1.bf16.msra.mxu0 0
    %2543 = vmatprep.subr.bf16.mxu0 0
    %2544 = vmatpush1.bf16.msra.mxu0 0
    %2545 = vmatprep.subr.bf16.mxu0 0
    %2546 = vmatpush1.bf16.msra.mxu0 0
    %2547 = vmatprep.subr.bf16.mxu0 0
    %2548 = vmatpush1.bf16.msra.mxu0 0
    %2549 = vmatprep.subr.bf16.mxu0 0
    %2550 = vmatpush1.bf16.msra.mxu0 0
    %2551 = vmatprep.subr.bf16.mxu0 0
    %2552 = vmatpush1.bf16.msra.mxu0 0
    %2553 = vmatprep.subr.bf16.mxu0 0
    %2554 = vmatpush1.bf16.msra.mxu0 0
    %2555 = vmatprep.subr.bf16.mxu0 0
    %2556 = vmatpush1.bf16.msra.mxu0 0
    %2557 = vmatprep.mubr.bf16.mxu0 0
    %2558 = vmatmul.mubr.bf16.gmra.mrb[0].mxu0 %v2519
    %v2559 = vpop.f32.mrb[0].mxu0
    %v2560 = vadd.f32 0.0, %v2559
    %v2561 = vpop.f32.mrb[0].mxu0
    %v2562 = vpop.f32.mrb[0].mxu0
    %v2563 = vpop.f32.mrb[0].mxu0
    %2564 = vdwg.mxu0
    %v2565 = vpack.c.bf16 %v2560, %v2560
    %v2566 = vld [vmem:[#allocation20] sm:$0xf]
    %v2567 = vld [vmem:[#allocation20 + $0x4] sm:$0xf]
    %v2570 = vunpack.c.l.b16 %v2566
    %v2571 = vunpack.c.l.b16 %v2567
    %v2572 = vpack.c.b16 %v2571, %v2570
    %v2575 = vsel %vm1429, %v2565, 0
    %2577 = vmatprep.subr.bf16.mxu0 0
    %2578 = vmatpush1.bf16.msra.mxu0 %v2572
    %2579 = vmatprep.subr.bf16.mxu0 0
    %2580 = vmatpush1.bf16.msra.mxu0 0
    %2581 = vmatprep.subr.bf16.mxu0 0
    %2582 = vmatpush1.bf16.msra.mxu0 0
    %2583 = vmatprep.subr.bf16.mxu0 0
    %2584 = vmatpush1.bf16.msra.mxu0 0
    %2585 = vmatprep.subr.bf16.mxu0 0
    %2586 = vmatpush1.bf16.msra.mxu0 0
    %2587 = vmatprep.subr.bf16.mxu0 0
    %2588 = vmatpush1.bf16.msra.mxu0 0
    %2589 = vmatprep.subr.bf16.mxu0 0
    %2590 = vmatpush1.bf16.msra.mxu0 0
    %2591 = vmatprep.subr.bf16.mxu0 0
    %2592 = vmatpush1.bf16.msra.mxu0 0
    %2593 = vmatprep.subr.bf16.mxu0 0
    %2594 = vmatpush1.bf16.msra.mxu0 0
    %2595 = vmatprep.subr.bf16.mxu0 0
    %2596 = vmatpush1.bf16.msra.mxu0 0
    %2597 = vmatprep.subr.bf16.mxu0 0
    %2598 = vmatpush1.bf16.msra.mxu0 0
    %2599 = vmatprep.subr.bf16.mxu0 0
    %2600 = vmatpush1.bf16.msra.mxu0 0
    %2601 = vmatprep.subr.bf16.mxu0 0
    %2602 = vmatpush1.bf16.msra.mxu0 0
    %2603 = vmatprep.subr.bf16.mxu0 0
    %2604 = vmatpush1.bf16.msra.mxu0 0
    %2605 = vmatprep.subr.bf16.mxu0 0
    %2606 = vmatpush1.bf16.msra.mxu0 0
    %2607 = vmatprep.subr.bf16.mxu0 0
    %2608 = vmatpush1.bf16.msra.mxu0 0
    %2609 = vmatprep.mubr.bf16.mxu0 0
    %2610 = vmatmul.mubr.bf16.gmra.mrb[0].mxu0 %v2575
    %v2611 = vpop.f32.mrb[0].mxu0
    %v2612 = vadd.f32 0.0, %v2611
    %v2613 = vpop.f32.mrb[0].mxu0
    %v2614 = vpop.f32.mrb[0].mxu0
    %v2615 = vpop.f32.mrb[0].mxu0
    %2616 = vdwg.mxu0
    %v2617 = vadd.f32 %v2515, %v2612
    %s2618 = scalar_lea.vmem [#allocation22], 4
    %v2619 = vld [vmem:[%s2618] sm:$0xf]
    %v2621 = vsel %vm2517, %v2619, 0
    %2623 = vmatprep.subr.bf16.mxu0 0
    %2624 = vmatpush1.bf16.msra.mxu0 %v2523
    %2625 = vmatprep.subr.bf16.mxu0 0
    %2626 = vmatpush1.bf16.msra.mxu0 0
    %2627 = vmatprep.subr.bf16.mxu0 0
    %2628 = vmatpush1.bf16.msra.mxu0 0
    %2629 = vmatprep.subr.bf16.mxu0 0
    %2630 = vmatpush1.bf16.msra.mxu0 0
    %2631 = vmatprep.subr.bf16.mxu0 0
    %2632 = vmatpush1.bf16.msra.mxu0 0
    %2633 = vmatprep.subr.bf16.mxu0 0
    %2634 = vmatpush1.bf16.msra.mxu0 0
    %2635 = vmatprep.subr.bf16.mxu0 0
    %2636 = vmatpush1.bf16.msra.mxu0 0
    %2637 = vmatprep.subr.bf16.mxu0 0
    %2638 = vmatpush1.bf16.msra.mxu0 0
    %2639 = vmatprep.subr.bf16.mxu0 0
    %2640 = vmatpush1.bf16.msra.mxu0 0
    %2641 = vmatprep.subr.bf16.mxu0 0
    %2642 = vmatpush1.bf16.msra.mxu0 0
    %2643 = vmatprep.subr.bf16.mxu0 0
    %2644 = vmatpush1.bf16.msra.mxu0 0
    %2645 = vmatprep.subr.bf16.mxu0 0
    %2646 = vmatpush1.bf16.msra.mxu0 0
    %2647 = vmatprep.subr.bf16.mxu0 0
    %2648 = vmatpush1.bf16.msra.mxu0 0
    %2649 = vmatprep.subr.bf16.mxu0 0
    %2650 = vmatpush1.bf16.msra.mxu0 0
    %2651 = vmatprep.subr.bf16.mxu0 0
    %2652 = vmatpush1.bf16.msra.mxu0 0
    %2653 = vmatprep.subr.bf16.mxu0 0
    %2654 = vmatpush1.bf16.msra.mxu0 0
    %2655 = vmatprep.mubr.bf16.mxu0 0
    %2656 = vmatmul.mubr.bf16.gmra.mrb[0].mxu0 %v2621
    %v2657 = vpop.f32.mrb[0].mxu0
    %v2658 = vadd.f32 0.0, %v2657
    %v2659 = vpop.f32.mrb[0].mxu0
    %v2660 = vpop.f32.mrb[0].mxu0
    %v2661 = vpop.f32.mrb[0].mxu0
    %2662 = vdwg.mxu0
    %v2663 = vpack.c.bf16 %v2658, %v2658
    %s2664 = scalar_lea.vmem [#allocation20], 8
    %v2665 = vld [vmem:[%s2664] sm:$0xf]
    %v2666 = vld [vmem:[%s2664 + $0x4] sm:$0xf]
    %v2669 = vunpack.c.l.b16 %v2665
    %v2670 = vunpack.c.l.b16 %v2666
    %v2671 = vpack.c.b16 %v2670, %v2669
    %v2674 = vsel %vm1429, %v2663, 0
    %2676 = vmatprep.subr.bf16.mxu0 0
    %2677 = vmatpush1.bf16.msra.mxu0 %v2671
    %2678 = vmatprep.subr.bf16.mxu0 0
    %2679 = vmatpush1.bf16.msra.mxu0 0
    %2680 = vmatprep.subr.bf16.mxu0 0
    %2681 = vmatpush1.bf16.msra.mxu0 0
    %2682 = vmatprep.subr.bf16.mxu0 0
    %2683 = vmatpush1.bf16.msra.mxu0 0
    %2684 = vmatprep.subr.bf16.mxu0 0
    %2685 = vmatpush1.bf16.msra.mxu0 0
    %2686 = vmatprep.subr.bf16.mxu0 0
    %2687 = vmatpush1.bf16.msra.mxu0 0
    %2688 = vmatprep.subr.bf16.mxu0 0
    %2689 = vmatpush1.bf16.msra.mxu0 0
    %2690 = vmatprep.subr.bf16.mxu0 0
    %2691 = vmatpush1.bf16.msra.mxu0 0
    %2692 = vmatprep.subr.bf16.mxu0 0
    %2693 = vmatpush1.bf16.msra.mxu0 0
    %2694 = vmatprep.subr.bf16.mxu0 0
    %2695 = vmatpush1.bf16.msra.mxu0 0
    %2696 = vmatprep.subr.bf16.mxu0 0
    %2697 = vmatpush1.bf16.msra.mxu0 0
    %2698 = vmatprep.subr.bf16.mxu0 0
    %2699 = vmatpush1.bf16.msra.mxu0 0
    %2700 = vmatprep.subr.bf16.mxu0 0
    %2701 = vmatpush1.bf16.msra.mxu0 0
    %2702 = vmatprep.subr.bf16.mxu0 0
    %2703 = vmatpush1.bf16.msra.mxu0 0
    %2704 = vmatprep.subr.bf16.mxu0 0
    %2705 = vmatpush1.bf16.msra.mxu0 0
    %2706 = vmatprep.subr.bf16.mxu0 0
    %2707 = vmatpush1.bf16.msra.mxu0 0
    %2708 = vmatprep.mubr.bf16.mxu0 0
    %2709 = vmatmul.mubr.bf16.gmra.mrb[0].mxu0 %v2674
    %v2710 = vpop.f32.mrb[0].mxu0
    %v2711 = vadd.f32 0.0, %v2710
    %v2712 = vpop.f32.mrb[0].mxu0
    %v2713 = vpop.f32.mrb[0].mxu0
    %v2714 = vpop.f32.mrb[0].mxu0
    %2715 = vdwg.mxu0
    %v2716 = vadd.f32 %v2617, %v2711
    %s2717 = scalar_lea.vmem [#allocation22], 8
    %v2718 = vld [vmem:[%s2717] sm:$0xf]
    %v2720 = vsel %vm2517, %v2718, 0
    %2722 = vmatprep.subr.bf16.mxu0 0
    %2723 = vmatpush1.bf16.msra.mxu0 %v2523
    %2724 = vmatprep.subr.bf16.mxu0 0
    %2725 = vmatpush1.bf16.msra.mxu0 0
    %2726 = vmatprep.subr.bf16.mxu0 0
    %2727 = vmatpush1.bf16.msra.mxu0 0
    %2728 = vmatprep.subr.bf16.mxu0 0
    %2729 = vmatpush1.bf16.msra.mxu0 0
    %2730 = vmatprep.subr.bf16.mxu0 0
    %2731 = vmatpush1.bf16.msra.mxu0 0
    %2732 = vmatprep.subr.bf16.mxu0 0
    %2733 = vmatpush1.bf16.msra.mxu0 0
    %2734 = vmatprep.subr.bf16.mxu0 0
    %2735 = vmatpush1.bf16.msra.mxu0 0
    %2736 = vmatprep.subr.bf16.mxu0 0
    %2737 = vmatpush1.bf16.msra.mxu0 0
    %2738 = vmatprep.subr.bf16.mxu0 0
    %2739 = vmatpush1.bf16.msra.mxu0 0
    %2740 = vmatprep.subr.bf16.mxu0 0
    %2741 = vmatpush1.bf16.msra.mxu0 0
    %2742 = vmatprep.subr.bf16.mxu0 0
    %2743 = vmatpush1.bf16.msra.mxu0 0
    %2744 = vmatprep.subr.bf16.mxu0 0
    %2745 = vmatpush1.bf16.msra.mxu0 0
    %2746 = vmatprep.subr.bf16.mxu0 0
    %2747 = vmatpush1.bf16.msra.mxu0 0
    %2748 = vmatprep.subr.bf16.mxu0 0
    %2749 = vmatpush1.bf16.msra.mxu0 0
    %2750 = vmatprep.subr.bf16.mxu0 0
    %2751 = vmatpush1.bf16.msra.mxu0 0
    %2752 = vmatprep.subr.bf16.mxu0 0
    %2753 = vmatpush1.bf16.msra.mxu0 0
    %2754 = vmatprep.mubr.bf16.mxu0 0
    %2755 = vmatmul.mubr.bf16.gmra.mrb[0].mxu0 %v2720
    %v2756 = vpop.f32.mrb[0].mxu0
    %v2757 = vadd.f32 0.0, %v2756
    %v2758 = vpop.f32.mrb[0].mxu0
    %v2759 = vpop.f32.mrb[0].mxu0
    %v2760 = vpop.f32.mrb[0].mxu0
    %2761 = vdwg.mxu0
    %v2762 = vpack.c.bf16 %v2757, %v2757
    %s2763 = scalar_lea.vmem [#allocation20], 16
    %v2764 = vld [vmem:[%s2763] sm:$0xf]
    %v2765 = vld [vmem:[%s2763 + $0x4] sm:$0xf]
    %v2768 = vunpack.c.l.b16 %v2764
    %v2769 = vunpack.c.l.b16 %v2765
    %v2770 = vpack.c.b16 %v2769, %v2768
    %v2773 = vsel %vm1429, %v2762, 0
    %2775 = vmatprep.subr.bf16.mxu0 0
    %2776 = vmatpush1.bf16.msra.mxu0 %v2770
    %2777 = vmatprep.subr.bf16.mxu0 0
    %2778 = vmatpush1.bf16.msra.mxu0 0
    %2779 = vmatprep.subr.bf16.mxu0 0
    %2780 = vmatpush1.bf16.msra.mxu0 0
    %2781 = vmatprep.subr.bf16.mxu0 0
    %2782 = vmatpush1.bf16.msra.mxu0 0
    %2783 = vmatprep.subr.bf16.mxu0 0
    %2784 = vmatpush1.bf16.msra.mxu0 0
    %2785 = vmatprep.subr.bf16.mxu0 0
    %2786 = vmatpush1.bf16.msra.mxu0 0
    %2787 = vmatprep.subr.bf16.mxu0 0
    %2788 = vmatpush1.bf16.msra.mxu0 0
    %2789 = vmatprep.subr.bf16.mxu0 0
    %2790 = vmatpush1.bf16.msra.mxu0 0
    %2791 = vmatprep.subr.bf16.mxu0 0
    %2792 = vmatpush1.bf16.msra.mxu0 0
    %2793 = vmatprep.subr.bf16.mxu0 0
    %2794 = vmatpush1.bf16.msra.mxu0 0
    %2795 = vmatprep.subr.bf16.mxu0 0
    %2796 = vmatpush1.bf16.msra.mxu0 0
    %2797 = vmatprep.subr.bf16.mxu0 0
    %2798 = vmatpush1.bf16.msra.mxu0 0
    %2799 = vmatprep.subr.bf16.mxu0 0
    %2800 = vmatpush1.bf16.msra.mxu0 0
    %2801 = vmatprep.subr.bf16.mxu0 0
    %2802 = vmatpush1.bf16.msra.mxu0 0
    %2803 = vmatprep.subr.bf16.mxu0 0
    %2804 = vmatpush1.bf16.msra.mxu0 0
    %2805 = vmatprep.subr.bf16.mxu0 0
    %2806 = vmatpush1.bf16.msra.mxu0 0
    %2807 = vmatprep.mubr.bf16.mxu0 0
    %2808 = vmatmul.mubr.bf16.gmra.mrb[0].mxu0 %v2773
    %v2809 = vpop.f32.mrb[0].mxu0
    %v2810 = vadd.f32 0.0, %v2809
    %v2811 = vpop.f32.mrb[0].mxu0
    %v2812 = vpop.f32.mrb[0].mxu0
    %v2813 = vpop.f32.mrb[0].mxu0
    %2814 = vdwg.mxu0
    %v2815 = vadd.f32 %v2716, %v2810
    %s2816 = scalar_lea.vmem [#allocation22], 12
    %v2817 = vld [vmem:[%s2816] sm:$0xf]
    %v2819 = vsel %vm2517, %v2817, 0
    %2821 = vmatprep.subr.bf16.mxu0 0
    %2822 = vmatpush1.bf16.msra.mxu0 %v2523
    %2823 = vmatprep.subr.bf16.mxu0 0
    %2824 = vmatpush1.bf16.msra.mxu0 0
    %2825 = vmatprep.subr.bf16.mxu0 0
    %2826 = vmatpush1.bf16.msra.mxu0 0
    %2827 = vmatprep.subr.bf16.mxu0 0
    %2828 = vmatpush1.bf16.msra.mxu0 0
    %2829 = vmatprep.subr.bf16.mxu0 0
    %2830 = vmatpush1.bf16.msra.mxu0 0
    %2831 = vmatprep.subr.bf16.mxu0 0
    %2832 = vmatpush1.bf16.msra.mxu0 0
    %2833 = vmatprep.subr.bf16.mxu0 0
    %2834 = vmatpush1.bf16.msra.mxu0 0
    %2835 = vmatprep.subr.bf16.mxu0 0
    %2836 = vmatpush1.bf16.msra.mxu0 0
    %2837 = vmatprep.subr.bf16.mxu0 0
    %2838 = vmatpush1.bf16.msra.mxu0 0
    %2839 = vmatprep.subr.bf16.mxu0 0
    %2840 = vmatpush1.bf16.msra.mxu0 0
    %2841 = vmatprep.subr.bf16.mxu0 0
    %2842 = vmatpush1.bf16.msra.mxu0 0
    %2843 = vmatprep.subr.bf16.mxu0 0
    %2844 = vmatpush1.bf16.msra.mxu0 0
    %2845 = vmatprep.subr.bf16.mxu0 0
    %2846 = vmatpush1.bf16.msra.mxu0 0
    %2847 = vmatprep.subr.bf16.mxu0 0
    %2848 = vmatpush1.bf16.msra.mxu0 0
    %2849 = vmatprep.subr.bf16.mxu0 0
    %2850 = vmatpush1.bf16.msra.mxu0 0
    %2851 = vmatprep.subr.bf16.mxu0 0
    %2852 = vmatpush1.bf16.msra.mxu0 0
    %2853 = vmatprep.mubr.bf16.mxu0 0
    %2854 = vmatmul.mubr.bf16.gmra.mrb[0].mxu0 %v2819
    %v2855 = vpop.f32.mrb[0].mxu0
    %v2856 = vadd.f32 0.0, %v2855
    %v2857 = vpop.f32.mrb[0].mxu0
    %v2858 = vpop.f32.mrb[0].mxu0
    %v2859 = vpop.f32.mrb[0].mxu0
    %2860 = vdwg.mxu0
    %v2861 = vpack.c.bf16 %v2856, %v2856
    %s2862 = scalar_lea.vmem [#allocation20], 24
    %v2863 = vld [vmem:[%s2862] sm:$0xf]
    %v2864 = vld [vmem:[%s2862 + $0x4] sm:$0xf]
    %v2867 = vunpack.c.l.b16 %v2863
    %v2868 = vunpack.c.l.b16 %v2864
    %v2869 = vpack.c.b16 %v2868, %v2867
    %v2872 = vsel %vm1429, %v2861, 0
    %2874 = vmatprep.subr.bf16.mxu0 0
    %2875 = vmatpush1.bf16.msra.mxu0 %v2869
    %2876 = vmatprep.subr.bf16.mxu0 0
    %2877 = vmatpush1.bf16.msra.mxu0 0
    %2878 = vmatprep.subr.bf16.mxu0 0
    %2879 = vmatpush1.bf16.msra.mxu0 0
    %2880 = vmatprep.subr.bf16.mxu0 0
    %2881 = vmatpush1.bf16.msra.mxu0 0
    %2882 = vmatprep.subr.bf16.mxu0 0
    %2883 = vmatpush1.bf16.msra.mxu0 0
    %2884 = vmatprep.subr.bf16.mxu0 0
    %2885 = vmatpush1.bf16.msra.mxu0 0
    %2886 = vmatprep.subr.bf16.mxu0 0
    %2887 = vmatpush1.bf16.msra.mxu0 0
    %2888 = vmatprep.subr.bf16.mxu0 0
    %2889 = vmatpush1.bf16.msra.mxu0 0
    %2890 = vmatprep.subr.bf16.mxu0 0
    %2891 = vmatpush1.bf16.msra.mxu0 0
    %2892 = vmatprep.subr.bf16.mxu0 0
    %2893 = vmatpush1.bf16.msra.mxu0 0
    %2894 = vmatprep.subr.bf16.mxu0 0
    %2895 = vmatpush1.bf16.msra.mxu0 0
    %2896 = vmatprep.subr.bf16.mxu0 0
    %2897 = vmatpush1.bf16.msra.mxu0 0
    %2898 = vmatprep.subr.bf16.mxu0 0
    %2899 = vmatpush1.bf16.msra.mxu0 0
    %2900 = vmatprep.subr.bf16.mxu0 0
    %2901 = vmatpush1.bf16.msra.mxu0 0
    %2902 = vmatprep.subr.bf16.mxu0 0
    %2903 = vmatpush1.bf16.msra.mxu0 0
    %2904 = vmatprep.subr.bf16.mxu0 0
    %2905 = vmatpush1.bf16.msra.mxu0 0
    %2906 = vmatprep.mubr.bf16.mxu0 0
    %2907 = vmatmul.mubr.bf16.gmra.mrb[0].mxu0 %v2872
    %v2908 = vpop.f32.mrb[0].mxu0
    %v2909 = vadd.f32 0.0, %v2908
    %v2910 = vpop.f32.mrb[0].mxu0
    %v2911 = vpop.f32.mrb[0].mxu0
    %v2912 = vpop.f32.mrb[0].mxu0
    %2913 = vdwg.mxu0
    %v2914 = vadd.f32 %v2815, %v2909
    %v2915 = vpack.c.bf16 %v2914, %v2914
    %v2916 = vld [vmem:[#allocation26] sm:$0xff]
    %v2917 = vld [vmem:[#allocation26 + $0x8] sm:$0xff]
    %v2918 = vld [vmem:[%s37] sm:$0xf]
    %v2919 = vld [vmem:[%s37 + $0x4] sm:$0xf]
    %v2922 = vunpack.c.l.b16 %v2918
    %v2923 = vunpack.c.l.b16 %v2919
    %v2924 = vpack.c.b16 %v2923, %v2922
    %v2926 = vsel %vm1887, %v2924, 0
    %v2929 = vsel %vm1891, %v2915, 0
    %2931 = vmatprep.subr.bf16.mxu0 0
    %2932 = vmatpush1.bf16.msra.mxu0 %v2929
    %2933 = vmatprep.subr.bf16.mxu0 0
    %2934 = vmatpush1.bf16.msra.mxu0 0
    %2935 = vmatprep.subr.bf16.mxu0 0
    %2936 = vmatpush1.bf16.msra.mxu0 0
    %2937 = vmatprep.subr.bf16.mxu0 0
    %2938 = vmatpush1.bf16.msra.mxu0 0
    %2939 = vmatprep.subr.bf16.mxu0 0
    %2940 = vmatpush1.bf16.msra.mxu0 0
    %2941 = vmatprep.subr.bf16.mxu0 0
    %2942 = vmatpush1.bf16.msra.mxu0 0
    %2943 = vmatprep.subr.bf16.mxu0 0
    %2944 = vmatpush1.bf16.msra.mxu0 0
    %2945 = vmatprep.subr.bf16.mxu0 0
    %2946 = vmatpush1.bf16.msra.mxu0 0
    %2947 = vmatprep.subr.bf16.mxu0 0
    %2948 = vmatpush1.bf16.msra.mxu0 0
    %2949 = vmatprep.subr.bf16.mxu0 0
    %2950 = vmatpush1.bf16.msra.mxu0 0
    %2951 = vmatprep.subr.bf16.mxu0 0
    %2952 = vmatpush1.bf16.msra.mxu0 0
    %2953 = vmatprep.subr.bf16.mxu0 0
    %2954 = vmatpush1.bf16.msra.mxu0 0
    %2955 = vmatprep.subr.bf16.mxu0 0
    %2956 = vmatpush1.bf16.msra.mxu0 0
    %2957 = vmatprep.subr.bf16.mxu0 0
    %2958 = vmatpush1.bf16.msra.mxu0 0
    %2959 = vmatprep.subr.bf16.mxu0 0
    %2960 = vmatpush1.bf16.msra.mxu0 0
    %2961 = vmatprep.subr.bf16.mxu0 0
    %2962 = vmatpush1.bf16.msra.mxu0 0
    %2963 = vmatprep.mubr.bf16.mxu0 0
    %2964 = vmatmul.mubr.bf16.gmra.mrb[0].mxu0 %v2926
    %v2965 = vpop.f32.mrb[0].mxu0
    %v2966 = vadd.f32 0.0, %v2965
    %v2967 = vpop.f32.mrb[0].mxu0
    %v2968 = vpop.f32.mrb[0].mxu0
    %v2969 = vadd.f32 0.0, %v2968
    %v2970 = vpop.f32.mrb[0].mxu0
    %2971 = vdwg.mxu0
    %v2972 = vpack.c.bf16 %v2969, %v2966
    %v2973 = vld [vmem:[#allocation25] sm:$0xf]
    %v2974 = vld [vmem:[#allocation25 + $0x4] sm:$0xf]
    %v2975 = vld [vmem:[#allocation25 + $0x8] sm:$0xf]
    %v2976 = vld [vmem:[#allocation25 + $0xc] sm:$0xf]
    %v2977 = vld [vmem:[#allocation25 + $0x10] sm:$0xf]
    %v2978 = vld [vmem:[#allocation25 + $0x14] sm:$0xf]
    %v2979 = vld [vmem:[#allocation25 + $0x18] sm:$0xf]
    %v2980 = vld [vmem:[#allocation25 + $0x1c] sm:$0xf]
    %v2981 = vld [vmem:[#allocation25 + $0x20] sm:$0xf]
    %v2982 = vld [vmem:[#allocation25 + $0x24] sm:$0xf]
    %v2983 = vld [vmem:[#allocation25 + $0x28] sm:$0xf]
    %v2984 = vld [vmem:[#allocation25 + $0x2c] sm:$0xf]
    %v2985 = vld [vmem:[#allocation25 + $0x30] sm:$0xf]
    %v2986 = vld [vmem:[#allocation25 + $0x34] sm:$0xf]
    %v2987 = vld [vmem:[#allocation25 + $0x38] sm:$0xf]
    %v2988 = vld [vmem:[#allocation25 + $0x3c] sm:$0xf]
    %v3005 = vunpack.c.l.b16 %v2973
    %v3006 = vunpack.c.l.b16 %v2974
    %v3007 = vunpack.c.l.b16 %v2975
    %v3008 = vunpack.c.l.b16 %v2976
    %v3009 = vunpack.c.l.b16 %v2977
    %v3010 = vunpack.c.l.b16 %v2978
    %v3011 = vunpack.c.l.b16 %v2979
    %v3012 = vunpack.c.l.b16 %v2980
    %v3013 = vunpack.c.l.b16 %v2981
    %v3014 = vunpack.c.l.b16 %v2982
    %v3015 = vunpack.c.l.b16 %v2983
    %v3016 = vunpack.c.l.b16 %v2984
    %v3017 = vunpack.c.l.b16 %v2985
    %v3018 = vunpack.c.l.b16 %v2986
    %v3019 = vunpack.c.l.b16 %v2987
    %v3020 = vunpack.c.l.b16 %v2988
    %v3021 = vpack.c.b16 %v3006, %v3005
    %v3022 = vpack.c.b16 %v3008, %v3007
    %v3023 = vpack.c.b16 %v3010, %v3009
    %v3024 = vpack.c.b16 %v3012, %v3011
    %v3025 = vpack.c.b16 %v3014, %v3013
    %v3026 = vpack.c.b16 %v3016, %v3015
    %v3027 = vpack.c.b16 %v3018, %v3017
    %v3028 = vpack.c.b16 %v3020, %v3019
    %3037 = vmatprep.subr.bf16.mxu0 0
    %3038 = vmatpush1.bf16.msra.mxu0 %v3021
    %3039 = vmatprep.subr.bf16.mxu0 0
    %3040 = vmatpush1.bf16.msra.mxu0 %v3022
    %3041 = vmatprep.subr.bf16.mxu0 0
    %3042 = vmatpush1.bf16.msra.mxu0 %v3023
    %3043 = vmatprep.subr.bf16.mxu0 0
    %3044 = vmatpush1.bf16.msra.mxu0 %v3024
    %3045 = vmatprep.subr.bf16.mxu0 0
    %3046 = vmatpush1.bf16.msra.mxu0 %v3025
    %3047 = vmatprep.subr.bf16.mxu0 0
    %3048 = vmatpush1.bf16.msra.mxu0 %v3026
    %3049 = vmatprep.subr.bf16.mxu0 0
    %3050 = vmatpush1.bf16.msra.mxu0 %v3027
    %3051 = vmatprep.subr.bf16.mxu0 0
    %3052 = vmatpush1.bf16.msra.mxu0 %v3028
    %3053 = vmatprep.subr.bf16.mxu0 0
    %3054 = vmatpush1.bf16.msra.mxu0 0
    %3055 = vmatprep.subr.bf16.mxu0 0
    %3056 = vmatpush1.bf16.msra.mxu0 0
    %3057 = vmatprep.subr.bf16.mxu0 0
    %3058 = vmatpush1.bf16.msra.mxu0 0
    %3059 = vmatprep.subr.bf16.mxu0 0
    %3060 = vmatpush1.bf16.msra.mxu0 0
    %3061 = vmatprep.subr.bf16.mxu0 0
    %3062 = vmatpush1.bf16.msra.mxu0 0
    %3063 = vmatprep.subr.bf16.mxu0 0
    %3064 = vmatpush1.bf16.msra.mxu0 0
    %3065 = vmatprep.subr.bf16.mxu0 0
    %3066 = vmatpush1.bf16.msra.mxu0 0
    %3067 = vmatprep.subr.bf16.mxu0 0
    %3068 = vmatpush1.bf16.msra.mxu0 0
    %3069 = vmatprep.mubr.bf16.mxu0 0
    %3070 = vmatmul.mubr.bf16.gmra.mrb[0].mxu0 %v2972
    %v3071 = vpop.f32.mrb[0].mxu0
    %v3072 = vadd.f32 0.0, %v3071
    %v3073 = vpop.f32.mrb[0].mxu0
    %v3074 = vpop.f32.mrb[0].mxu0
    %v3075 = vadd.f32 0.0, %v3074
    %v3076 = vpop.f32.mrb[0].mxu0
    %3077 = vdwg.mxu0
    %v3078 = vadd.f32 %v2916, %v3072
    %v3079 = vadd.f32 %v2917, %v3075
    %s3080 = scalar_lea.vmem %s37, 8
    %v3081 = vld [vmem:[%s3080] sm:$0xf]
    %v3082 = vld [vmem:[%s3080 + $0x4] sm:$0xf]
    %v3085 = vunpack.c.l.b16 %v3081
    %v3086 = vunpack.c.l.b16 %v3082
    %v3087 = vpack.c.b16 %v3086, %v3085
    %v3089 = vsel %vm1887, %v3087, 0
    %3091 = vmatprep.subr.bf16.mxu0 0
    %3092 = vmatpush1.bf16.msra.mxu0 %v2929
    %3093 = vmatprep.subr.bf16.mxu0 0
    %3094 = vmatpush1.bf16.msra.mxu0 0
    %3095 = vmatprep.subr.bf16.mxu0 0
    %3096 = vmatpush1.bf16.msra.mxu0 0
    %3097 = vmatprep.subr.bf16.mxu0 0
    %3098 = vmatpush1.bf16.msra.mxu0 0
    %3099 = vmatprep.subr.bf16.mxu0 0
    %3100 = vmatpush1.bf16.msra.mxu0 0
    %3101 = vmatprep.subr.bf16.mxu0 0
    %3102 = vmatpush1.bf16.msra.mxu0 0
    %3103 = vmatprep.subr.bf16.mxu0 0
    %3104 = vmatpush1.bf16.msra.mxu0 0
    %3105 = vmatprep.subr.bf16.mxu0 0
    %3106 = vmatpush1.bf16.msra.mxu0 0
    %3107 = vmatprep.subr.bf16.mxu0 0
    %3108 = vmatpush1.bf16.msra.mxu0 0
    %3109 = vmatprep.subr.bf16.mxu0 0
    %3110 = vmatpush1.bf16.msra.mxu0 0
    %3111 = vmatprep.subr.bf16.mxu0 0
    %3112 = vmatpush1.bf16.msra.mxu0 0
    %3113 = vmatprep.subr.bf16.mxu0 0
    %3114 = vmatpush1.bf16.msra.mxu0 0
    %3115 = vmatprep.subr.bf16.mxu0 0
    %3116 = vmatpush1.bf16.msra.mxu0 0
    %3117 = vmatprep.subr.bf16.mxu0 0
    %3118 = vmatpush1.bf16.msra.mxu0 0
    %3119 = vmatprep.subr.bf16.mxu0 0
    %3120 = vmatpush1.bf16.msra.mxu0 0
    %3121 = vmatprep.subr.bf16.mxu0 0
    %3122 = vmatpush1.bf16.msra.mxu0 0
    %3123 = vmatprep.mubr.bf16.mxu0 0
    %3124 = vmatmul.mubr.bf16.gmra.mrb[0].mxu0 %v3089
    %v3125 = vpop.f32.mrb[0].mxu0
    %v3126 = vadd.f32 0.0, %v3125
    %v3127 = vpop.f32.mrb[0].mxu0
    %v3128 = vpop.f32.mrb[0].mxu0
    %v3129 = vadd.f32 0.0, %v3128
    %v3130 = vpop.f32.mrb[0].mxu0
    %3131 = vdwg.mxu0
    %v3132 = vpack.c.bf16 %v3129, %v3126
    %s3133 = scalar_lea.vmem [#allocation25], 64
    %v3134 = vld [vmem:[%s3133] sm:$0xf]
    %v3135 = vld [vmem:[%s3133 + $0x4] sm:$0xf]
    %v3136 = vld [vmem:[%s3133 + $0x8] sm:$0xf]
    %v3137 = vld [vmem:[%s3133 + $0xc] sm:$0xf]
    %v3138 = vld [vmem:[%s3133 + $0x10] sm:$0xf]
    %v3139 = vld [vmem:[%s3133 + $0x14] sm:$0xf]
    %v3140 = vld [vmem:[%s3133 + $0x18] sm:$0xf]
    %v3141 = vld [vmem:[%s3133 + $0x1c] sm:$0xf]
    %v3142 = vld [vmem:[%s3133 + $0x20] sm:$0xf]
    %v3143 = vld [vmem:[%s3133 + $0x24] sm:$0xf]
    %v3144 = vld [vmem:[%s3133 + $0x28] sm:$0xf]
    %v3145 = vld [vmem:[%s3133 + $0x2c] sm:$0xf]
    %v3146 = vld [vmem:[%s3133 + $0x30] sm:$0xf]
    %v3147 = vld [vmem:[%s3133 + $0x34] sm:$0xf]
    %v3148 = vld [vmem:[%s3133 + $0x38] sm:$0xf]
    %v3149 = vld [vmem:[%s3133 + $0x3c] sm:$0xf]
    %v3166 = vunpack.c.l.b16 %v3134
    %v3167 = vunpack.c.l.b16 %v3135
    %v3168 = vunpack.c.l.b16 %v3136
    %v3169 = vunpack.c.l.b16 %v3137
    %v3170 = vunpack.c.l.b16 %v3138
    %v3171 = vunpack.c.l.b16 %v3139
    %v3172 = vunpack.c.l.b16 %v3140
    %v3173 = vunpack.c.l.b16 %v3141
    %v3174 = vunpack.c.l.b16 %v3142
    %v3175 = vunpack.c.l.b16 %v3143
    %v3176 = vunpack.c.l.b16 %v3144
    %v3177 = vunpack.c.l.b16 %v3145
    %v3178 = vunpack.c.l.b16 %v3146
    %v3179 = vunpack.c.l.b16 %v3147
    %v3180 = vunpack.c.l.b16 %v3148
    %v3181 = vunpack.c.l.b16 %v3149
    %v3182 = vpack.c.b16 %v3167, %v3166
    %v3183 = vpack.c.b16 %v3169, %v3168
    %v3184 = vpack.c.b16 %v3171, %v3170
    %v3185 = vpack.c.b16 %v3173, %v3172
    %v3186 = vpack.c.b16 %v3175, %v3174
    %v3187 = vpack.c.b16 %v3177, %v3176
    %v3188 = vpack.c.b16 %v3179, %v3178
    %v3189 = vpack.c.b16 %v3181, %v3180
    %3198 = vmatprep.subr.bf16.mxu0 0
    %3199 = vmatpush1.bf16.msra.mxu0 %v3182
    %3200 = vmatprep.subr.bf16.mxu0 0
    %3201 = vmatpush1.bf16.msra.mxu0 %v3183
    %3202 = vmatprep.subr.bf16.mxu0 0
    %3203 = vmatpush1.bf16.msra.mxu0 %v3184
    %3204 = vmatprep.subr.bf16.mxu0 0
    %3205 = vmatpush1.bf16.msra.mxu0 %v3185
    %3206 = vmatprep.subr.bf16.mxu0 0
    %3207 = vmatpush1.bf16.msra.mxu0 %v3186
    %3208 = vmatprep.subr.bf16.mxu0 0
    %3209 = vmatpush1.bf16.msra.mxu0 %v3187
    %3210 = vmatprep.subr.bf16.mxu0 0
    %3211 = vmatpush1.bf16.msra.mxu0 %v3188
    %3212 = vmatprep.subr.bf16.mxu0 0
    %3213 = vmatpush1.bf16.msra.mxu0 %v3189
    %3214 = vmatprep.subr.bf16.mxu0 0
    %3215 = vmatpush1.bf16.msra.mxu0 0
    %3216 = vmatprep.subr.bf16.mxu0 0
    %3217 = vmatpush1.bf16.msra.mxu0 0
    %3218 = vmatprep.subr.bf16.mxu0 0
    %3219 = vmatpush1.bf16.msra.mxu0 0
    %3220 = vmatprep.subr.bf16.mxu0 0
    %3221 = vmatpush1.bf16.msra.mxu0 0
    %3222 = vmatprep.subr.bf16.mxu0 0
    %3223 = vmatpush1.bf16.msra.mxu0 0
    %3224 = vmatprep.subr.bf16.mxu0 0
    %3225 = vmatpush1.bf16.msra.mxu0 0
    %3226 = vmatprep.subr.bf16.mxu0 0
    %3227 = vmatpush1.bf16.msra.mxu0 0
    %3228 = vmatprep.subr.bf16.mxu0 0
    %3229 = vmatpush1.bf16.msra.mxu0 0
    %3230 = vmatprep.mubr.bf16.mxu0 0
    %3231 = vmatmul.mubr.bf16.gmra.mrb[0].mxu0 %v3132
    %v3232 = vpop.f32.mrb[0].mxu0
    %v3233 = vadd.f32 0.0, %v3232
    %v3234 = vpop.f32.mrb[0].mxu0
    %v3235 = vpop.f32.mrb[0].mxu0
    %v3236 = vadd.f32 0.0, %v3235
    %v3237 = vpop.f32.mrb[0].mxu0
    %3238 = vdwg.mxu0
    %v3239 = vadd.f32 %v3078, %v3233
    %v3240 = vadd.f32 %v3079, %v3236
    %s3241 = scalar_lea.vmem %s37, 16
    %v3242 = vld [vmem:[%s3241] sm:$0xf]
    %v3243 = vld [vmem:[%s3241 + $0x4] sm:$0xf]
    %v3246 = vunpack.c.l.b16 %v3242
    %v3247 = vunpack.c.l.b16 %v3243
    %v3248 = vpack.c.b16 %v3247, %v3246
    %v3250 = vsel %vm1887, %v3248, 0
    %3252 = vmatprep.subr.bf16.mxu0 0
    %3253 = vmatpush1.bf16.msra.mxu0 %v2929
    %3254 = vmatprep.subr.bf16.mxu0 0
    %3255 = vmatpush1.bf16.msra.mxu0 0
    %3256 = vmatprep.subr.bf16.mxu0 0
    %3257 = vmatpush1.bf16.msra.mxu0 0
    %3258 = vmatprep.subr.bf16.mxu0 0
    %3259 = vmatpush1.bf16.msra.mxu0 0
    %3260 = vmatprep.subr.bf16.mxu0 0
    %3261 = vmatpush1.bf16.msra.mxu0 0
    %3262 = vmatprep.subr.bf16.mxu0 0
    %3263 = vmatpush1.bf16.msra.mxu0 0
    %3264 = vmatprep.subr.bf16.mxu0 0
    %3265 = vmatpush1.bf16.msra.mxu0 0
    %3266 = vmatprep.subr.bf16.mxu0 0
    %3267 = vmatpush1.bf16.msra.mxu0 0
    %3268 = vmatprep.subr.bf16.mxu0 0
    %3269 = vmatpush1.bf16.msra.mxu0 0
    %3270 = vmatprep.subr.bf16.mxu0 0
    %3271 = vmatpush1.bf16.msra.mxu0 0
    %3272 = vmatprep.subr.bf16.mxu0 0
    %3273 = vmatpush1.bf16.msra.mxu0 0
    %3274 = vmatprep.subr.bf16.mxu0 0
    %3275 = vmatpush1.bf16.msra.mxu0 0
    %3276 = vmatprep.subr.bf16.mxu0 0
    %3277 = vmatpush1.bf16.msra.mxu0 0
    %3278 = vmatprep.subr.bf16.mxu0 0
    %3279 = vmatpush1.bf16.msra.mxu0 0
    %3280 = vmatprep.subr.bf16.mxu0 0
    %3281 = vmatpush1.bf16.msra.mxu0 0
    %3282 = vmatprep.subr.bf16.mxu0 0
    %3283 = vmatpush1.bf16.msra.mxu0 0
    %3284 = vmatprep.mubr.bf16.mxu0 0
    %3285 = vmatmul.mubr.bf16.gmra.mrb[0].mxu0 %v3250
    %v3286 = vpop.f32.mrb[0].mxu0
    %v3287 = vadd.f32 0.0, %v3286
    %v3288 = vpop.f32.mrb[0].mxu0
    %v3289 = vpop.f32.mrb[0].mxu0
    %v3290 = vadd.f32 0.0, %v3289
    %v3291 = vpop.f32.mrb[0].mxu0
    %3292 = vdwg.mxu0
    %v3293 = vpack.c.bf16 %v3290, %v3287
    %s3294 = scalar_lea.vmem [#allocation25], 128
    %v3295 = vld [vmem:[%s3294] sm:$0xf]
    %v3296 = vld [vmem:[%s3294 + $0x4] sm:$0xf]
    %v3297 = vld [vmem:[%s3294 + $0x8] sm:$0xf]
    %v3298 = vld [vmem:[%s3294 + $0xc] sm:$0xf]
    %v3299 = vld [vmem:[%s3294 + $0x10] sm:$0xf]
    %v3300 = vld [vmem:[%s3294 + $0x14] sm:$0xf]
    %v3301 = vld [vmem:[%s3294 + $0x18] sm:$0xf]
    %v3302 = vld [vmem:[%s3294 + $0x1c] sm:$0xf]
    %v3303 = vld [vmem:[%s3294 + $0x20] sm:$0xf]
    %v3304 = vld [vmem:[%s3294 + $0x24] sm:$0xf]
    %v3305 = vld [vmem:[%s3294 + $0x28] sm:$0xf]
    %v3306 = vld [vmem:[%s3294 + $0x2c] sm:$0xf]
    %v3307 = vld [vmem:[%s3294 + $0x30] sm:$0xf]
    %v3308 = vld [vmem:[%s3294 + $0x34] sm:$0xf]
    %v3309 = vld [vmem:[%s3294 + $0x38] sm:$0xf]
    %v3310 = vld [vmem:[%s3294 + $0x3c] sm:$0xf]
    %v3327 = vunpack.c.l.b16 %v3295
    %v3328 = vunpack.c.l.b16 %v3296
    %v3329 = vunpack.c.l.b16 %v3297
    %v3330 = vunpack.c.l.b16 %v3298
    %v3331 = vunpack.c.l.b16 %v3299
    %v3332 = vunpack.c.l.b16 %v3300
    %v3333 = vunpack.c.l.b16 %v3301
    %v3334 = vunpack.c.l.b16 %v3302
    %v3335 = vunpack.c.l.b16 %v3303
    %v3336 = vunpack.c.l.b16 %v3304
    %v3337 = vunpack.c.l.b16 %v3305
    %v3338 = vunpack.c.l.b16 %v3306
    %v3339 = vunpack.c.l.b16 %v3307
    %v3340 = vunpack.c.l.b16 %v3308
    %v3341 = vunpack.c.l.b16 %v3309
    %v3342 = vunpack.c.l.b16 %v3310
    %v3343 = vpack.c.b16 %v3328, %v3327
    %v3344 = vpack.c.b16 %v3330, %v3329
    %v3345 = vpack.c.b16 %v3332, %v3331
    %v3346 = vpack.c.b16 %v3334, %v3333
    %v3347 = vpack.c.b16 %v3336, %v3335
    %v3348 = vpack.c.b16 %v3338, %v3337
    %v3349 = vpack.c.b16 %v3340, %v3339
    %v3350 = vpack.c.b16 %v3342, %v3341
    %3359 = vmatprep.subr.bf16.mxu0 0
    %3360 = vmatpush1.bf16.msra.mxu0 %v3343
    %3361 = vmatprep.subr.bf16.mxu0 0
    %3362 = vmatpush1.bf16.msra.mxu0 %v3344
    %3363 = vmatprep.subr.bf16.mxu0 0
    %3364 = vmatpush1.bf16.msra.mxu0 %v3345
    %3365 = vmatprep.subr.bf16.mxu0 0
    %3366 = vmatpush1.bf16.msra.mxu0 %v3346
    %3367 = vmatprep.subr.bf16.mxu0 0
    %3368 = vmatpush1.bf16.msra.mxu0 %v3347
    %3369 = vmatprep.subr.bf16.mxu0 0
    %3370 = vmatpush1.bf16.msra.mxu0 %v3348
    %3371 = vmatprep.subr.bf16.mxu0 0
    %3372 = vmatpush1.bf16.msra.mxu0 %v3349
    %3373 = vmatprep.subr.bf16.mxu0 0
    %3374 = vmatpush1.bf16.msra.mxu0 %v3350
    %3375 = vmatprep.subr.bf16.mxu0 0
    %3376 = vmatpush1.bf16.msra.mxu0 0
    %3377 = vmatprep.subr.bf16.mxu0 0
    %3378 = vmatpush1.bf16.msra.mxu0 0
    %3379 = vmatprep.subr.bf16.mxu0 0
    %3380 = vmatpush1.bf16.msra.mxu0 0
    %3381 = vmatprep.subr.bf16.mxu0 0
    %3382 = vmatpush1.bf16.msra.mxu0 0
    %3383 = vmatprep.subr.bf16.mxu0 0
    %3384 = vmatpush1.bf16.msra.mxu0 0
    %3385 = vmatprep.subr.bf16.mxu0 0
    %3386 = vmatpush1.bf16.msra.mxu0 0
    %3387 = vmatprep.subr.bf16.mxu0 0
    %3388 = vmatpush1.bf16.msra.mxu0 0
    %3389 = vmatprep.subr.bf16.mxu0 0
    %3390 = vmatpush1.bf16.msra.mxu0 0
    %3391 = vmatprep.mubr.bf16.mxu0 0
    %3392 = vmatmul.mubr.bf16.gmra.mrb[0].mxu0 %v3293
    %v3393 = vpop.f32.mrb[0].mxu0
    %v3394 = vadd.f32 0.0, %v3393
    %v3395 = vpop.f32.mrb[0].mxu0
    %v3396 = vpop.f32.mrb[0].mxu0
    %v3397 = vadd.f32 0.0, %v3396
    %v3398 = vpop.f32.mrb[0].mxu0
    %3399 = vdwg.mxu0
    %v3400 = vadd.f32 %v3239, %v3394
    %v3401 = vadd.f32 %v3240, %v3397
    %v3402 = vmax.f32 %v3400, 0.0
    %v3403 = vmax.f32 %v3401, 0.0
    %v3404 = vpack.c.bf16 %v3403, %v3402
    %v3405 = vld [vmem:[#allocation31] sm:$0xff]
    %v3406 = vld [vmem:[#allocation31 + $0x8] sm:$0xff]
    %v3407 = vld [vmem:[#allocation31 + $0x10] sm:$0xff]
    %v3408 = vld [vmem:[#allocation31 + $0x18] sm:$0xff]
    %v3409 = vld [vmem:[#allocation29] sm:$0xf]
    %v3410 = vld [vmem:[#allocation29 + $0x4] sm:$0xf]
    %v3411 = vld [vmem:[#allocation29 + $0x8] sm:$0xf]
    %v3412 = vld [vmem:[#allocation29 + $0xc] sm:$0xf]
    %v3417 = vunpack.c.l.b16 %v3409
    %v3418 = vunpack.c.l.b16 %v3410
    %v3419 = vunpack.c.l.b16 %v3411
    %v3420 = vunpack.c.l.b16 %v3412
    %v3421 = vpack.c.b16 %v3418, %v3417
    %v3422 = vpack.c.b16 %v3420, %v3419
    %v3424 = vsel %vm1429, %v3421, 0
    %v3427 = vsel %vm1429, %v3422, 0
    %3429 = vmatprep.subr.bf16.mxu0 0
    %3430 = vmatpush1.bf16.msra.mxu0 %v3404
    %3431 = vmatprep.subr.bf16.mxu0 0
    %3432 = vmatpush1.bf16.msra.mxu0 0
    %3433 = vmatprep.subr.bf16.mxu0 0
    %3434 = vmatpush1.bf16.msra.mxu0 0
    %3435 = vmatprep.subr.bf16.mxu0 0
    %3436 = vmatpush1.bf16.msra.mxu0 0
    %3437 = vmatprep.subr.bf16.mxu0 0
    %3438 = vmatpush1.bf16.msra.mxu0 0
    %3439 = vmatprep.subr.bf16.mxu0 0
    %3440 = vmatpush1.bf16.msra.mxu0 0
    %3441 = vmatprep.subr.bf16.mxu0 0
    %3442 = vmatpush1.bf16.msra.mxu0 0
    %3443 = vmatprep.subr.bf16.mxu0 0
    %3444 = vmatpush1.bf16.msra.mxu0 0
    %3445 = vmatprep.subr.bf16.mxu0 0
    %3446 = vmatpush1.bf16.msra.mxu0 0
    %3447 = vmatprep.subr.bf16.mxu0 0
    %3448 = vmatpush1.bf16.msra.mxu0 0
    %3449 = vmatprep.subr.bf16.mxu0 0
    %3450 = vmatpush1.bf16.msra.mxu0 0
    %3451 = vmatprep.subr.bf16.mxu0 0
    %3452 = vmatpush1.bf16.msra.mxu0 0
    %3453 = vmatprep.subr.bf16.mxu0 0
    %3454 = vmatpush1.bf16.msra.mxu0 0
    %3455 = vmatprep.subr.bf16.mxu0 0
    %3456 = vmatpush1.bf16.msra.mxu0 0
    %3457 = vmatprep.subr.bf16.mxu0 0
    %3458 = vmatpush1.bf16.msra.mxu0 0
    %3459 = vmatprep.subr.bf16.mxu0 0
    %3460 = vmatpush1.bf16.msra.mxu0 0
    %3461 = vmatprep.mubr.bf16.mxu0 0
    %3462 = vmatmul.mubr.bf16.gmra.mrb[0].mxu0 %v3424
    %v3463 = vpop.f32.mrb[0].mxu0
    %v3464 = vadd.f32 0.0, %v3463
    %v3465 = vpop.f32.mrb[0].mxu0
    %v3466 = vpop.f32.mrb[0].mxu0
    %v3467 = vadd.f32 0.0, %v3466
    %v3468 = vpop.f32.mrb[0].mxu0
    %3469 = vmatprep.mubr.bf16.mxu0 0
    %3470 = vmatmul.mubr.bf16.gmra.mrb[0].mxu0 %v3427
    %v3471 = vpop.f32.mrb[0].mxu0
    %v3472 = vadd.f32 0.0, %v3471
    %v3473 = vpop.f32.mrb[0].mxu0
    %v3474 = vpop.f32.mrb[0].mxu0
    %v3475 = vadd.f32 0.0, %v3474
    %v3476 = vpop.f32.mrb[0].mxu0
    %3477 = vdwg.mxu0
    %v3478 = vpack.c.bf16 %v3467, %v3464
    %v3479 = vpack.c.bf16 %v3475, %v3472
    %v3480 = vld [vmem:[#allocation28] sm:$0xf]
    %v3481 = vld [vmem:[#allocation28 + $0x4] sm:$0xf]
    %v3482 = vld [vmem:[#allocation28 + $0x8] sm:$0xf]
    %v3483 = vld [vmem:[#allocation28 + $0xc] sm:$0xf]
    %v3484 = vld [vmem:[#allocation28 + $0x10] sm:$0xf]
    %v3485 = vld [vmem:[#allocation28 + $0x14] sm:$0xf]
    %v3486 = vld [vmem:[#allocation28 + $0x18] sm:$0xf]
    %v3487 = vld [vmem:[#allocation28 + $0x1c] sm:$0xf]
    %v3488 = vld [vmem:[#allocation28 + $0x20] sm:$0xf]
    %v3489 = vld [vmem:[#allocation28 + $0x24] sm:$0xf]
    %v3490 = vld [vmem:[#allocation28 + $0x28] sm:$0xf]
    %v3491 = vld [vmem:[#allocation28 + $0x2c] sm:$0xf]
    %v3492 = vld [vmem:[#allocation28 + $0x30] sm:$0xf]
    %v3493 = vld [vmem:[#allocation28 + $0x34] sm:$0xf]
    %v3494 = vld [vmem:[#allocation28 + $0x38] sm:$0xf]
    %v3495 = vld [vmem:[#allocation28 + $0x3c] sm:$0xf]
    %v3512 = vunpack.c.l.b16 %v3480
    %v3513 = vunpack.c.l.b16 %v3481
    %v3514 = vunpack.c.l.b16 %v3482
    %v3515 = vunpack.c.l.b16 %v3483
    %v3516 = vunpack.c.l.b16 %v3484
    %v3517 = vunpack.c.l.b16 %v3485
    %v3518 = vunpack.c.l.b16 %v3486
    %v3519 = vunpack.c.l.b16 %v3487
    %v3520 = vunpack.c.l.b16 %v3488
    %v3521 = vunpack.c.l.b16 %v3489
    %v3522 = vunpack.c.l.b16 %v3490
    %v3523 = vunpack.c.l.b16 %v3491
    %v3524 = vunpack.c.l.b16 %v3492
    %v3525 = vunpack.c.l.b16 %v3493
    %v3526 = vunpack.c.l.b16 %v3494
    %v3527 = vunpack.c.l.b16 %v3495
    %v3528 = vpack.c.b16 %v3513, %v3512
    %v3529 = vpack.c.b16 %v3515, %v3514
    %v3530 = vpack.c.b16 %v3517, %v3516
    %v3531 = vpack.c.b16 %v3519, %v3518
    %v3532 = vpack.c.b16 %v3521, %v3520
    %v3533 = vpack.c.b16 %v3523, %v3522
    %v3534 = vpack.c.b16 %v3525, %v3524
    %v3535 = vpack.c.b16 %v3527, %v3526
    %3544 = vmatprep.subr.bf16.mxu0 0
    %3545 = vmatpush1.bf16.msra.mxu0 %v3528
    %3546 = vmatprep.subr.bf16.mxu0 0
    %3547 = vmatpush1.bf16.msra.mxu0 %v3529
    %3548 = vmatprep.subr.bf16.mxu0 0
    %3549 = vmatpush1.bf16.msra.mxu0 %v3530
    %3550 = vmatprep.subr.bf16.mxu0 0
    %3551 = vmatpush1.bf16.msra.mxu0 %v3531
    %3552 = vmatprep.subr.bf16.mxu0 0
    %3553 = vmatpush1.bf16.msra.mxu0 %v3532
    %3554 = vmatprep.subr.bf16.mxu0 0
    %3555 = vmatpush1.bf16.msra.mxu0 %v3533
    %3556 = vmatprep.subr.bf16.mxu0 0
    %3557 = vmatpush1.bf16.msra.mxu0 %v3534
    %3558 = vmatprep.subr.bf16.mxu0 0
    %3559 = vmatpush1.bf16.msra.mxu0 %v3535
    %3560 = vmatprep.subr.bf16.mxu0 0
    %3561 = vmatpush1.bf16.msra.mxu0 0
    %3562 = vmatprep.subr.bf16.mxu0 0
    %3563 = vmatpush1.bf16.msra.mxu0 0
    %3564 = vmatprep.subr.bf16.mxu0 0
    %3565 = vmatpush1.bf16.msra.mxu0 0
    %3566 = vmatprep.subr.bf16.mxu0 0
    %3567 = vmatpush1.bf16.msra.mxu0 0
    %3568 = vmatprep.subr.bf16.mxu0 0
    %3569 = vmatpush1.bf16.msra.mxu0 0
    %3570 = vmatprep.subr.bf16.mxu0 0
    %3571 = vmatpush1.bf16.msra.mxu0 0
    %3572 = vmatprep.subr.bf16.mxu0 0
    %3573 = vmatpush1.bf16.msra.mxu0 0
    %3574 = vmatprep.subr.bf16.mxu0 0
    %3575 = vmatpush1.bf16.msra.mxu0 0
    %3576 = vmatprep.mubr.bf16.mxu0 0
    %3577 = vmatmul.mubr.bf16.gmra.mrb[0].mxu0 %v3478
    %v3578 = vpop.f32.mrb[0].mxu0
    %v3579 = vadd.f32 0.0, %v3578
    %v3580 = vpop.f32.mrb[0].mxu0
    %v3581 = vpop.f32.mrb[0].mxu0
    %v3582 = vadd.f32 0.0, %v3581
    %v3583 = vpop.f32.mrb[0].mxu0
    %3584 = vmatprep.mubr.bf16.mxu0 0
    %3585 = vmatmul.mubr.bf16.gmra.mrb[0].mxu0 %v3479
    %v3586 = vpop.f32.mrb[0].mxu0
    %v3587 = vadd.f32 0.0, %v3586
    %v3588 = vpop.f32.mrb[0].mxu0
    %v3589 = vpop.f32.mrb[0].mxu0
    %v3590 = vadd.f32 0.0, %v3589
    %v3591 = vpop.f32.mrb[0].mxu0
    %3592 = vdwg.mxu0
    %v3593 = vadd.f32 %v3405, %v3579
    %v3594 = vadd.f32 %v3406, %v3582
    %v3595 = vadd.f32 %v3407, %v3587
    %v3596 = vadd.f32 %v3408, %v3590
    %s3597 = scalar_lea.vmem [#allocation29], 16
    %v3598 = vld [vmem:[%s3597] sm:$0xf]
    %v3599 = vld [vmem:[%s3597 + $0x4] sm:$0xf]
    %v3600 = vld [vmem:[%s3597 + $0x8] sm:$0xf]
    %v3601 = vld [vmem:[%s3597 + $0xc] sm:$0xf]
    %v3606 = vunpack.c.l.b16 %v3598
    %v3607 = vunpack.c.l.b16 %v3599
    %v3608 = vunpack.c.l.b16 %v3600
    %v3609 = vunpack.c.l.b16 %v3601
    %v3610 = vpack.c.b16 %v3607, %v3606
    %v3611 = vpack.c.b16 %v3609, %v3608
    %v3613 = vsel %vm1429, %v3610, 0
    %v3616 = vsel %vm1429, %v3611, 0
    %3618 = vmatprep.subr.bf16.mxu0 0
    %3619 = vmatpush1.bf16.msra.mxu0 %v3404
    %3620 = vmatprep.subr.bf16.mxu0 0
    %3621 = vmatpush1.bf16.msra.mxu0 0
    %3622 = vmatprep.subr.bf16.mxu0 0
    %3623 = vmatpush1.bf16.msra.mxu0 0
    %3624 = vmatprep.subr.bf16.mxu0 0
    %3625 = vmatpush1.bf16.msra.mxu0 0
    %3626 = vmatprep.subr.bf16.mxu0 0
    %3627 = vmatpush1.bf16.msra.mxu0 0
    %3628 = vmatprep.subr.bf16.mxu0 0
    %3629 = vmatpush1.bf16.msra.mxu0 0
    %3630 = vmatprep.subr.bf16.mxu0 0
    %3631 = vmatpush1.bf16.msra.mxu0 0
    %3632 = vmatprep.subr.bf16.mxu0 0
    %3633 = vmatpush1.bf16.msra.mxu0 0
    %3634 = vmatprep.subr.bf16.mxu0 0
    %3635 = vmatpush1.bf16.msra.mxu0 0
    %3636 = vmatprep.subr.bf16.mxu0 0
    %3637 = vmatpush1.bf16.msra.mxu0 0
    %3638 = vmatprep.subr.bf16.mxu0 0
    %3639 = vmatpush1.bf16.msra.mxu0 0
    %3640 = vmatprep.subr.bf16.mxu0 0
    %3641 = vmatpush1.bf16.msra.mxu0 0
    %3642 = vmatprep.subr.bf16.mxu0 0
    %3643 = vmatpush1.bf16.msra.mxu0 0
    %3644 = vmatprep.subr.bf16.mxu0 0
    %3645 = vmatpush1.bf16.msra.mxu0 0
    %3646 = vmatprep.subr.bf16.mxu0 0
    %3647 = vmatpush1.bf16.msra.mxu0 0
    %3648 = vmatprep.subr.bf16.mxu0 0
    %3649 = vmatpush1.bf16.msra.mxu0 0
    %3650 = vmatprep.mubr.bf16.mxu0 0
    %3651 = vmatmul.mubr.bf16.gmra.mrb[0].mxu0 %v3613
    %v3652 = vpop.f32.mrb[0].mxu0
    %v3653 = vadd.f32 0.0, %v3652
    %v3654 = vpop.f32.mrb[0].mxu0
    %v3655 = vpop.f32.mrb[0].mxu0
    %v3656 = vadd.f32 0.0, %v3655
    %v3657 = vpop.f32.mrb[0].mxu0
    %3658 = vmatprep.mubr.bf16.mxu0 0
    %3659 = vmatmul.mubr.bf16.gmra.mrb[0].mxu0 %v3616
    %v3660 = vpop.f32.mrb[0].mxu0
    %v3661 = vadd.f32 0.0, %v3660
    %v3662 = vpop.f32.mrb[0].mxu0
    %v3663 = vpop.f32.mrb[0].mxu0
    %v3664 = vadd.f32 0.0, %v3663
    %v3665 = vpop.f32.mrb[0].mxu0
    %3666 = vdwg.mxu0
    %v3667 = vpack.c.bf16 %v3656, %v3653
    %v3668 = vpack.c.bf16 %v3664, %v3661
    %s3669 = scalar_lea.vmem [#allocation28], 64
    %v3670 = vld [vmem:[%s3669] sm:$0xf]
    %v3671 = vld [vmem:[%s3669 + $0x4] sm:$0xf]
    %v3672 = vld [vmem:[%s3669 + $0x8] sm:$0xf]
    %v3673 = vld [vmem:[%s3669 + $0xc] sm:$0xf]
    %v3674 = vld [vmem:[%s3669 + $0x10] sm:$0xf]
    %v3675 = vld [vmem:[%s3669 + $0x14] sm:$0xf]
    %v3676 = vld [vmem:[%s3669 + $0x18] sm:$0xf]
    %v3677 = vld [vmem:[%s3669 + $0x1c] sm:$0xf]
    %v3678 = vld [vmem:[%s3669 + $0x20] sm:$0xf]
    %v3679 = vld [vmem:[%s3669 + $0x24] sm:$0xf]
    %v3680 = vld [vmem:[%s3669 + $0x28] sm:$0xf]
    %v3681 = vld [vmem:[%s3669 + $0x2c] sm:$0xf]
    %v3682 = vld [vmem:[%s3669 + $0x30] sm:$0xf]
    %v3683 = vld [vmem:[%s3669 + $0x34] sm:$0xf]
    %v3684 = vld [vmem:[%s3669 + $0x38] sm:$0xf]
    %v3685 = vld [vmem:[%s3669 + $0x3c] sm:$0xf]
    %v3702 = vunpack.c.l.b16 %v3670
    %v3703 = vunpack.c.l.b16 %v3671
    %v3704 = vunpack.c.l.b16 %v3672
    %v3705 = vunpack.c.l.b16 %v3673
    %v3706 = vunpack.c.l.b16 %v3674
    %v3707 = vunpack.c.l.b16 %v3675
    %v3708 = vunpack.c.l.b16 %v3676
    %v3709 = vunpack.c.l.b16 %v3677
    %v3710 = vunpack.c.l.b16 %v3678
    %v3711 = vunpack.c.l.b16 %v3679
    %v3712 = vunpack.c.l.b16 %v3680
    %v3713 = vunpack.c.l.b16 %v3681
    %v3714 = vunpack.c.l.b16 %v3682
    %v3715 = vunpack.c.l.b16 %v3683
    %v3716 = vunpack.c.l.b16 %v3684
    %v3717 = vunpack.c.l.b16 %v3685
    %v3718 = vpack.c.b16 %v3703, %v3702
    %v3719 = vpack.c.b16 %v3705, %v3704
    %v3720 = vpack.c.b16 %v3707, %v3706
    %v3721 = vpack.c.b16 %v3709, %v3708
    %v3722 = vpack.c.b16 %v3711, %v3710
    %v3723 = vpack.c.b16 %v3713, %v3712
    %v3724 = vpack.c.b16 %v3715, %v3714
    %v3725 = vpack.c.b16 %v3717, %v3716
    %3734 = vmatprep.subr.bf16.mxu0 0
    %3735 = vmatpush1.bf16.msra.mxu0 %v3718
    %3736 = vmatprep.subr.bf16.mxu0 0
    %3737 = vmatpush1.bf16.msra.mxu0 %v3719
    %3738 = vmatprep.subr.bf16.mxu0 0
    %3739 = vmatpush1.bf16.msra.mxu0 %v3720
    %3740 = vmatprep.subr.bf16.mxu0 0
    %3741 = vmatpush1.bf16.msra.mxu0 %v3721
    %3742 = vmatprep.subr.bf16.mxu0 0
    %3743 = vmatpush1.bf16.msra.mxu0 %v3722
    %3744 = vmatprep.subr.bf16.mxu0 0
    %3745 = vmatpush1.bf16.msra.mxu0 %v3723
    %3746 = vmatprep.subr.bf16.mxu0 0
    %3747 = vmatpush1.bf16.msra.mxu0 %v3724
    %3748 = vmatprep.subr.bf16.mxu0 0
    %3749 = vmatpush1.bf16.msra.mxu0 %v3725
    %3750 = vmatprep.subr.bf16.mxu0 0
    %3751 = vmatpush1.bf16.msra.mxu0 0
    %3752 = vmatprep.subr.bf16.mxu0 0
    %3753 = vmatpush1.bf16.msra.mxu0 0
    %3754 = vmatprep.subr.bf16.mxu0 0
    %3755 = vmatpush1.bf16.msra.mxu0 0
    %3756 = vmatprep.subr.bf16.mxu0 0
    %3757 = vmatpush1.bf16.msra.mxu0 0
    %3758 = vmatprep.subr.bf16.mxu0 0
    %3759 = vmatpush1.bf16.msra.mxu0 0
    %3760 = vmatprep.subr.bf16.mxu0 0
    %3761 = vmatpush1.bf16.msra.mxu0 0
    %3762 = vmatprep.subr.bf16.mxu0 0
    %3763 = vmatpush1.bf16.msra.mxu0 0
    %3764 = vmatprep.subr.bf16.mxu0 0
    %3765 = vmatpush1.bf16.msra.mxu0 0
    %3766 = vmatprep.mubr.bf16.mxu0 0
    %3767 = vmatmul.mubr.bf16.gmra.mrb[0].mxu0 %v3667
    %v3768 = vpop.f32.mrb[0].mxu0
    %v3769 = vadd.f32 0.0, %v3768
    %v3770 = vpop.f32.mrb[0].mxu0
    %v3771 = vpop.f32.mrb[0].mxu0
    %v3772 = vadd.f32 0.0, %v3771
    %v3773 = vpop.f32.mrb[0].mxu0
    %3774 = vmatprep.mubr.bf16.mxu0 0
    %3775 = vmatmul.mubr.bf16.gmra.mrb[0].mxu0 %v3668
    %v3776 = vpop.f32.mrb[0].mxu0
    %v3777 = vadd.f32 0.0, %v3776
    %v3778 = vpop.f32.mrb[0].mxu0
    %v3779 = vpop.f32.mrb[0].mxu0
    %v3780 = vadd.f32 0.0, %v3779
    %v3781 = vpop.f32.mrb[0].mxu0
    %3782 = vdwg.mxu0
    %v3783 = vadd.f32 %v3593, %v3769
    %v3784 = vadd.f32 %v3594, %v3772
    %v3785 = vadd.f32 %v3595, %v3777
    %v3786 = vadd.f32 %v3596, %v3780
    %s3787 = scalar_lea.vmem [#allocation29], 32
    %v3788 = vld [vmem:[%s3787] sm:$0xf]
    %v3789 = vld [vmem:[%s3787 + $0x4] sm:$0xf]
    %v3790 = vld [vmem:[%s3787 + $0x8] sm:$0xf]
    %v3791 = vld [vmem:[%s3787 + $0xc] sm:$0xf]
    %v3796 = vunpack.c.l.b16 %v3788
    %v3797 = vunpack.c.l.b16 %v3789
    %v3798 = vunpack.c.l.b16 %v3790
    %v3799 = vunpack.c.l.b16 %v3791
    %v3800 = vpack.c.b16 %v3797, %v3796
    %v3801 = vpack.c.b16 %v3799, %v3798
    %v3803 = vsel %vm1429, %v3800, 0
    %v3806 = vsel %vm1429, %v3801, 0
    %3808 = vmatprep.subr.bf16.mxu0 0
    %3809 = vmatpush1.bf16.msra.mxu0 %v3404
    %3810 = vmatprep.subr.bf16.mxu0 0
    %3811 = vmatpush1.bf16.msra.mxu0 0
    %3812 = vmatprep.subr.bf16.mxu0 0
    %3813 = vmatpush1.bf16.msra.mxu0 0
    %3814 = vmatprep.subr.bf16.mxu0 0
    %3815 = vmatpush1.bf16.msra.mxu0 0
    %3816 = vmatprep.subr.bf16.mxu0 0
    %3817 = vmatpush1.bf16.msra.mxu0 0
    %3818 = vmatprep.subr.bf16.mxu0 0
    %3819 = vmatpush1.bf16.msra.mxu0 0
    %3820 = vmatprep.subr.bf16.mxu0 0
    %3821 = vmatpush1.bf16.msra.mxu0 0
    %3822 = vmatprep.subr.bf16.mxu0 0
    %3823 = vmatpush1.bf16.msra.mxu0 0
    %3824 = vmatprep.subr.bf16.mxu0 0
    %3825 = vmatpush1.bf16.msra.mxu0 0
    %3826 = vmatprep.subr.bf16.mxu0 0
    %3827 = vmatpush1.bf16.msra.mxu0 0
    %3828 = vmatprep.subr.bf16.mxu0 0
    %3829 = vmatpush1.bf16.msra.mxu0 0
    %3830 = vmatprep.subr.bf16.mxu0 0
    %3831 = vmatpush1.bf16.msra.mxu0 0
    %3832 = vmatprep.subr.bf16.mxu0 0
    %3833 = vmatpush1.bf16.msra.mxu0 0
    %3834 = vmatprep.subr.bf16.mxu0 0
    %3835 = vmatpush1.bf16.msra.mxu0 0
    %3836 = vmatprep.subr.bf16.mxu0 0
    %3837 = vmatpush1.bf16.msra.mxu0 0
    %3838 = vmatprep.subr.bf16.mxu0 0
    %3839 = vmatpush1.bf16.msra.mxu0 0
    %3840 = vmatprep.mubr.bf16.mxu0 0
    %3841 = vmatmul.mubr.bf16.gmra.mrb[0].mxu0 %v3803
    %v3842 = vpop.f32.mrb[0].mxu0
    %v3843 = vadd.f32 0.0, %v3842
    %v3844 = vpop.f32.mrb[0].mxu0
    %v3845 = vpop.f32.mrb[0].mxu0
    %v3846 = vadd.f32 0.0, %v3845
    %v3847 = vpop.f32.mrb[0].mxu0
    %3848 = vmatprep.mubr.bf16.mxu0 0
    %3849 = vmatmul.mubr.bf16.gmra.mrb[0].mxu0 %v3806
    %v3850 = vpop.f32.mrb[0].mxu0
    %v3851 = vadd.f32 0.0, %v3850
    %v3852 = vpop.f32.mrb[0].mxu0
    %v3853 = vpop.f32.mrb[0].mxu0
    %v3854 = vadd.f32 0.0, %v3853
    %v3855 = vpop.f32.mrb[0].mxu0
    %3856 = vdwg.mxu0
    %v3857 = vpack.c.bf16 %v3846, %v3843
    %v3858 = vpack.c.bf16 %v3854, %v3851
    %s3859 = scalar_lea.vmem [#allocation28], 128
    %v3860 = vld [vmem:[%s3859] sm:$0xf]
    %v3861 = vld [vmem:[%s3859 + $0x4] sm:$0xf]
    %v3862 = vld [vmem:[%s3859 + $0x8] sm:$0xf]
    %v3863 = vld [vmem:[%s3859 + $0xc] sm:$0xf]
    %v3864 = vld [vmem:[%s3859 + $0x10] sm:$0xf]
    %v3865 = vld [vmem:[%s3859 + $0x14] sm:$0xf]
    %v3866 = vld [vmem:[%s3859 + $0x18] sm:$0xf]
    %v3867 = vld [vmem:[%s3859 + $0x1c] sm:$0xf]
    %v3868 = vld [vmem:[%s3859 + $0x20] sm:$0xf]
    %v3869 = vld [vmem:[%s3859 + $0x24] sm:$0xf]
    %v3870 = vld [vmem:[%s3859 + $0x28] sm:$0xf]
    %v3871 = vld [vmem:[%s3859 + $0x2c] sm:$0xf]
    %v3872 = vld [vmem:[%s3859 + $0x30] sm:$0xf]
    %v3873 = vld [vmem:[%s3859 + $0x34] sm:$0xf]
    %v3874 = vld [vmem:[%s3859 + $0x38] sm:$0xf]
    %v3875 = vld [vmem:[%s3859 + $0x3c] sm:$0xf]
    %v3892 = vunpack.c.l.b16 %v3860
    %v3893 = vunpack.c.l.b16 %v3861
    %v3894 = vunpack.c.l.b16 %v3862
    %v3895 = vunpack.c.l.b16 %v3863
    %v3896 = vunpack.c.l.b16 %v3864
    %v3897 = vunpack.c.l.b16 %v3865
    %v3898 = vunpack.c.l.b16 %v3866
    %v3899 = vunpack.c.l.b16 %v3867
    %v3900 = vunpack.c.l.b16 %v3868
    %v3901 = vunpack.c.l.b16 %v3869
    %v3902 = vunpack.c.l.b16 %v3870
    %v3903 = vunpack.c.l.b16 %v3871
    %v3904 = vunpack.c.l.b16 %v3872
    %v3905 = vunpack.c.l.b16 %v3873
    %v3906 = vunpack.c.l.b16 %v3874
    %v3907 = vunpack.c.l.b16 %v3875
    %v3908 = vpack.c.b16 %v3893, %v3892
    %v3909 = vpack.c.b16 %v3895, %v3894
    %v3910 = vpack.c.b16 %v3897, %v3896
    %v3911 = vpack.c.b16 %v3899, %v3898
    %v3912 = vpack.c.b16 %v3901, %v3900
    %v3913 = vpack.c.b16 %v3903, %v3902
    %v3914 = vpack.c.b16 %v3905, %v3904
    %v3915 = vpack.c.b16 %v3907, %v3906
    %3924 = vmatprep.subr.bf16.mxu0 0
    %3925 = vmatpush1.bf16.msra.mxu0 %v3908
    %3926 = vmatprep.subr.bf16.mxu0 0
    %3927 = vmatpush1.bf16.msra.mxu0 %v3909
    %3928 = vmatprep.subr.bf16.mxu0 0
    %3929 = vmatpush1.bf16.msra.mxu0 %v3910
    %3930 = vmatprep.subr.bf16.mxu0 0
    %3931 = vmatpush1.bf16.msra.mxu0 %v3911
    %3932 = vmatprep.subr.bf16.mxu0 0
    %3933 = vmatpush1.bf16.msra.mxu0 %v3912
    %3934 = vmatprep.subr.bf16.mxu0 0
    %3935 = vmatpush1.bf16.msra.mxu0 %v3913
    %3936 = vmatprep.subr.bf16.mxu0 0
    %3937 = vmatpush1.bf16.msra.mxu0 %v3914
    %3938 = vmatprep.subr.bf16.mxu0 0
    %3939 = vmatpush1.bf16.msra.mxu0 %v3915
    %3940 = vmatprep.subr.bf16.mxu0 0
    %3941 = vmatpush1.bf16.msra.mxu0 0
    %3942 = vmatprep.subr.bf16.mxu0 0
    %3943 = vmatpush1.bf16.msra.mxu0 0
    %3944 = vmatprep.subr.bf16.mxu0 0
    %3945 = vmatpush1.bf16.msra.mxu0 0
    %3946 = vmatprep.subr.bf16.mxu0 0
    %3947 = vmatpush1.bf16.msra.mxu0 0
    %3948 = vmatprep.subr.bf16.mxu0 0
    %3949 = vmatpush1.bf16.msra.mxu0 0
    %3950 = vmatprep.subr.bf16.mxu0 0
    %3951 = vmatpush1.bf16.msra.mxu0 0
    %3952 = vmatprep.subr.bf16.mxu0 0
    %3953 = vmatpush1.bf16.msra.mxu0 0
    %3954 = vmatprep.subr.bf16.mxu0 0
    %3955 = vmatpush1.bf16.msra.mxu0 0
    %3956 = vmatprep.mubr.bf16.mxu0 0
    %3957 = vmatmul.mubr.bf16.gmra.mrb[0].mxu0 %v3857
    %v3958 = vpop.f32.mrb[0].mxu0
    %v3959 = vadd.f32 0.0, %v3958
    %v3960 = vpop.f32.mrb[0].mxu0
    %v3961 = vpop.f32.mrb[0].mxu0
    %v3962 = vadd.f32 0.0, %v3961
    %v3963 = vpop.f32.mrb[0].mxu0
    %3964 = vmatprep.mubr.bf16.mxu0 0
    %3965 = vmatmul.mubr.bf16.gmra.mrb[0].mxu0 %v3858
    %v3966 = vpop.f32.mrb[0].mxu0
    %v3967 = vadd.f32 0.0, %v3966
    %v3968 = vpop.f32.mrb[0].mxu0
    %v3969 = vpop.f32.mrb[0].mxu0
    %v3970 = vadd.f32 0.0, %v3969
    %v3971 = vpop.f32.mrb[0].mxu0
    %3972 = vdwg.mxu0
    %v3973 = vadd.f32 %v3783, %v3959
    %v3974 = vadd.f32 %v3784, %v3962
    %v3975 = vadd.f32 %v3785, %v3967
    %v3976 = vadd.f32 %v3786, %v3970
    %v3977 = vmax.f32 %v3973, 0.0
    %v3978 = vmax.f32 %v3974, 0.0
    %v3979 = vmax.f32 %v3975, 0.0
    %v3980 = vmax.f32 %v3976, 0.0
    %v3981 = vpack.c.bf16 %v3978, %v3977
    %v3982 = vpack.c.bf16 %v3980, %v3979
    %v3983 = vld [vmem:[#allocation34] sm:$0xff]
    %v3984 = vld [vmem:[#allocation34 + $0x8] sm:$0xff]
    %v3985 = vld [vmem:[#allocation34 + $0x10] sm:$0xff]
    %v3986 = vld [vmem:[#allocation34 + $0x18] sm:$0xff]
    %v3987 = vld [vmem:[%s49] sm:$0xf]
    %v3988 = vld [vmem:[%s49 + $0x4] sm:$0xf]
    %v3989 = vld [vmem:[%s49 + $0x8] sm:$0xf]
    %v3990 = vld [vmem:[%s49 + $0xc] sm:$0xf]
    %v3995 = vunpack.c.l.b16 %v3987
    %v3996 = vunpack.c.l.b16 %v3988
    %v3997 = vunpack.c.l.b16 %v3989
    %v3998 = vunpack.c.l.b16 %v3990
    %v3999 = vpack.c.b16 %v3996, %v3995
    %v4000 = vpack.c.b16 %v3998, %v3997
    %v4002 = vsel %vm457, %v3999, 0
    %v4005 = vsel %vm457, %v4000, 0
    %4007 = vmatprep.subr.bf16.mxu0 0
    %4008 = vmatpush1.bf16.msra.mxu0 %v3981
    %4009 = vmatprep.subr.bf16.mxu0 0
    %4010 = vmatpush1.bf16.msra.mxu0 %v3982
    %4011 = vmatprep.subr.bf16.mxu0 0
    %4012 = vmatpush1.bf16.msra.mxu0 0
    %4013 = vmatprep.subr.bf16.mxu0 0
    %4014 = vmatpush1.bf16.msra.mxu0 0
    %4015 = vmatprep.subr.bf16.mxu0 0
    %4016 = vmatpush1.bf16.msra.mxu0 0
    %4017 = vmatprep.subr.bf16.mxu0 0
    %4018 = vmatpush1.bf16.msra.mxu0 0
    %4019 = vmatprep.subr.bf16.mxu0 0
    %4020 = vmatpush1.bf16.msra.mxu0 0
    %4021 = vmatprep.subr.bf16.mxu0 0
    %4022 = vmatpush1.bf16.msra.mxu0 0
    %4023 = vmatprep.subr.bf16.mxu0 0
    %4024 = vmatpush1.bf16.msra.mxu0 0
    %4025 = vmatprep.subr.bf16.mxu0 0
    %4026 = vmatpush1.bf16.msra.mxu0 0
    %4027 = vmatprep.subr.bf16.mxu0 0
    %4028 = vmatpush1.bf16.msra.mxu0 0
    %4029 = vmatprep.subr.bf16.mxu0 0
    %4030 = vmatpush1.bf16.msra.mxu0 0
    %4031 = vmatprep.subr.bf16.mxu0 0
    %4032 = vmatpush1.bf16.msra.mxu0 0
    %4033 = vmatprep.subr.bf16.mxu0 0
    %4034 = vmatpush1.bf16.msra.mxu0 0
    %4035 = vmatprep.subr.bf16.mxu0 0
    %4036 = vmatpush1.bf16.msra.mxu0 0
    %4037 = vmatprep.subr.bf16.mxu0 0
    %4038 = vmatpush1.bf16.msra.mxu0 0
    %4039 = vmatprep.mubr.bf16.mxu0 0
    %4040 = vmatmul.mubr.bf16.gmra.mrb[0].mxu0 %v4002
    %v4041 = vpop.f32.mrb[0].mxu0
    %v4042 = vadd.f32 0.0, %v4041
    %v4043 = vpop.f32.mrb[0].mxu0
    %v4044 = vpop.f32.mrb[0].mxu0
    %v4045 = vadd.f32 0.0, %v4044
    %v4046 = vpop.f32.mrb[0].mxu0
    %4047 = vmatprep.mubr.bf16.mxu0 0
    %4048 = vmatmul.mubr.bf16.gmra.mrb[0].mxu0 %v4005
    %v4049 = vpop.f32.mrb[0].mxu0
    %v4050 = vadd.f32 0.0, %v4049
    %v4051 = vpop.f32.mrb[0].mxu0
    %v4052 = vpop.f32.mrb[0].mxu0
    %v4053 = vadd.f32 0.0, %v4052
    %v4054 = vpop.f32.mrb[0].mxu0
    %4055 = vdwg.mxu0
    %v4056 = vpack.c.bf16 %v4045, %v4042
    %v4057 = vpack.c.bf16 %v4053, %v4050
    %v4058 = vld [vmem:[#allocation32] sm:$0xf]
    %v4059 = vld [vmem:[#allocation32 + $0x4] sm:$0xf]
    %v4060 = vld [vmem:[#allocation32 + $0x8] sm:$0xf]
    %v4061 = vld [vmem:[#allocation32 + $0xc] sm:$0xf]
    %v4062 = vld [vmem:[#allocation32 + $0x10] sm:$0xf]
    %v4063 = vld [vmem:[#allocation32 + $0x14] sm:$0xf]
    %v4064 = vld [vmem:[#allocation32 + $0x18] sm:$0xf]
    %v4065 = vld [vmem:[#allocation32 + $0x1c] sm:$0xf]
    %v4066 = vld [vmem:[#allocation32 + $0x20] sm:$0xf]
    %v4067 = vld [vmem:[#allocation32 + $0x24] sm:$0xf]
    %v4068 = vld [vmem:[#allocation32 + $0x28] sm:$0xf]
    %v4069 = vld [vmem:[#allocation32 + $0x2c] sm:$0xf]
    %v4070 = vld [vmem:[#allocation32 + $0x30] sm:$0xf]
    %v4071 = vld [vmem:[#allocation32 + $0x34] sm:$0xf]
    %v4072 = vld [vmem:[#allocation32 + $0x38] sm:$0xf]
    %v4073 = vld [vmem:[#allocation32 + $0x3c] sm:$0xf]
    %v4090 = vunpack.c.l.b16 %v4058
    %v4091 = vunpack.c.l.b16 %v4059
    %v4092 = vunpack.c.l.b16 %v4060
    %v4093 = vunpack.c.l.b16 %v4061
    %v4094 = vunpack.c.l.b16 %v4062
    %v4095 = vunpack.c.l.b16 %v4063
    %v4096 = vunpack.c.l.b16 %v4064
    %v4097 = vunpack.c.l.b16 %v4065
    %v4098 = vunpack.c.l.b16 %v4066
    %v4099 = vunpack.c.l.b16 %v4067
    %v4100 = vunpack.c.l.b16 %v4068
    %v4101 = vunpack.c.l.b16 %v4069
    %v4102 = vunpack.c.l.b16 %v4070
    %v4103 = vunpack.c.l.b16 %v4071
    %v4104 = vunpack.c.l.b16 %v4072
    %v4105 = vunpack.c.l.b16 %v4073
    %v4106 = vpack.c.b16 %v4091, %v4090
    %v4107 = vpack.c.b16 %v4093, %v4092
    %v4108 = vpack.c.b16 %v4095, %v4094
    %v4109 = vpack.c.b16 %v4097, %v4096
    %v4110 = vpack.c.b16 %v4099, %v4098
    %v4111 = vpack.c.b16 %v4101, %v4100
    %v4112 = vpack.c.b16 %v4103, %v4102
    %v4113 = vpack.c.b16 %v4105, %v4104
    %4122 = vmatprep.subr.bf16.mxu0 0
    %4123 = vmatpush1.bf16.msra.mxu0 %v4106
    %4124 = vmatprep.subr.bf16.mxu0 0
    %4125 = vmatpush1.bf16.msra.mxu0 %v4107
    %4126 = vmatprep.subr.bf16.mxu0 0
    %4127 = vmatpush1.bf16.msra.mxu0 %v4108
    %4128 = vmatprep.subr.bf16.mxu0 0
    %4129 = vmatpush1.bf16.msra.mxu0 %v4109
    %4130 = vmatprep.subr.bf16.mxu0 0
    %4131 = vmatpush1.bf16.msra.mxu0 %v4110
    %4132 = vmatprep.subr.bf16.mxu0 0
    %4133 = vmatpush1.bf16.msra.mxu0 %v4111
    %4134 = vmatprep.subr.bf16.mxu0 0
    %4135 = vmatpush1.bf16.msra.mxu0 %v4112
    %4136 = vmatprep.subr.bf16.mxu0 0
    %4137 = vmatpush1.bf16.msra.mxu0 %v4113
    %4138 = vmatprep.subr.bf16.mxu0 0
    %4139 = vmatpush1.bf16.msra.mxu0 0
    %4140 = vmatprep.subr.bf16.mxu0 0
    %4141 = vmatpush1.bf16.msra.mxu0 0
    %4142 = vmatprep.subr.bf16.mxu0 0
    %4143 = vmatpush1.bf16.msra.mxu0 0
    %4144 = vmatprep.subr.bf16.mxu0 0
    %4145 = vmatpush1.bf16.msra.mxu0 0
    %4146 = vmatprep.subr.bf16.mxu0 0
    %4147 = vmatpush1.bf16.msra.mxu0 0
    %4148 = vmatprep.subr.bf16.mxu0 0
    %4149 = vmatpush1.bf16.msra.mxu0 0
    %4150 = vmatprep.subr.bf16.mxu0 0
    %4151 = vmatpush1.bf16.msra.mxu0 0
    %4152 = vmatprep.subr.bf16.mxu0 0
    %4153 = vmatpush1.bf16.msra.mxu0 0
    %4154 = vmatprep.mubr.bf16.mxu0 0
    %4155 = vmatmul.mubr.bf16.gmra.mrb[0].mxu0 %v4056
    %v4156 = vpop.f32.mrb[0].mxu0
    %v4157 = vadd.f32 0.0, %v4156
    %v4158 = vpop.f32.mrb[0].mxu0
    %v4159 = vpop.f32.mrb[0].mxu0
    %v4160 = vadd.f32 0.0, %v4159
    %v4161 = vpop.f32.mrb[0].mxu0
    %4162 = vmatprep.mubr.bf16.mxu0 0
    %4163 = vmatmul.mubr.bf16.gmra.mrb[0].mxu0 %v4057
    %v4164 = vpop.f32.mrb[0].mxu0
    %v4165 = vadd.f32 0.0, %v4164
    %v4166 = vpop.f32.mrb[0].mxu0
    %v4167 = vpop.f32.mrb[0].mxu0
    %v4168 = vadd.f32 0.0, %v4167
    %v4169 = vpop.f32.mrb[0].mxu0
    %4170 = vdwg.mxu0
    %v4171 = vadd.f32 %v3983, %v4157
    %v4172 = vadd.f32 %v3984, %v4160
    %v4173 = vadd.f32 %v3985, %v4165
    %v4174 = vadd.f32 %v3986, %v4168
    %s4175 = scalar_lea.vmem %s49, 16
    %v4176 = vld [vmem:[%s4175] sm:$0xf]
    %v4177 = vld [vmem:[%s4175 + $0x4] sm:$0xf]
    %v4178 = vld [vmem:[%s4175 + $0x8] sm:$0xf]
    %v4179 = vld [vmem:[%s4175 + $0xc] sm:$0xf]
    %v4184 = vunpack.c.l.b16 %v4176
    %v4185 = vunpack.c.l.b16 %v4177
    %v4186 = vunpack.c.l.b16 %v4178
    %v4187 = vunpack.c.l.b16 %v4179
    %v4188 = vpack.c.b16 %v4185, %v4184
    %v4189 = vpack.c.b16 %v4187, %v4186
    %v4191 = vsel %vm457, %v4188, 0
    %v4194 = vsel %vm457, %v4189, 0
    %4196 = vmatprep.subr.bf16.mxu0 0
    %4197 = vmatpush1.bf16.msra.mxu0 %v3981
    %4198 = vmatprep.subr.bf16.mxu0 0
    %4199 = vmatpush1.bf16.msra.mxu0 %v3982
    %4200 = vmatprep.subr.bf16.mxu0 0
    %4201 = vmatpush1.bf16.msra.mxu0 0
    %4202 = vmatprep.subr.bf16.mxu0 0
    %4203 = vmatpush1.bf16.msra.mxu0 0
    %4204 = vmatprep.subr.bf16.mxu0 0
    %4205 = vmatpush1.bf16.msra.mxu0 0
    %4206 = vmatprep.subr.bf16.mxu0 0
    %4207 = vmatpush1.bf16.msra.mxu0 0
    %4208 = vmatprep.subr.bf16.mxu0 0
    %4209 = vmatpush1.bf16.msra.mxu0 0
    %4210 = vmatprep.subr.bf16.mxu0 0
    %4211 = vmatpush1.bf16.msra.mxu0 0
    %4212 = vmatprep.subr.bf16.mxu0 0
    %4213 = vmatpush1.bf16.msra.mxu0 0
    %4214 = vmatprep.subr.bf16.mxu0 0
    %4215 = vmatpush1.bf16.msra.mxu0 0
    %4216 = vmatprep.subr.bf16.mxu0 0
    %4217 = vmatpush1.bf16.msra.mxu0 0
    %4218 = vmatprep.subr.bf16.mxu0 0
    %4219 = vmatpush1.bf16.msra.mxu0 0
    %4220 = vmatprep.subr.bf16.mxu0 0
    %4221 = vmatpush1.bf16.msra.mxu0 0
    %4222 = vmatprep.subr.bf16.mxu0 0
    %4223 = vmatpush1.bf16.msra.mxu0 0
    %4224 = vmatprep.subr.bf16.mxu0 0
    %4225 = vmatpush1.bf16.msra.mxu0 0
    %4226 = vmatprep.subr.bf16.mxu0 0
    %4227 = vmatpush1.bf16.msra.mxu0 0
    %4228 = vmatprep.mubr.bf16.mxu0 0
    %4229 = vmatmul.mubr.bf16.gmra.mrb[0].mxu0 %v4191
    %v4230 = vpop.f32.mrb[0].mxu0
    %v4231 = vadd.f32 0.0, %v4230
    %v4232 = vpop.f32.mrb[0].mxu0
    %v4233 = vpop.f32.mrb[0].mxu0
    %v4234 = vadd.f32 0.0, %v4233
    %v4235 = vpop.f32.mrb[0].mxu0
    %4236 = vmatprep.mubr.bf16.mxu0 0
    %4237 = vmatmul.mubr.bf16.gmra.mrb[0].mxu0 %v4194
    %v4238 = vpop.f32.mrb[0].mxu0
    %v4239 = vadd.f32 0.0, %v4238
    %v4240 = vpop.f32.mrb[0].mxu0
    %v4241 = vpop.f32.mrb[0].mxu0
    %v4242 = vadd.f32 0.0, %v4241
    %v4243 = vpop.f32.mrb[0].mxu0
    %4244 = vdwg.mxu0
    %v4245 = vpack.c.bf16 %v4234, %v4231
    %v4246 = vpack.c.bf16 %v4242, %v4239
    %s4247 = scalar_lea.vmem [#allocation32], 64
    %v4248 = vld [vmem:[%s4247] sm:$0xf]
    %v4249 = vld [vmem:[%s4247 + $0x4] sm:$0xf]
    %v4250 = vld [vmem:[%s4247 + $0x8] sm:$0xf]
    %v4251 = vld [vmem:[%s4247 + $0xc] sm:$0xf]
    %v4252 = vld [vmem:[%s4247 + $0x10] sm:$0xf]
    %v4253 = vld [vmem:[%s4247 + $0x14] sm:$0xf]
    %v4254 = vld [vmem:[%s4247 + $0x18] sm:$0xf]
    %v4255 = vld [vmem:[%s4247 + $0x1c] sm:$0xf]
    %v4256 = vld [vmem:[%s4247 + $0x20] sm:$0xf]
    %v4257 = vld [vmem:[%s4247 + $0x24] sm:$0xf]
    %v4258 = vld [vmem:[%s4247 + $0x28] sm:$0xf]
    %v4259 = vld [vmem:[%s4247 + $0x2c] sm:$0xf]
    %v4260 = vld [vmem:[%s4247 + $0x30] sm:$0xf]
    %v4261 = vld [vmem:[%s4247 + $0x34] sm:$0xf]
    %v4262 = vld [vmem:[%s4247 + $0x38] sm:$0xf]
    %v4263 = vld [vmem:[%s4247 + $0x3c] sm:$0xf]
    %v4280 = vunpack.c.l.b16 %v4248
    %v4281 = vunpack.c.l.b16 %v4249
    %v4282 = vunpack.c.l.b16 %v4250
    %v4283 = vunpack.c.l.b16 %v4251
    %v4284 = vunpack.c.l.b16 %v4252
    %v4285 = vunpack.c.l.b16 %v4253
    %v4286 = vunpack.c.l.b16 %v4254
    %v4287 = vunpack.c.l.b16 %v4255
    %v4288 = vunpack.c.l.b16 %v4256
    %v4289 = vunpack.c.l.b16 %v4257
    %v4290 = vunpack.c.l.b16 %v4258
    %v4291 = vunpack.c.l.b16 %v4259
    %v4292 = vunpack.c.l.b16 %v4260
    %v4293 = vunpack.c.l.b16 %v4261
    %v4294 = vunpack.c.l.b16 %v4262
    %v4295 = vunpack.c.l.b16 %v4263
    %v4296 = vpack.c.b16 %v4281, %v4280
    %v4297 = vpack.c.b16 %v4283, %v4282
    %v4298 = vpack.c.b16 %v4285, %v4284
    %v4299 = vpack.c.b16 %v4287, %v4286
    %v4300 = vpack.c.b16 %v4289, %v4288
    %v4301 = vpack.c.b16 %v4291, %v4290
    %v4302 = vpack.c.b16 %v4293, %v4292
    %v4303 = vpack.c.b16 %v4295, %v4294
    %4312 = vmatprep.subr.bf16.mxu0 0
    %4313 = vmatpush1.bf16.msra.mxu0 %v4296
    %4314 = vmatprep.subr.bf16.mxu0 0
    %4315 = vmatpush1.bf16.msra.mxu0 %v4297
    %4316 = vmatprep.subr.bf16.mxu0 0
    %4317 = vmatpush1.bf16.msra.mxu0 %v4298
    %4318 = vmatprep.subr.bf16.mxu0 0
    %4319 = vmatpush1.bf16.msra.mxu0 %v4299
    %4320 = vmatprep.subr.bf16.mxu0 0
    %4321 = vmatpush1.bf16.msra.mxu0 %v4300
    %4322 = vmatprep.subr.bf16.mxu0 0
    %4323 = vmatpush1.bf16.msra.mxu0 %v4301
    %4324 = vmatprep.subr.bf16.mxu0 0
    %4325 = vmatpush1.bf16.msra.mxu0 %v4302
    %4326 = vmatprep.subr.bf16.mxu0 0
    %4327 = vmatpush1.bf16.msra.mxu0 %v4303
    %4328 = vmatprep.subr.bf16.mxu0 0
    %4329 = vmatpush1.bf16.msra.mxu0 0
    %4330 = vmatprep.subr.bf16.mxu0 0
    %4331 = vmatpush1.bf16.msra.mxu0 0
    %4332 = vmatprep.subr.bf16.mxu0 0
    %4333 = vmatpush1.bf16.msra.mxu0 0
    %4334 = vmatprep.subr.bf16.mxu0 0
    %4335 = vmatpush1.bf16.msra.mxu0 0
    %4336 = vmatprep.subr.bf16.mxu0 0
    %4337 = vmatpush1.bf16.msra.mxu0 0
    %4338 = vmatprep.subr.bf16.mxu0 0
    %4339 = vmatpush1.bf16.msra.mxu0 0
    %4340 = vmatprep.subr.bf16.mxu0 0
    %4341 = vmatpush1.bf16.msra.mxu0 0
    %4342 = vmatprep.subr.bf16.mxu0 0
    %4343 = vmatpush1.bf16.msra.mxu0 0
    %4344 = vmatprep.mubr.bf16.mxu0 0
    %4345 = vmatmul.mubr.bf16.gmra.mrb[0].mxu0 %v4245
    %v4346 = vpop.f32.mrb[0].mxu0
    %v4347 = vadd.f32 0.0, %v4346
    %v4348 = vpop.f32.mrb[0].mxu0
    %v4349 = vpop.f32.mrb[0].mxu0
    %v4350 = vadd.f32 0.0, %v4349
    %v4351 = vpop.f32.mrb[0].mxu0
    %4352 = vmatprep.mubr.bf16.mxu0 0
    %4353 = vmatmul.mubr.bf16.gmra.mrb[0].mxu0 %v4246
    %v4354 = vpop.f32.mrb[0].mxu0
    %v4355 = vadd.f32 0.0, %v4354
    %v4356 = vpop.f32.mrb[0].mxu0
    %v4357 = vpop.f32.mrb[0].mxu0
    %v4358 = vadd.f32 0.0, %v4357
    %v4359 = vpop.f32.mrb[0].mxu0
    %4360 = vdwg.mxu0
    %v4361 = vadd.f32 %v4171, %v4347
    %v4362 = vadd.f32 %v4172, %v4350
    %v4363 = vadd.f32 %v4173, %v4355
    %v4364 = vadd.f32 %v4174, %v4358
    %s4365 = scalar_lea.vmem %s49, 32
    %v4366 = vld [vmem:[%s4365] sm:$0xf]
    %v4367 = vld [vmem:[%s4365 + $0x4] sm:$0xf]
    %v4368 = vld [vmem:[%s4365 + $0x8] sm:$0xf]
    %v4369 = vld [vmem:[%s4365 + $0xc] sm:$0xf]
    %v4374 = vunpack.c.l.b16 %v4366
    %v4375 = vunpack.c.l.b16 %v4367
    %v4376 = vunpack.c.l.b16 %v4368
    %v4377 = vunpack.c.l.b16 %v4369
    %v4378 = vpack.c.b16 %v4375, %v4374
    %v4379 = vpack.c.b16 %v4377, %v4376
    %v4381 = vsel %vm457, %v4378, 0
    %v4384 = vsel %vm457, %v4379, 0
    %4386 = vmatprep.subr.bf16.mxu0 0
    %4387 = vmatpush1.bf16.msra.mxu0 %v3981
    %4388 = vmatprep.subr.bf16.mxu0 0
    %4389 = vmatpush1.bf16.msra.mxu0 %v3982
    %4390 = vmatprep.subr.bf16.mxu0 0
    %4391 = vmatpush1.bf16.msra.mxu0 0
    %4392 = vmatprep.subr.bf16.mxu0 0
    %4393 = vmatpush1.bf16.msra.mxu0 0
    %4394 = vmatprep.subr.bf16.mxu0 0
    %4395 = vmatpush1.bf16.msra.mxu0 0
    %4396 = vmatprep.subr.bf16.mxu0 0
    %4397 = vmatpush1.bf16.msra.mxu0 0
    %4398 = vmatprep.subr.bf16.mxu0 0
    %4399 = vmatpush1.bf16.msra.mxu0 0
    %4400 = vmatprep.subr.bf16.mxu0 0
    %4401 = vmatpush1.bf16.msra.mxu0 0
    %4402 = vmatprep.subr.bf16.mxu0 0
    %4403 = vmatpush1.bf16.msra.mxu0 0
    %4404 = vmatprep.subr.bf16.mxu0 0
    %4405 = vmatpush1.bf16.msra.mxu0 0
    %4406 = vmatprep.subr.bf16.mxu0 0
    %4407 = vmatpush1.bf16.msra.mxu0 0
    %4408 = vmatprep.subr.bf16.mxu0 0
    %4409 = vmatpush1.bf16.msra.mxu0 0
    %4410 = vmatprep.subr.bf16.mxu0 0
    %4411 = vmatpush1.bf16.msra.mxu0 0
    %4412 = vmatprep.subr.bf16.mxu0 0
    %4413 = vmatpush1.bf16.msra.mxu0 0
    %4414 = vmatprep.subr.bf16.mxu0 0
    %4415 = vmatpush1.bf16.msra.mxu0 0
    %4416 = vmatprep.subr.bf16.mxu0 0
    %4417 = vmatpush1.bf16.msra.mxu0 0
    %4418 = vmatprep.mubr.bf16.mxu0 0
    %4419 = vmatmul.mubr.bf16.gmra.mrb[0].mxu0 %v4381
    %v4420 = vpop.f32.mrb[0].mxu0
    %v4421 = vadd.f32 0.0, %v4420
    %v4422 = vpop.f32.mrb[0].mxu0
    %v4423 = vpop.f32.mrb[0].mxu0
    %v4424 = vadd.f32 0.0, %v4423
    %v4425 = vpop.f32.mrb[0].mxu0
    %4426 = vmatprep.mubr.bf16.mxu0 0
    %4427 = vmatmul.mubr.bf16.gmra.mrb[0].mxu0 %v4384
    %v4428 = vpop.f32.mrb[0].mxu0
    %v4429 = vadd.f32 0.0, %v4428
    %v4430 = vpop.f32.mrb[0].mxu0
    %v4431 = vpop.f32.mrb[0].mxu0
    %v4432 = vadd.f32 0.0, %v4431
    %v4433 = vpop.f32.mrb[0].mxu0
    %4434 = vdwg.mxu0
    %v4435 = vpack.c.bf16 %v4424, %v4421
    %v4436 = vpack.c.bf16 %v4432, %v4429
    %s4437 = scalar_lea.vmem [#allocation32], 128
    %v4438 = vld [vmem:[%s4437] sm:$0xf]
    %v4439 = vld [vmem:[%s4437 + $0x4] sm:$0xf]
    %v4440 = vld [vmem:[%s4437 + $0x8] sm:$0xf]
    %v4441 = vld [vmem:[%s4437 + $0xc] sm:$0xf]
    %v4442 = vld [vmem:[%s4437 + $0x10] sm:$0xf]
    %v4443 = vld [vmem:[%s4437 + $0x14] sm:$0xf]
    %v4444 = vld [vmem:[%s4437 + $0x18] sm:$0xf]
    %v4445 = vld [vmem:[%s4437 + $0x1c] sm:$0xf]
    %v4446 = vld [vmem:[%s4437 + $0x20] sm:$0xf]
    %v4447 = vld [vmem:[%s4437 + $0x24] sm:$0xf]
    %v4448 = vld [vmem:[%s4437 + $0x28] sm:$0xf]
    %v4449 = vld [vmem:[%s4437 + $0x2c] sm:$0xf]
    %v4450 = vld [vmem:[%s4437 + $0x30] sm:$0xf]
    %v4451 = vld [vmem:[%s4437 + $0x34] sm:$0xf]
    %v4452 = vld [vmem:[%s4437 + $0x38] sm:$0xf]
    %v4453 = vld [vmem:[%s4437 + $0x3c] sm:$0xf]
    %v4470 = vunpack.c.l.b16 %v4438
    %v4471 = vunpack.c.l.b16 %v4439
    %v4472 = vunpack.c.l.b16 %v4440
    %v4473 = vunpack.c.l.b16 %v4441
    %v4474 = vunpack.c.l.b16 %v4442
    %v4475 = vunpack.c.l.b16 %v4443
    %v4476 = vunpack.c.l.b16 %v4444
    %v4477 = vunpack.c.l.b16 %v4445
    %v4478 = vunpack.c.l.b16 %v4446
    %v4479 = vunpack.c.l.b16 %v4447
    %v4480 = vunpack.c.l.b16 %v4448
    %v4481 = vunpack.c.l.b16 %v4449
    %v4482 = vunpack.c.l.b16 %v4450
    %v4483 = vunpack.c.l.b16 %v4451
    %v4484 = vunpack.c.l.b16 %v4452
    %v4485 = vunpack.c.l.b16 %v4453
    %v4486 = vpack.c.b16 %v4471, %v4470
    %v4487 = vpack.c.b16 %v4473, %v4472
    %v4488 = vpack.c.b16 %v4475, %v4474
    %v4489 = vpack.c.b16 %v4477, %v4476
    %v4490 = vpack.c.b16 %v4479, %v4478
    %v4491 = vpack.c.b16 %v4481, %v4480
    %v4492 = vpack.c.b16 %v4483, %v4482
    %v4493 = vpack.c.b16 %v4485, %v4484
    %4502 = vmatprep.subr.bf16.mxu0 0
    %4503 = vmatpush1.bf16.msra.mxu0 %v4486
    %4504 = vmatprep.subr.bf16.mxu0 0
    %4505 = vmatpush1.bf16.msra.mxu0 %v4487
    %4506 = vmatprep.subr.bf16.mxu0 0
    %4507 = vmatpush1.bf16.msra.mxu0 %v4488
    %4508 = vmatprep.subr.bf16.mxu0 0
    %4509 = vmatpush1.bf16.msra.mxu0 %v4489
    %4510 = vmatprep.subr.bf16.mxu0 0
    %4511 = vmatpush1.bf16.msra.mxu0 %v4490
    %4512 = vmatprep.subr.bf16.mxu0 0
    %4513 = vmatpush1.bf16.msra.mxu0 %v4491
    %4514 = vmatprep.subr.bf16.mxu0 0
    %4515 = vmatpush1.bf16.msra.mxu0 %v4492
    %4516 = vmatprep.subr.bf16.mxu0 0
    %4517 = vmatpush1.bf16.msra.mxu0 %v4493
    %4518 = vmatprep.subr.bf16.mxu0 0
    %4519 = vmatpush1.bf16.msra.mxu0 0
    %4520 = vmatprep.subr.bf16.mxu0 0
    %4521 = vmatpush1.bf16.msra.mxu0 0
    %4522 = vmatprep.subr.bf16.mxu0 0
    %4523 = vmatpush1.bf16.msra.mxu0 0
    %4524 = vmatprep.subr.bf16.mxu0 0
    %4525 = vmatpush1.bf16.msra.mxu0 0
    %4526 = vmatprep.subr.bf16.mxu0 0
    %4527 = vmatpush1.bf16.msra.mxu0 0
    %4528 = vmatprep.subr.bf16.mxu0 0
    %4529 = vmatpush1.bf16.msra.mxu0 0
    %4530 = vmatprep.subr.bf16.mxu0 0
    %4531 = vmatpush1.bf16.msra.mxu0 0
    %4532 = vmatprep.subr.bf16.mxu0 0
    %4533 = vmatpush1.bf16.msra.mxu0 0
    %4534 = vmatprep.mubr.bf16.mxu0 0
    %4535 = vmatmul.mubr.bf16.gmra.mrb[0].mxu0 %v4435
    %v4536 = vpop.f32.mrb[0].mxu0
    %v4537 = vadd.f32 0.0, %v4536
    %v4538 = vpop.f32.mrb[0].mxu0
    %v4539 = vpop.f32.mrb[0].mxu0
    %v4540 = vadd.f32 0.0, %v4539
    %v4541 = vpop.f32.mrb[0].mxu0
    %4542 = vmatprep.mubr.bf16.mxu0 0
    %4543 = vmatmul.mubr.bf16.gmra.mrb[0].mxu0 %v4436
    %v4544 = vpop.f32.mrb[0].mxu0
    %v4545 = vadd.f32 0.0, %v4544
    %v4546 = vpop.f32.mrb[0].mxu0
    %v4547 = vpop.f32.mrb[0].mxu0
    %v4548 = vadd.f32 0.0, %v4547
    %v4549 = vpop.f32.mrb[0].mxu0
    %4550 = vdwg.mxu0
    %v4551 = vadd.f32 %v4361, %v4537
    %v4552 = vadd.f32 %v4362, %v4540
    %v4553 = vadd.f32 %v4363, %v4545
    %v4554 = vadd.f32 %v4364, %v4548
    %v4555 = vmax.f32 %v4551, 0.0
    %v4556 = vmax.f32 %v4552, 0.0
    %v4557 = vmax.f32 %v4553, 0.0
    %v4558 = vmax.f32 %v4554, 0.0
    %v4559 = vpack.c.bf16 %v4556, %v4555
    %v4560 = vpack.c.bf16 %v4558, %v4557
    %v4561 = vld [vmem:[#allocation37] sm:$0xff]
    %v4562 = vld [vmem:[#allocation37 + $0x8] sm:$0xff]
    %v4563 = vld [vmem:[#allocation37 + $0x10] sm:$0xff]
    %v4564 = vld [vmem:[#allocation37 + $0x18] sm:$0xff]
    %v4565 = vld [vmem:[#allocation37 + $0x20] sm:$0x3]
    %v4566 = vld [vmem:[#allocation35] sm:$0xf]
    %v4567 = vld [vmem:[#allocation35 + $0x4] sm:$0xf]
    %v4568 = vld [vmem:[#allocation35 + $0x8] sm:$0xf]
    %v4569 = vld [vmem:[#allocation35 + $0xc] sm:$0xf]
    %v4570 = vld [vmem:[#allocation35 + $0x10] sm:$0x1]
    %v4576 = vunpack.c.l.b16 %v4566
    %v4577 = vunpack.c.l.b16 %v4567
    %v4578 = vunpack.c.l.b16 %v4568
    %v4579 = vunpack.c.l.b16 %v4569
    %v4580 = vunpack.c.l.b16 %v4570
    %v4581 = vpack.c.b16 %v4577, %v4576
    %v4582 = vpack.c.b16 %v4579, %v4578
    %v4583 = vpack.c.b16 %v4580, %v4580
    %v4585 = vsel %vm457, %v4581, 0
    %v4588 = vsel %vm457, %v4582, 0
    %v4591 = vsel %vm457, %v4583, 0
    %4593 = vmatprep.subr.bf16.mxu0 0
    %4594 = vmatpush1.bf16.msra.mxu0 %v4559
    %4595 = vmatprep.subr.bf16.mxu0 0
    %4596 = vmatpush1.bf16.msra.mxu0 %v4560
    %4597 = vmatprep.subr.bf16.mxu0 0
    %4598 = vmatpush1.bf16.msra.mxu0 0
    %4599 = vmatprep.subr.bf16.mxu0 0
    %4600 = vmatpush1.bf16.msra.mxu0 0
    %4601 = vmatprep.subr.bf16.mxu0 0
    %4602 = vmatpush1.bf16.msra.mxu0 0
    %4603 = vmatprep.subr.bf16.mxu0 0
    %4604 = vmatpush1.bf16.msra.mxu0 0
    %4605 = vmatprep.subr.bf16.mxu0 0
    %4606 = vmatpush1.bf16.msra.mxu0 0
    %4607 = vmatprep.subr.bf16.mxu0 0
    %4608 = vmatpush1.bf16.msra.mxu0 0
    %4609 = vmatprep.subr.bf16.mxu0 0
    %4610 = vmatpush1.bf16.msra.mxu0 0
    %4611 = vmatprep.subr.bf16.mxu0 0
    %4612 = vmatpush1.bf16.msra.mxu0 0
    %4613 = vmatprep.subr.bf16.mxu0 0
    %4614 = vmatpush1.bf16.msra.mxu0 0
    %4615 = vmatprep.subr.bf16.mxu0 0
    %4616 = vmatpush1.bf16.msra.mxu0 0
    %4617 = vmatprep.subr.bf16.mxu0 0
    %4618 = vmatpush1.bf16.msra.mxu0 0
    %4619 = vmatprep.subr.bf16.mxu0 0
    %4620 = vmatpush1.bf16.msra.mxu0 0
    %4621 = vmatprep.subr.bf16.mxu0 0
    %4622 = vmatpush1.bf16.msra.mxu0 0
    %4623 = vmatprep.subr.bf16.mxu0 0
    %4624 = vmatpush1.bf16.msra.mxu0 0
    %4625 = vmatprep.mubr.bf16.mxu0 0
    %4626 = vmatmul.mubr.bf16.gmra.mrb[0].mxu0 %v4585
    %v4627 = vpop.f32.mrb[0].mxu0
    %v4628 = vadd.f32 0.0, %v4627
    %v4629 = vpop.f32.mrb[0].mxu0
    %v4630 = vpop.f32.mrb[0].mxu0
    %v4631 = vadd.f32 0.0, %v4630
    %v4632 = vpop.f32.mrb[0].mxu0
    %4633 = vmatprep.mubr.bf16.mxu0 0
    %4634 = vmatmul.mubr.bf16.gmra.mrb[0].mxu0 %v4588
    %v4635 = vpop.f32.mrb[0].mxu0
    %v4636 = vadd.f32 0.0, %v4635
    %v4637 = vpop.f32.mrb[0].mxu0
    %v4638 = vpop.f32.mrb[0].mxu0
    %v4639 = vadd.f32 0.0, %v4638
    %v4640 = vpop.f32.mrb[0].mxu0
    %4641 = vmatprep.mubr.bf16.mxu0 0
    %4642 = vmatmul.mubr.bf16.gmra.mrb[0].mxu0 %v4591
    %v4643 = vpop.f32.mrb[0].mxu0
    %v4644 = vadd.f32 0.0, %v4643
    %v4645 = vpop.f32.mrb[0].mxu0
    %v4646 = vpop.f32.mrb[0].mxu0
    %v4647 = vpop.f32.mrb[0].mxu0
    %4648 = vdwg.mxu0
    %v4649 = vpack.c.bf16 %v4631, %v4628
    %v4650 = vpack.c.bf16 %v4639, %v4636
    %v4651 = vpack.c.bf16 %v4644, %v4644
    %v4652 = vld [vmem:[%s53] sm:$0xf]
    %v4653 = vld [vmem:[%s53 + $0x4] sm:$0xf]
    %v4654 = vld [vmem:[%s53 + $0x8] sm:$0xf]
    %v4655 = vld [vmem:[%s53 + $0xc] sm:$0xf]
    %v4656 = vld [vmem:[%s53 + $0x10] sm:$0xf]
    %v4657 = vld [vmem:[%s53 + $0x14] sm:$0xf]
    %v4658 = vld [vmem:[%s53 + $0x18] sm:$0xf]
    %v4659 = vld [vmem:[%s53 + $0x1c] sm:$0xf]
    %v4660 = vld [vmem:[%s53 + $0x20] sm:$0xf]
    %v4661 = vld [vmem:[%s53 + $0x24] sm:$0xf]
    %v4662 = vld [vmem:[%s53 + $0x28] sm:$0xf]
    %v4663 = vld [vmem:[%s53 + $0x2c] sm:$0xf]
    %v4664 = vld [vmem:[%s53 + $0x30] sm:$0xf]
    %v4665 = vld [vmem:[%s53 + $0x34] sm:$0xf]
    %v4666 = vld [vmem:[%s53 + $0x38] sm:$0xf]
    %v4667 = vld [vmem:[%s53 + $0x3c] sm:$0xf]
    %v4684 = vunpack.c.l.b16 %v4652
    %v4685 = vunpack.c.l.b16 %v4653
    %v4686 = vunpack.c.l.b16 %v4654
    %v4687 = vunpack.c.l.b16 %v4655
    %v4688 = vunpack.c.l.b16 %v4656
    %v4689 = vunpack.c.l.b16 %v4657
    %v4690 = vunpack.c.l.b16 %v4658
    %v4691 = vunpack.c.l.b16 %v4659
    %v4692 = vunpack.c.l.b16 %v4660
    %v4693 = vunpack.c.l.b16 %v4661
    %v4694 = vunpack.c.l.b16 %v4662
    %v4695 = vunpack.c.l.b16 %v4663
    %v4696 = vunpack.c.l.b16 %v4664
    %v4697 = vunpack.c.l.b16 %v4665
    %v4698 = vunpack.c.l.b16 %v4666
    %v4699 = vunpack.c.l.b16 %v4667
    %v4700 = vpack.c.b16 %v4685, %v4684
    %v4701 = vpack.c.b16 %v4687, %v4686
    %v4702 = vpack.c.b16 %v4689, %v4688
    %v4703 = vpack.c.b16 %v4691, %v4690
    %v4704 = vpack.c.b16 %v4693, %v4692
    %v4705 = vpack.c.b16 %v4695, %v4694
    %v4706 = vpack.c.b16 %v4697, %v4696
    %v4707 = vpack.c.b16 %v4699, %v4698
    %4716 = vmatprep.subr.bf16.mxu0 0
    %4717 = vmatpush1.bf16.msra.mxu0 %v4700
    %4718 = vmatprep.subr.bf16.mxu0 0
    %4719 = vmatpush1.bf16.msra.mxu0 %v4701
    %4720 = vmatprep.subr.bf16.mxu0 0
    %4721 = vmatpush1.bf16.msra.mxu0 %v4702
    %4722 = vmatprep.subr.bf16.mxu0 0
    %4723 = vmatpush1.bf16.msra.mxu0 %v4703
    %4724 = vmatprep.subr.bf16.mxu0 0
    %4725 = vmatpush1.bf16.msra.mxu0 %v4704
    %4726 = vmatprep.subr.bf16.mxu0 0
    %4727 = vmatpush1.bf16.msra.mxu0 %v4705
    %4728 = vmatprep.subr.bf16.mxu0 0
    %4729 = vmatpush1.bf16.msra.mxu0 %v4706
    %4730 = vmatprep.subr.bf16.mxu0 0
    %4731 = vmatpush1.bf16.msra.mxu0 %v4707
    %4732 = vmatprep.subr.bf16.mxu0 0
    %4733 = vmatpush1.bf16.msra.mxu0 0
    %4734 = vmatprep.subr.bf16.mxu0 0
    %4735 = vmatpush1.bf16.msra.mxu0 0
    %4736 = vmatprep.subr.bf16.mxu0 0
    %4737 = vmatpush1.bf16.msra.mxu0 0
    %4738 = vmatprep.subr.bf16.mxu0 0
    %4739 = vmatpush1.bf16.msra.mxu0 0
    %4740 = vmatprep.subr.bf16.mxu0 0
    %4741 = vmatpush1.bf16.msra.mxu0 0
    %4742 = vmatprep.subr.bf16.mxu0 0
    %4743 = vmatpush1.bf16.msra.mxu0 0
    %4744 = vmatprep.subr.bf16.mxu0 0
    %4745 = vmatpush1.bf16.msra.mxu0 0
    %4746 = vmatprep.subr.bf16.mxu0 0
    %4747 = vmatpush1.bf16.msra.mxu0 0
    %4748 = vmatprep.mubr.bf16.mxu0 0
    %4749 = vmatmul.mubr.bf16.gmra.mrb[0].mxu0 %v4649
    %v4750 = vpop.f32.mrb[0].mxu0
    %v4751 = vadd.f32 0.0, %v4750
    %v4752 = vpop.f32.mrb[0].mxu0
    %v4753 = vpop.f32.mrb[0].mxu0
    %v4754 = vadd.f32 0.0, %v4753
    %v4755 = vpop.f32.mrb[0].mxu0
    %4756 = vmatprep.mubr.bf16.mxu0 0
    %4757 = vmatmul.mubr.bf16.gmra.mrb[0].mxu0 %v4650
    %v4758 = vpop.f32.mrb[0].mxu0
    %v4759 = vadd.f32 0.0, %v4758
    %v4760 = vpop.f32.mrb[0].mxu0
    %v4761 = vpop.f32.mrb[0].mxu0
    %v4762 = vadd.f32 0.0, %v4761
    %v4763 = vpop.f32.mrb[0].mxu0
    %4764 = vmatprep.mubr.bf16.mxu0 0
    %4765 = vmatmul.mubr.bf16.gmra.mrb[0].mxu0 %v4651
    %v4766 = vpop.f32.mrb[0].mxu0
    %v4767 = vadd.f32 0.0, %v4766
    %v4768 = vpop.f32.mrb[0].mxu0
    %v4769 = vpop.f32.mrb[0].mxu0
    %v4770 = vpop.f32.mrb[0].mxu0
    %4771 = vdwg.mxu0
    %v4772 = vadd.f32 %v4561, %v4751
    %v4773 = vadd.f32 %v4562, %v4754
    %v4774 = vadd.f32 %v4563, %v4759
    %v4775 = vadd.f32 %v4564, %v4762
    %v4776 = vadd.f32 %v4565, %v4767
    %s4777 = scalar_lea.vmem [#allocation35], 20
    %v4778 = vld [vmem:[%s4777] sm:$0xf]
    %v4779 = vld [vmem:[%s4777 + $0x4] sm:$0xf]
    %v4780 = vld [vmem:[%s4777 + $0x8] sm:$0xf]
    %v4781 = vld [vmem:[%s4777 + $0xc] sm:$0xf]
    %v4782 = vld [vmem:[%s4777 + $0x10] sm:$0x1]
    %v4788 = vunpack.c.l.b16 %v4778
    %v4789 = vunpack.c.l.b16 %v4779
    %v4790 = vunpack.c.l.b16 %v4780
    %v4791 = vunpack.c.l.b16 %v4781
    %v4792 = vunpack.c.l.b16 %v4782
    %v4793 = vpack.c.b16 %v4789, %v4788
    %v4794 = vpack.c.b16 %v4791, %v4790
    %v4795 = vpack.c.b16 %v4792, %v4792
    %v4797 = vsel %vm457, %v4793, 0
    %v4800 = vsel %vm457, %v4794, 0
    %v4803 = vsel %vm457, %v4795, 0
    %4805 = vmatprep.subr.bf16.mxu0 0
    %4806 = vmatpush1.bf16.msra.mxu0 %v4559
    %4807 = vmatprep.subr.bf16.mxu0 0
    %4808 = vmatpush1.bf16.msra.mxu0 %v4560
    %4809 = vmatprep.subr.bf16.mxu0 0
    %4810 = vmatpush1.bf16.msra.mxu0 0
    %4811 = vmatprep.subr.bf16.mxu0 0
    %4812 = vmatpush1.bf16.msra.mxu0 0
    %4813 = vmatprep.subr.bf16.mxu0 0
    %4814 = vmatpush1.bf16.msra.mxu0 0
    %4815 = vmatprep.subr.bf16.mxu0 0
    %4816 = vmatpush1.bf16.msra.mxu0 0
    %4817 = vmatprep.subr.bf16.mxu0 0
    %4818 = vmatpush1.bf16.msra.mxu0 0
    %4819 = vmatprep.subr.bf16.mxu0 0
    %4820 = vmatpush1.bf16.msra.mxu0 0
    %4821 = vmatprep.subr.bf16.mxu0 0
    %4822 = vmatpush1.bf16.msra.mxu0 0
    %4823 = vmatprep.subr.bf16.mxu0 0
    %4824 = vmatpush1.bf16.msra.mxu0 0
    %4825 = vmatprep.subr.bf16.mxu0 0
    %4826 = vmatpush1.bf16.msra.mxu0 0
    %4827 = vmatprep.subr.bf16.mxu0 0
    %4828 = vmatpush1.bf16.msra.mxu0 0
    %4829 = vmatprep.subr.bf16.mxu0 0
    %4830 = vmatpush1.bf16.msra.mxu0 0
    %4831 = vmatprep.subr.bf16.mxu0 0
    %4832 = vmatpush1.bf16.msra.mxu0 0
    %4833 = vmatprep.subr.bf16.mxu0 0
    %4834 = vmatpush1.bf16.msra.mxu0 0
    %4835 = vmatprep.subr.bf16.mxu0 0
    %4836 = vmatpush1.bf16.msra.mxu0 0
    %4837 = vmatprep.mubr.bf16.mxu0 0
    %4838 = vmatmul.mubr.bf16.gmra.mrb[0].mxu0 %v4797
    %v4839 = vpop.f32.mrb[0].mxu0
    %v4840 = vadd.f32 0.0, %v4839
    %v4841 = vpop.f32.mrb[0].mxu0
    %v4842 = vpop.f32.mrb[0].mxu0
    %v4843 = vadd.f32 0.0, %v4842
    %v4844 = vpop.f32.mrb[0].mxu0
    %4845 = vmatprep.mubr.bf16.mxu0 0
    %4846 = vmatmul.mubr.bf16.gmra.mrb[0].mxu0 %v4800
    %v4847 = vpop.f32.mrb[0].mxu0
    %v4848 = vadd.f32 0.0, %v4847
    %v4849 = vpop.f32.mrb[0].mxu0
    %v4850 = vpop.f32.mrb[0].mxu0
    %v4851 = vadd.f32 0.0, %v4850
    %v4852 = vpop.f32.mrb[0].mxu0
    %4853 = vmatprep.mubr.bf16.mxu0 0
    %4854 = vmatmul.mubr.bf16.gmra.mrb[0].mxu0 %v4803
    %v4855 = vpop.f32.mrb[0].mxu0
    %v4856 = vadd.f32 0.0, %v4855
    %v4857 = vpop.f32.mrb[0].mxu0
    %v4858 = vpop.f32.mrb[0].mxu0
    %v4859 = vpop.f32.mrb[0].mxu0
    %4860 = vdwg.mxu0
    %v4861 = vpack.c.bf16 %v4843, %v4840
    %v4862 = vpack.c.bf16 %v4851, %v4848
    %v4863 = vpack.c.bf16 %v4856, %v4856
    %s4864 = scalar_lea.vmem %s53, 64
    %v4865 = vld [vmem:[%s4864] sm:$0xf]
    %v4866 = vld [vmem:[%s4864 + $0x4] sm:$0xf]
    %v4867 = vld [vmem:[%s4864 + $0x8] sm:$0xf]
    %v4868 = vld [vmem:[%s4864 + $0xc] sm:$0xf]
    %v4869 = vld [vmem:[%s4864 + $0x10] sm:$0xf]
    %v4870 = vld [vmem:[%s4864 + $0x14] sm:$0xf]
    %v4871 = vld [vmem:[%s4864 + $0x18] sm:$0xf]
    %v4872 = vld [vmem:[%s4864 + $0x1c] sm:$0xf]
    %v4873 = vld [vmem:[%s4864 + $0x20] sm:$0xf]
    %v4874 = vld [vmem:[%s4864 + $0x24] sm:$0xf]
    %v4875 = vld [vmem:[%s4864 + $0x28] sm:$0xf]
    %v4876 = vld [vmem:[%s4864 + $0x2c] sm:$0xf]
    %v4877 = vld [vmem:[%s4864 + $0x30] sm:$0xf]
    %v4878 = vld [vmem:[%s4864 + $0x34] sm:$0xf]
    %v4879 = vld [vmem:[%s4864 + $0x38] sm:$0xf]
    %v4880 = vld [vmem:[%s4864 + $0x3c] sm:$0xf]
    %v4897 = vunpack.c.l.b16 %v4865
    %v4898 = vunpack.c.l.b16 %v4866
    %v4899 = vunpack.c.l.b16 %v4867
    %v4900 = vunpack.c.l.b16 %v4868
    %v4901 = vunpack.c.l.b16 %v4869
    %v4902 = vunpack.c.l.b16 %v4870
    %v4903 = vunpack.c.l.b16 %v4871
    %v4904 = vunpack.c.l.b16 %v4872
    %v4905 = vunpack.c.l.b16 %v4873
    %v4906 = vunpack.c.l.b16 %v4874
    %v4907 = vunpack.c.l.b16 %v4875
    %v4908 = vunpack.c.l.b16 %v4876
    %v4909 = vunpack.c.l.b16 %v4877
    %v4910 = vunpack.c.l.b16 %v4878
    %v4911 = vunpack.c.l.b16 %v4879
    %v4912 = vunpack.c.l.b16 %v4880
    %v4913 = vpack.c.b16 %v4898, %v4897
    %v4914 = vpack.c.b16 %v4900, %v4899
    %v4915 = vpack.c.b16 %v4902, %v4901
    %v4916 = vpack.c.b16 %v4904, %v4903
    %v4917 = vpack.c.b16 %v4906, %v4905
    %v4918 = vpack.c.b16 %v4908, %v4907
    %v4919 = vpack.c.b16 %v4910, %v4909
    %v4920 = vpack.c.b16 %v4912, %v4911
    %4929 = vmatprep.subr.bf16.mxu0 0
    %4930 = vmatpush1.bf16.msra.mxu0 %v4913
    %4931 = vmatprep.subr.bf16.mxu0 0
    %4932 = vmatpush1.bf16.msra.mxu0 %v4914
    %4933 = vmatprep.subr.bf16.mxu0 0
    %4934 = vmatpush1.bf16.msra.mxu0 %v4915
    %4935 = vmatprep.subr.bf16.mxu0 0
    %4936 = vmatpush1.bf16.msra.mxu0 %v4916
    %4937 = vmatprep.subr.bf16.mxu0 0
    %4938 = vmatpush1.bf16.msra.mxu0 %v4917
    %4939 = vmatprep.subr.bf16.mxu0 0
    %4940 = vmatpush1.bf16.msra.mxu0 %v4918
    %4941 = vmatprep.subr.bf16.mxu0 0
    %4942 = vmatpush1.bf16.msra.mxu0 %v4919
    %4943 = vmatprep.subr.bf16.mxu0 0
    %4944 = vmatpush1.bf16.msra.mxu0 %v4920
    %4945 = vmatprep.subr.bf16.mxu0 0
    %4946 = vmatpush1.bf16.msra.mxu0 0
    %4947 = vmatprep.subr.bf16.mxu0 0
    %4948 = vmatpush1.bf16.msra.mxu0 0
    %4949 = vmatprep.subr.bf16.mxu0 0
    %4950 = vmatpush1.bf16.msra.mxu0 0
    %4951 = vmatprep.subr.bf16.mxu0 0
    %4952 = vmatpush1.bf16.msra.mxu0 0
    %4953 = vmatprep.subr.bf16.mxu0 0
    %4954 = vmatpush1.bf16.msra.mxu0 0
    %4955 = vmatprep.subr.bf16.mxu0 0
    %4956 = vmatpush1.bf16.msra.mxu0 0
    %4957 = vmatprep.subr.bf16.mxu0 0
    %4958 = vmatpush1.bf16.msra.mxu0 0
    %4959 = vmatprep.subr.bf16.mxu0 0
    %4960 = vmatpush1.bf16.msra.mxu0 0
    %4961 = vmatprep.mubr.bf16.mxu0 0
    %4962 = vmatmul.mubr.bf16.gmra.mrb[0].mxu0 %v4861
    %v4963 = vpop.f32.mrb[0].mxu0
    %v4964 = vadd.f32 0.0, %v4963
    %v4965 = vpop.f32.mrb[0].mxu0
    %v4966 = vpop.f32.mrb[0].mxu0
    %v4967 = vadd.f32 0.0, %v4966
    %v4968 = vpop.f32.mrb[0].mxu0
    %4969 = vmatprep.mubr.bf16.mxu0 0
    %4970 = vmatmul.mubr.bf16.gmra.mrb[0].mxu0 %v4862
    %v4971 = vpop.f32.mrb[0].mxu0
    %v4972 = vadd.f32 0.0, %v4971
    %v4973 = vpop.f32.mrb[0].mxu0
    %v4974 = vpop.f32.mrb[0].mxu0
    %v4975 = vadd.f32 0.0, %v4974
    %v4976 = vpop.f32.mrb[0].mxu0
    %4977 = vmatprep.mubr.bf16.mxu0 0
    %4978 = vmatmul.mubr.bf16.gmra.mrb[0].mxu0 %v4863
    %v4979 = vpop.f32.mrb[0].mxu0
    %v4980 = vadd.f32 0.0, %v4979
    %v4981 = vpop.f32.mrb[0].mxu0
    %v4982 = vpop.f32.mrb[0].mxu0
    %v4983 = vpop.f32.mrb[0].mxu0
    %4984 = vdwg.mxu0
    %v4985 = vadd.f32 %v4772, %v4964
    %v4986 = vadd.f32 %v4773, %v4967
    %v4987 = vadd.f32 %v4774, %v4972
    %v4988 = vadd.f32 %v4775, %v4975
    %v4989 = vadd.f32 %v4776, %v4980
    %s4990 = scalar_lea.vmem [#allocation35], 40
    %v4991 = vld [vmem:[%s4990] sm:$0xf]
    %v4992 = vld [vmem:[%s4990 + $0x4] sm:$0xf]
    %v4993 = vld [vmem:[%s4990 + $0x8] sm:$0xf]
    %v4994 = vld [vmem:[%s4990 + $0xc] sm:$0xf]
    %v4995 = vld [vmem:[%s4990 + $0x10] sm:$0x1]
    %v5001 = vunpack.c.l.b16 %v4991
    %v5002 = vunpack.c.l.b16 %v4992
    %v5003 = vunpack.c.l.b16 %v4993
    %v5004 = vunpack.c.l.b16 %v4994
    %v5005 = vunpack.c.l.b16 %v4995
    %v5006 = vpack.c.b16 %v5002, %v5001
    %v5007 = vpack.c.b16 %v5004, %v5003
    %v5008 = vpack.c.b16 %v5005, %v5005
    %v5010 = vsel %vm457, %v5006, 0
    %v5013 = vsel %vm457, %v5007, 0
    %v5016 = vsel %vm457, %v5008, 0
    %5018 = vmatprep.subr.bf16.mxu0 0
    %5019 = vmatpush1.bf16.msra.mxu0 %v4559
    %5020 = vmatprep.subr.bf16.mxu0 0
    %5021 = vmatpush1.bf16.msra.mxu0 %v4560
    %5022 = vmatprep.subr.bf16.mxu0 0
    %5023 = vmatpush1.bf16.msra.mxu0 0
    %5024 = vmatprep.subr.bf16.mxu0 0
    %5025 = vmatpush1.bf16.msra.mxu0 0
    %5026 = vmatprep.subr.bf16.mxu0 0
    %5027 = vmatpush1.bf16.msra.mxu0 0
    %5028 = vmatprep.subr.bf16.mxu0 0
    %5029 = vmatpush1.bf16.msra.mxu0 0
    %5030 = vmatprep.subr.bf16.mxu0 0
    %5031 = vmatpush1.bf16.msra.mxu0 0
    %5032 = vmatprep.subr.bf16.mxu0 0
    %5033 = vmatpush1.bf16.msra.mxu0 0
    %5034 = vmatprep.subr.bf16.mxu0 0
    %5035 = vmatpush1.bf16.msra.mxu0 0
    %5036 = vmatprep.subr.bf16.mxu0 0
    %5037 = vmatpush1.bf16.msra.mxu0 0
    %5038 = vmatprep.subr.bf16.mxu0 0
    %5039 = vmatpush1.bf16.msra.mxu0 0
    %5040 = vmatprep.subr.bf16.mxu0 0
    %5041 = vmatpush1.bf16.msra.mxu0 0
    %5042 = vmatprep.subr.bf16.mxu0 0
    %5043 = vmatpush1.bf16.msra.mxu0 0
    %5044 = vmatprep.subr.bf16.mxu0 0
    %5045 = vmatpush1.bf16.msra.mxu0 0
    %5046 = vmatprep.subr.bf16.mxu0 0
    %5047 = vmatpush1.bf16.msra.mxu0 0
    %5048 = vmatprep.subr.bf16.mxu0 0
    %5049 = vmatpush1.bf16.msra.mxu0 0
    %5050 = vmatprep.mubr.bf16.mxu0 0
    %5051 = vmatmul.mubr.bf16.gmra.mrb[0].mxu0 %v5010
    %v5052 = vpop.f32.mrb[0].mxu0
    %v5053 = vadd.f32 0.0, %v5052
    %v5054 = vpop.f32.mrb[0].mxu0
    %v5055 = vpop.f32.mrb[0].mxu0
    %v5056 = vadd.f32 0.0, %v5055
    %v5057 = vpop.f32.mrb[0].mxu0
    %5058 = vmatprep.mubr.bf16.mxu0 0
    %5059 = vmatmul.mubr.bf16.gmra.mrb[0].mxu0 %v5013
    %v5060 = vpop.f32.mrb[0].mxu0
    %v5061 = vadd.f32 0.0, %v5060
    %v5062 = vpop.f32.mrb[0].mxu0
    %v5063 = vpop.f32.mrb[0].mxu0
    %v5064 = vadd.f32 0.0, %v5063
    %v5065 = vpop.f32.mrb[0].mxu0
    %5066 = vmatprep.mubr.bf16.mxu0 0
    %5067 = vmatmul.mubr.bf16.gmra.mrb[0].mxu0 %v5016
    %v5068 = vpop.f32.mrb[0].mxu0
    %v5069 = vadd.f32 0.0, %v5068
    %v5070 = vpop.f32.mrb[0].mxu0
    %v5071 = vpop.f32.mrb[0].mxu0
    %v5072 = vpop.f32.mrb[0].mxu0
    %5073 = vdwg.mxu0
    %v5074 = vpack.c.bf16 %v5056, %v5053
    %v5075 = vpack.c.bf16 %v5064, %v5061
    %v5076 = vpack.c.bf16 %v5069, %v5069
    %s5077 = scalar_lea.vmem %s53, 128
    %v5078 = vld [vmem:[%s5077] sm:$0xf]
    %v5079 = vld [vmem:[%s5077 + $0x4] sm:$0xf]
    %v5080 = vld [vmem:[%s5077 + $0x8] sm:$0xf]
    %v5081 = vld [vmem:[%s5077 + $0xc] sm:$0xf]
    %v5082 = vld [vmem:[%s5077 + $0x10] sm:$0xf]
    %v5083 = vld [vmem:[%s5077 + $0x14] sm:$0xf]
    %v5084 = vld [vmem:[%s5077 + $0x18] sm:$0xf]
    %v5085 = vld [vmem:[%s5077 + $0x1c] sm:$0xf]
    %v5086 = vld [vmem:[%s5077 + $0x20] sm:$0xf]
    %v5087 = vld [vmem:[%s5077 + $0x24] sm:$0xf]
    %v5088 = vld [vmem:[%s5077 + $0x28] sm:$0xf]
    %v5089 = vld [vmem:[%s5077 + $0x2c] sm:$0xf]
    %v5090 = vld [vmem:[%s5077 + $0x30] sm:$0xf]
    %v5091 = vld [vmem:[%s5077 + $0x34] sm:$0xf]
    %v5092 = vld [vmem:[%s5077 + $0x38] sm:$0xf]
    %v5093 = vld [vmem:[%s5077 + $0x3c] sm:$0xf]
    %v5110 = vunpack.c.l.b16 %v5078
    %v5111 = vunpack.c.l.b16 %v5079
    %v5112 = vunpack.c.l.b16 %v5080
    %v5113 = vunpack.c.l.b16 %v5081
    %v5114 = vunpack.c.l.b16 %v5082
    %v5115 = vunpack.c.l.b16 %v5083
    %v5116 = vunpack.c.l.b16 %v5084
    %v5117 = vunpack.c.l.b16 %v5085
    %v5118 = vunpack.c.l.b16 %v5086
    %v5119 = vunpack.c.l.b16 %v5087
    %v5120 = vunpack.c.l.b16 %v5088
    %v5121 = vunpack.c.l.b16 %v5089
    %v5122 = vunpack.c.l.b16 %v5090
    %v5123 = vunpack.c.l.b16 %v5091
    %v5124 = vunpack.c.l.b16 %v5092
    %v5125 = vunpack.c.l.b16 %v5093
    %v5126 = vpack.c.b16 %v5111, %v5110
    %v5127 = vpack.c.b16 %v5113, %v5112
    %v5128 = vpack.c.b16 %v5115, %v5114
    %v5129 = vpack.c.b16 %v5117, %v5116
    %v5130 = vpack.c.b16 %v5119, %v5118
    %v5131 = vpack.c.b16 %v5121, %v5120
    %v5132 = vpack.c.b16 %v5123, %v5122
    %v5133 = vpack.c.b16 %v5125, %v5124
    %5142 = vmatprep.subr.bf16.mxu0 0
    %5143 = vmatpush1.bf16.msra.mxu0 %v5126
    %5144 = vmatprep.subr.bf16.mxu0 0
    %5145 = vmatpush1.bf16.msra.mxu0 %v5127
    %5146 = vmatprep.subr.bf16.mxu0 0
    %5147 = vmatpush1.bf16.msra.mxu0 %v5128
    %5148 = vmatprep.subr.bf16.mxu0 0
    %5149 = vmatpush1.bf16.msra.mxu0 %v5129
    %5150 = vmatprep.subr.bf16.mxu0 0
    %5151 = vmatpush1.bf16.msra.mxu0 %v5130
    %5152 = vmatprep.subr.bf16.mxu0 0
    %5153 = vmatpush1.bf16.msra.mxu0 %v5131
    %5154 = vmatprep.subr.bf16.mxu0 0
    %5155 = vmatpush1.bf16.msra.mxu0 %v5132
    %5156 = vmatprep.subr.bf16.mxu0 0
    %5157 = vmatpush1.bf16.msra.mxu0 %v5133
    %5158 = vmatprep.subr.bf16.mxu0 0
    %5159 = vmatpush1.bf16.msra.mxu0 0
    %5160 = vmatprep.subr.bf16.mxu0 0
    %5161 = vmatpush1.bf16.msra.mxu0 0
    %5162 = vmatprep.subr.bf16.mxu0 0
    %5163 = vmatpush1.bf16.msra.mxu0 0
    %5164 = vmatprep.subr.bf16.mxu0 0
    %5165 = vmatpush1.bf16.msra.mxu0 0
    %5166 = vmatprep.subr.bf16.mxu0 0
    %5167 = vmatpush1.bf16.msra.mxu0 0
    %5168 = vmatprep.subr.bf16.mxu0 0
    %5169 = vmatpush1.bf16.msra.mxu0 0
    %5170 = vmatprep.subr.bf16.mxu0 0
    %5171 = vmatpush1.bf16.msra.mxu0 0
    %5172 = vmatprep.subr.bf16.mxu0 0
    %5173 = vmatpush1.bf16.msra.mxu0 0
    %5174 = vmatprep.mubr.bf16.mxu0 0
    %5175 = vmatmul.mubr.bf16.gmra.mrb[0].mxu0 %v5074
    %v5176 = vpop.f32.mrb[0].mxu0
    %v5177 = vadd.f32 0.0, %v5176
    %v5178 = vpop.f32.mrb[0].mxu0
    %v5179 = vpop.f32.mrb[0].mxu0
    %v5180 = vadd.f32 0.0, %v5179
    %v5181 = vpop.f32.mrb[0].mxu0
    %5182 = vmatprep.mubr.bf16.mxu0 0
    %5183 = vmatmul.mubr.bf16.gmra.mrb[0].mxu0 %v5075
    %v5184 = vpop.f32.mrb[0].mxu0
    %v5185 = vadd.f32 0.0, %v5184
    %v5186 = vpop.f32.mrb[0].mxu0
    %v5187 = vpop.f32.mrb[0].mxu0
    %v5188 = vadd.f32 0.0, %v5187
    %v5189 = vpop.f32.mrb[0].mxu0
    %5190 = vmatprep.mubr.bf16.mxu0 0
    %5191 = vmatmul.mubr.bf16.gmra.mrb[0].mxu0 %v5076
    %v5192 = vpop.f32.mrb[0].mxu0
    %v5193 = vadd.f32 0.0, %v5192
    %v5194 = vpop.f32.mrb[0].mxu0
    %v5195 = vpop.f32.mrb[0].mxu0
    %v5196 = vpop.f32.mrb[0].mxu0
    %5197 = vdwg.mxu0
    %v5198 = vadd.f32 %v4985, %v5177
    %v5199 = vadd.f32 %v4986, %v5180
    %v5200 = vadd.f32 %v4987, %v5185
    %v5201 = vadd.f32 %v4988, %v5188
    %v5202 = vadd.f32 %v4989, %v5193
    %s5203 = scalar_lea.vmem [#allocation35], 60
    %v5204 = vld [vmem:[%s5203] sm:$0xf]
    %v5205 = vld [vmem:[%s5203 + $0x4] sm:$0xf]
    %v5206 = vld [vmem:[%s5203 + $0x8] sm:$0xf]
    %v5207 = vld [vmem:[%s5203 + $0xc] sm:$0xf]
    %v5208 = vld [vmem:[%s5203 + $0x10] sm:$0x1]
    %v5214 = vunpack.c.l.b16 %v5204
    %v5215 = vunpack.c.l.b16 %v5205
    %v5216 = vunpack.c.l.b16 %v5206
    %v5217 = vunpack.c.l.b16 %v5207
    %v5218 = vunpack.c.l.b16 %v5208
    %v5219 = vpack.c.b16 %v5215, %v5214
    %v5220 = vpack.c.b16 %v5217, %v5216
    %v5221 = vpack.c.b16 %v5218, %v5218
    %v5223 = vsel %vm457, %v5219, 0
    %v5226 = vsel %vm457, %v5220, 0
    %v5229 = vsel %vm457, %v5221, 0
    %5231 = vmatprep.subr.bf16.mxu0 0
    %5232 = vmatpush1.bf16.msra.mxu0 %v4559
    %5233 = vmatprep.subr.bf16.mxu0 0
    %5234 = vmatpush1.bf16.msra.mxu0 %v4560
    %5235 = vmatprep.subr.bf16.mxu0 0
    %5236 = vmatpush1.bf16.msra.mxu0 0
    %5237 = vmatprep.subr.bf16.mxu0 0
    %5238 = vmatpush1.bf16.msra.mxu0 0
    %5239 = vmatprep.subr.bf16.mxu0 0
    %5240 = vmatpush1.bf16.msra.mxu0 0
    %5241 = vmatprep.subr.bf16.mxu0 0
    %5242 = vmatpush1.bf16.msra.mxu0 0
    %5243 = vmatprep.subr.bf16.mxu0 0
    %5244 = vmatpush1.bf16.msra.mxu0 0
    %5245 = vmatprep.subr.bf16.mxu0 0
    %5246 = vmatpush1.bf16.msra.mxu0 0
    %5247 = vmatprep.subr.bf16.mxu0 0
    %5248 = vmatpush1.bf16.msra.mxu0 0
    %5249 = vmatprep.subr.bf16.mxu0 0
    %5250 = vmatpush1.bf16.msra.mxu0 0
    %5251 = vmatprep.subr.bf16.mxu0 0
    %5252 = vmatpush1.bf16.msra.mxu0 0
    %5253 = vmatprep.subr.bf16.mxu0 0
    %5254 = vmatpush1.bf16.msra.mxu0 0
    %5255 = vmatprep.subr.bf16.mxu0 0
    %5256 = vmatpush1.bf16.msra.mxu0 0
    %5257 = vmatprep.subr.bf16.mxu0 0
    %5258 = vmatpush1.bf16.msra.mxu0 0
    %5259 = vmatprep.subr.bf16.mxu0 0
    %5260 = vmatpush1.bf16.msra.mxu0 0
    %5261 = vmatprep.subr.bf16.mxu0 0
    %5262 = vmatpush1.bf16.msra.mxu0 0
    %5263 = vmatprep.mubr.bf16.mxu0 0
    %5264 = vmatmul.mubr.bf16.gmra.mrb[0].mxu0 %v5223
    %v5265 = vpop.f32.mrb[0].mxu0
    %v5266 = vadd.f32 0.0, %v5265
    %v5267 = vpop.f32.mrb[0].mxu0
    %v5268 = vpop.f32.mrb[0].mxu0
    %v5269 = vadd.f32 0.0, %v5268
    %v5270 = vpop.f32.mrb[0].mxu0
    %5271 = vmatprep.mubr.bf16.mxu0 0
    %5272 = vmatmul.mubr.bf16.gmra.mrb[0].mxu0 %v5226
    %v5273 = vpop.f32.mrb[0].mxu0
    %v5274 = vadd.f32 0.0, %v5273
    %v5275 = vpop.f32.mrb[0].mxu0
    %v5276 = vpop.f32.mrb[0].mxu0
    %v5277 = vadd.f32 0.0, %v5276
    %v5278 = vpop.f32.mrb[0].mxu0
    %5279 = vmatprep.mubr.bf16.mxu0 0
    %5280 = vmatmul.mubr.bf16.gmra.mrb[0].mxu0 %v5229
    %v5281 = vpop.f32.mrb[0].mxu0
    %v5282 = vadd.f32 0.0, %v5281
    %v5283 = vpop.f32.mrb[0].mxu0
    %v5284 = vpop.f32.mrb[0].mxu0
    %v5285 = vpop.f32.mrb[0].mxu0
    %5286 = vdwg.mxu0
    %v5287 = vpack.c.bf16 %v5269, %v5266
    %v5288 = vpack.c.bf16 %v5277, %v5274
    %v5289 = vpack.c.bf16 %v5282, %v5282
    %s5290 = scalar_lea.vmem %s53, 192
    %v5291 = vld [vmem:[%s5290] sm:$0xf]
    %v5292 = vld [vmem:[%s5290 + $0x4] sm:$0xf]
    %v5293 = vld [vmem:[%s5290 + $0x8] sm:$0xf]
    %v5294 = vld [vmem:[%s5290 + $0xc] sm:$0xf]
    %v5295 = vld [vmem:[%s5290 + $0x10] sm:$0xf]
    %v5296 = vld [vmem:[%s5290 + $0x14] sm:$0xf]
    %v5297 = vld [vmem:[%s5290 + $0x18] sm:$0xf]
    %v5298 = vld [vmem:[%s5290 + $0x1c] sm:$0xf]
    %v5299 = vld [vmem:[%s5290 + $0x20] sm:$0xf]
    %v5300 = vld [vmem:[%s5290 + $0x24] sm:$0xf]
    %v5301 = vld [vmem:[%s5290 + $0x28] sm:$0xf]
    %v5302 = vld [vmem:[%s5290 + $0x2c] sm:$0xf]
    %v5303 = vld [vmem:[%s5290 + $0x30] sm:$0xf]
    %v5304 = vld [vmem:[%s5290 + $0x34] sm:$0xf]
    %v5305 = vld [vmem:[%s5290 + $0x38] sm:$0xf]
    %v5306 = vld [vmem:[%s5290 + $0x3c] sm:$0xf]
    %v5323 = vunpack.c.l.b16 %v5291
    %v5324 = vunpack.c.l.b16 %v5292
    %v5325 = vunpack.c.l.b16 %v5293
    %v5326 = vunpack.c.l.b16 %v5294
    %v5327 = vunpack.c.l.b16 %v5295
    %v5328 = vunpack.c.l.b16 %v5296
    %v5329 = vunpack.c.l.b16 %v5297
    %v5330 = vunpack.c.l.b16 %v5298
    %v5331 = vunpack.c.l.b16 %v5299
    %v5332 = vunpack.c.l.b16 %v5300
    %v5333 = vunpack.c.l.b16 %v5301
    %v5334 = vunpack.c.l.b16 %v5302
    %v5335 = vunpack.c.l.b16 %v5303
    %v5336 = vunpack.c.l.b16 %v5304
    %v5337 = vunpack.c.l.b16 %v5305
    %v5338 = vunpack.c.l.b16 %v5306
    %v5339 = vpack.c.b16 %v5324, %v5323
    %v5340 = vpack.c.b16 %v5326, %v5325
    %v5341 = vpack.c.b16 %v5328, %v5327
    %v5342 = vpack.c.b16 %v5330, %v5329
    %v5343 = vpack.c.b16 %v5332, %v5331
    %v5344 = vpack.c.b16 %v5334, %v5333
    %v5345 = vpack.c.b16 %v5336, %v5335
    %v5346 = vpack.c.b16 %v5338, %v5337
    %5355 = vmatprep.subr.bf16.mxu0 0
    %5356 = vmatpush1.bf16.msra.mxu0 %v5339
    %5357 = vmatprep.subr.bf16.mxu0 0
    %5358 = vmatpush1.bf16.msra.mxu0 %v5340
    %5359 = vmatprep.subr.bf16.mxu0 0
    %5360 = vmatpush1.bf16.msra.mxu0 %v5341
    %5361 = vmatprep.subr.bf16.mxu0 0
    %5362 = vmatpush1.bf16.msra.mxu0 %v5342
    %5363 = vmatprep.subr.bf16.mxu0 0
    %5364 = vmatpush1.bf16.msra.mxu0 %v5343
    %5365 = vmatprep.subr.bf16.mxu0 0
    %5366 = vmatpush1.bf16.msra.mxu0 %v5344
    %5367 = vmatprep.subr.bf16.mxu0 0
    %5368 = vmatpush1.bf16.msra.mxu0 %v5345
    %5369 = vmatprep.subr.bf16.mxu0 0
    %5370 = vmatpush1.bf16.msra.mxu0 %v5346
    %5371 = vmatprep.subr.bf16.mxu0 0
    %5372 = vmatpush1.bf16.msra.mxu0 0
    %5373 = vmatprep.subr.bf16.mxu0 0
    %5374 = vmatpush1.bf16.msra.mxu0 0
    %5375 = vmatprep.subr.bf16.mxu0 0
    %5376 = vmatpush1.bf16.msra.mxu0 0
    %5377 = vmatprep.subr.bf16.mxu0 0
    %5378 = vmatpush1.bf16.msra.mxu0 0
    %5379 = vmatprep.subr.bf16.mxu0 0
    %5380 = vmatpush1.bf16.msra.mxu0 0
    %5381 = vmatprep.subr.bf16.mxu0 0
    %5382 = vmatpush1.bf16.msra.mxu0 0
    %5383 = vmatprep.subr.bf16.mxu0 0
    %5384 = vmatpush1.bf16.msra.mxu0 0
    %5385 = vmatprep.subr.bf16.mxu0 0
    %5386 = vmatpush1.bf16.msra.mxu0 0
    %5387 = vmatprep.mubr.bf16.mxu0 0
    %5388 = vmatmul.mubr.bf16.gmra.mrb[0].mxu0 %v5287
    %v5389 = vpop.f32.mrb[0].mxu0
    %v5390 = vadd.f32 0.0, %v5389
    %v5391 = vpop.f32.mrb[0].mxu0
    %v5392 = vpop.f32.mrb[0].mxu0
    %v5393 = vadd.f32 0.0, %v5392
    %v5394 = vpop.f32.mrb[0].mxu0
    %5395 = vmatprep.mubr.bf16.mxu0 0
    %5396 = vmatmul.mubr.bf16.gmra.mrb[0].mxu0 %v5288
    %v5397 = vpop.f32.mrb[0].mxu0
    %v5398 = vadd.f32 0.0, %v5397
    %v5399 = vpop.f32.mrb[0].mxu0
    %v5400 = vpop.f32.mrb[0].mxu0
    %v5401 = vadd.f32 0.0, %v5400
    %v5402 = vpop.f32.mrb[0].mxu0
    %5403 = vmatprep.mubr.bf16.mxu0 0
    %5404 = vmatmul.mubr.bf16.gmra.mrb[0].mxu0 %v5289
    %v5405 = vpop.f32.mrb[0].mxu0
    %v5406 = vadd.f32 0.0, %v5405
    %v5407 = vpop.f32.mrb[0].mxu0
    %v5408 = vpop.f32.mrb[0].mxu0
    %v5409 = vpop.f32.mrb[0].mxu0
    %5410 = vdwg.mxu0
    %v5411 = vadd.f32 %v5198, %v5390
    %v5412 = vadd.f32 %v5199, %v5393
    %v5413 = vadd.f32 %v5200, %v5398
    %v5414 = vadd.f32 %v5201, %v5401
    %v5415 = vadd.f32 %v5202, %v5406
    %v5416 = vsub.f32 0.0, %v5411
    %v5417 = vsub.f32 0.0, %v5412
    %v5418 = vsub.f32 0.0, %v5413
    %v5419 = vsub.f32 0.0, %v5414
    %v5420 = vsub.f32 0.0, %v5415
    %v5421 = vmul.f32 %v5416, 1.442695
    %v5422 = vpow.pop %v5421
    %v5423 = vmul.f32 %v5417, 1.442695
    %v5424 = vpow.pop %v5423
    %v5425 = vmul.f32 %v5418, 1.442695
    %v5426 = vpow.pop %v5425
    %v5427 = vmul.f32 %v5419, 1.442695
    %v5428 = vpow.pop %v5427
    %v5429 = vmul.f32 %v5420, 1.442695
    %v5430 = vpow.pop %v5429
    %v5431 = vadd.f32 %v5422, 1.0
    %v5432 = vadd.f32 %v5424, 1.0
    %v5433 = vadd.f32 %v5426, 1.0
    %v5434 = vadd.f32 %v5428, 1.0
    %v5435 = vadd.f32 %v5430, 1.0
    %v5436 = vrcp.pop %v5431
    %v5437 = vrcp.pop %v5432
    %v5438 = vrcp.pop %v5433
    %v5439 = vrcp.pop %v5434
    %v5440 = vrcp.pop %v5435
    %vm5441 = vcmask 556032
    %5442 = vst.msk [vmem:[%s59] sm:$0xff] %vm5441, %v5436
    %5443 = vst.msk [vmem:[%s59 + $0x8] sm:$0xff] %vm5441, %v5437
    %5444 = vst.msk [vmem:[%s59 + $0x10] sm:$0xff] %vm5441, %v5438
    %5445 = vst.msk [vmem:[%s59 + $0x18] sm:$0xff] %vm5441, %v5439
    %vm5446 = vcmask 549888
    %5447 = vst.msk [vmem:[%s59 + $0x20] sm:$0x3] %vm5446, %v5440
    // Predicated region
    $region210: #{_lambda_.1} parent=1 // pred_check
      _
    $region211: #{_lambda_.1} parent=1 // pred_check_branch
      %5449 = sbr.rel (0) target = $region213
    $region212: #{_lambda_.1} parent=1 // pred_region
      _
    $region213: #{_lambda_.1} parent=1 // pred_fallthru
      _
    // Predicated region
    $region214: #{_lambda_.1} parent=1 // pred_check
      _
    $region215: #{_lambda_.1} parent=1 // pred_check_branch
      %5451 = sbr.rel (0) target = $region217
    $region216: #{_lambda_.1} parent=1 // pred_region
      %s5453 = ssub.s32 32, 32
      %5454 = vsyncadd [#allocation4], %s5453
      %s5456 = sshll.u32 [#allocation38], 4
      %s5457 = int_to_ptr.vmem [resolvable:$true] %s5456
      %5459 = dma.vmem_to_hbm [thread:$0]  %s5457, 32, %s61, [#allocation4]
    $region217: #{_lambda_.1} parent=1 // pred_fallthru
      _
    // Predicated region
    $region218: #{_lambda_.1} parent=1 // pred_check
      _
    $region219: #{_lambda_.1} parent=1 // pred_check_branch
      %5461 = sbr.rel (0) target = $region221
    $region220: #{_lambda_.1} parent=1 // pred_region
      %s5463 = ssub.s32 32, 32
      %5464 = vsyncadd [#allocation40], %s5463
      %s5466 = sshll.u32 [#allocation39], 4
      %s5467 = int_to_ptr.vmem [resolvable:$true] %s5466
      %5469 = dma.vmem_to_hbm [thread:$0]  %s5467, 32, %s63, [#allocation40]
    $region221: #{_lambda_.1} parent=1 // pred_fallthru
      _
    // Predicated region
    $region222: #{_lambda_.1} parent=1 // pred_check
      _
    $region223: #{_lambda_.1} parent=1 // pred_check_branch
      %5471 = sbr.rel (0) target = $region225
    $region224: #{_lambda_.1} parent=1 // pred_region
      _
    $region225: #{_lambda_.1} parent=1 // pred_fallthru
      _
    // Predicated region
    $region226: #{_lambda_.1} parent=1 // pred_check
      _
    $region227: #{_lambda_.1} parent=1 // pred_check_branch
      %5473 = sbr.rel (0) target = $region229
    $region228: #{_lambda_.1} parent=1 // pred_region
      %5474 = dma.done [#allocation4], 32
    $region229: #{_lambda_.1} parent=1 // pred_fallthru
      _
    // Predicated region
    $region230: #{_lambda_.1} parent=1 // pred_check
      _
    $region231: #{_lambda_.1} parent=1 // pred_check_branch
      %5476 = sbr.rel (0) target = $region233
    $region232: #{_lambda_.1} parent=1 // pred_region
      %5477 = dma.done [#allocation40], 32
    $region233: #{_lambda_.1} parent=1 // pred_fallthru
      _
    %5478 = vsyncpa [#allocation3], 1
    %5479 = vsyncpa [#allocation6], 1
    %5480 = vsyncpa [#allocation9], 1
    %5481 = vsyncpa [#allocation12], 1
    %5482 = vsyncpa [#allocation15], 1
    %5483 = vsyncpa [#allocation18], 1
    %5484 = vsyncpa [#allocation21], 1
    %5485 = vsyncpa [#allocation24], 1
    %5486 = vsyncpa [#allocation27], 1
    %5487 = vsyncpa [#allocation30], 1
    %5488 = vsyncpa [#allocation33], 1
    %5489 = vsyncpa [#allocation36], 1
    %5490 = vsyncpa [#allocation4], 1
    %5491 = vsyncpa [#allocation40], 1

</llo_original>
